<compile_context>
chip_gen: v7x
topology: tpu7x:2x2x1
jax: 0.10.0
libtpu: 0.0.40
codegen_flags: <defaults>
</compile_context>

<pallas_src>
import jax
import jax.numpy as jnp
from jax.experimental import pallas as pl
from jax.experimental.pallas import tpu as pltpu

NEG_SLOPE = 0.01                      # LeakyReLU(0.01)
DIMS = [832, 832, 416, 208, 104, 1]   # layer widths
TM = 8                                # batch tile (sublane-aligned)


def _lrelu(v):
    return jnp.where(v > 0, v, NEG_SLOPE * v)


def mlp_kernel(x_ref,
               w1_ref, b1_ref,
               w2_ref, b2_ref,
               w3_ref, b3_ref,
               w4_ref, b4_ref,
               w5_ref, b5_ref,
               o_ref):
    # x_ref: (TM, 832) f32; weights bf16 (in, out); biases f32 (1, out).
    h = x_ref[...]
    layers = ((w1_ref, b1_ref, False), (w2_ref, b2_ref, False),
              (w3_ref, b3_ref, False), (w4_ref, b4_ref, False),
              (w5_ref, b5_ref, True))
    for w_ref, b_ref, is_last in layers:
        # bf16 x bf16 on the MXU with f32 accumulation.
        h = jnp.dot(h.astype(jnp.bfloat16), w_ref[...],
                    preferred_element_type=jnp.float32) + b_ref[...]
        if not is_last:
            h = _lrelu(h)
    o_ref[...] = h  # (TM, 1) f32


def init_params(key):
    """Deterministic init mimicking torch.nn.Linear default U[-1/sqrt(fan_in), +].

    Weights stored transposed (in, out) and cast to bf16 (streamed weight
    bytes halved); biases kept f32 with shape (1, out).
    """
    params = []
    for i in range(5):
        fan_in, fan_out = DIMS[i], DIMS[i + 1]
        key, kw, kb = jax.random.split(key, 3)
        bound = 1.0 / jnp.sqrt(jnp.float32(fan_in))
        w = jax.random.uniform(kw, (fan_in, fan_out), jnp.float32, -bound, bound)
        b = jax.random.uniform(kb, (1, fan_out), jnp.float32, -bound, bound)
        params.append((w.astype(jnp.bfloat16), b))
    return params


def net_forward_batched(xb, params):
    """xb: (B, 832) f32 rows -> (B, 1) f32 outputs."""
    B = xb.shape[0]
    nb = pl.cdiv(B, TM)
    Bp = nb * TM
    if Bp != B:
        xb = jnp.pad(xb, ((0, Bp - B), (0, 0)))

    flat_args = [xb]
    in_specs = [pl.BlockSpec((TM, DIMS[0]), lambda i: (i, 0))]
    for (w, b) in params:
        flat_args.extend([w, b])
        in_specs.append(pl.BlockSpec(w.shape, lambda i: (0, 0)))  # resident
        in_specs.append(pl.BlockSpec(b.shape, lambda i: (0, 0)))  # resident

    flops = 2 * Bp * sum(DIMS[i] * DIMS[i + 1] for i in range(5))
    bytes_accessed = (sum(int(w.size) * w.dtype.itemsize
                          + int(b.size) * b.dtype.itemsize
                          for (w, b) in params)
                      + int(xb.size) * 4 + Bp * 4)

    out = pl.pallas_call(
        mlp_kernel,
        out_shape=jax.ShapeDtypeStruct((Bp, 1), jnp.float32),
        grid=(nb,),
        in_specs=in_specs,
        out_specs=pl.BlockSpec((TM, 1), lambda i: (i, 0)),
        compiler_params=pltpu.CompilerParams(
            dimension_semantics=("parallel",)),
        cost_estimate=pl.CostEstimate(flops=flops, transcendentals=0,
                                      bytes_accessed=bytes_accessed),
    )(*flat_args)
    return out[:B]


def net_forward(x, params):
    """Module-faithful path: x.float(); torch.flatten(x); fc stack -> shape (1,)."""
    x_flat = x.astype(jnp.float32).reshape(1, DIMS[0])
    return net_forward_batched(x_flat, params).reshape(1)


def reference_forward_batched(xb, params):
    """Pure-JAX reference mirroring the kernel's bf16 weight/activation quantization."""
    h = xb.astype(jnp.float32)
    for i, (w, b) in enumerate(params):
        hq = h.astype(jnp.bfloat16).astype(jnp.float32)
        wf = w.astype(jnp.float32)
        h = jnp.dot(hq, wf, precision=jax.lax.Precision.HIGHEST,
                    preferred_element_type=jnp.float32) + b
        if i < 4:
            h = _lrelu(h)
    return h


if __name__ == "__main__":
    key = jax.random.PRNGKey(0)
    key, kx, kxb = jax.random.split(key, 3)
    params = init_params(key)

    # Single-sample path (matches torch.flatten over the whole input -> 832 elems).
    x = jax.random.normal(kx, (8, 104), jnp.float32)
    out = jax.block_until_ready(net_forward(x, params))
    ref = reference_forward_batched(x.reshape(1, DIMS[0]), params).reshape(1)
    assert out.shape == (1,)
    assert jnp.allclose(out, ref, atol=2e-3, rtol=2e-3), (out, ref)

    # Batched throughput path (amortizes weight DMA, fills MXU rows, 2-TC on v7x).
    xb = jax.random.normal(kxb, (16, DIMS[0]), jnp.float32)
    outb = jax.block_until_ready(net_forward_batched(xb, params))
    refb = reference_forward_batched(xb, params)
    assert outb.shape == (16, 1)
    assert jnp.allclose(outb, refb, atol=2e-3, rtol=2e-3), (outb, refb)

    print("KERNEL_OK")
</pallas_src>

<mosaic_0001>
module attributes {stable_mosaic.version = 11 : i64} {
  func.func @mlp_kernel(%arg0: i32, %arg1: memref<8x832xf32, #tpu.memory_space<vmem>>, %arg2: memref<832x832xbf16, #tpu.memory_space<vmem>>, %arg3: memref<1x832xf32, #tpu.memory_space<vmem>>, %arg4: memref<832x416xbf16, #tpu.memory_space<vmem>>, %arg5: memref<1x416xf32, #tpu.memory_space<vmem>>, %arg6: memref<416x208xbf16, #tpu.memory_space<vmem>>, %arg7: memref<1x208xf32, #tpu.memory_space<vmem>>, %arg8: memref<208x104xbf16, #tpu.memory_space<vmem>>, %arg9: memref<1x104xf32, #tpu.memory_space<vmem>>, %arg10: memref<104x1xbf16, #tpu.memory_space<vmem>>, %arg11: memref<1x1xf32, #tpu.memory_space<vmem>>, %arg12: memref<8x1xf32, #tpu.memory_space<vmem>>) attributes {dimension_semantics = [#tpu.dimension_semantics<parallel>], iteration_bounds = array<i64: 1>, scalar_prefetch = 0 : i64, scratch_operands = 0 : i64, tpu.core_type = #tpu.core_type<tc>, window_params = [{transform_indices = @transform_0, window_bounds = array<i64: 8, 832>}, {pipeline_mode = #tpu.pipeline_mode<synchronous>, transform_indices = @transform_1, window_bounds = array<i64: 832, 832>}, {pipeline_mode = #tpu.pipeline_mode<synchronous>, transform_indices = @transform_2, window_bounds = array<i64: 1, 832>}, {pipeline_mode = #tpu.pipeline_mode<synchronous>, transform_indices = @transform_3, window_bounds = array<i64: 832, 416>}, {pipeline_mode = #tpu.pipeline_mode<synchronous>, transform_indices = @transform_4, window_bounds = array<i64: 1, 416>}, {pipeline_mode = #tpu.pipeline_mode<synchronous>, transform_indices = @transform_5, window_bounds = array<i64: 416, 208>}, {pipeline_mode = #tpu.pipeline_mode<synchronous>, transform_indices = @transform_6, window_bounds = array<i64: 1, 208>}, {pipeline_mode = #tpu.pipeline_mode<synchronous>, transform_indices = @transform_7, window_bounds = array<i64: 208, 104>}, {pipeline_mode = #tpu.pipeline_mode<synchronous>, transform_indices = @transform_8, window_bounds = array<i64: 1, 104>}, {pipeline_mode = #tpu.pipeline_mode<synchronous>, transform_indices = @transform_9, window_bounds = array<i64: 104, 1>}, {pipeline_mode = #tpu.pipeline_mode<synchronous>, transform_indices = @transform_10, window_bounds = array<i64: 1, 1>}, {transform_indices = @transform_11, window_bounds = array<i64: 8, 1>}]} {
    %c0 = arith.constant 0 : index
    %c0_0 = arith.constant 0 : index
    %0 = vector.load %arg1[%c0, %c0_0] : memref<8x832xf32, #tpu.memory_space<vmem>>, vector<8x832xf32>
    %1 = arith.truncf %0 : vector<8x832xf32> to vector<8x832xbf16>
    %c0_1 = arith.constant 0 : index
    %c0_2 = arith.constant 0 : index
    %2 = vector.load %arg2[%c0_1, %c0_2] : memref<832x832xbf16, #tpu.memory_space<vmem>>, vector<832x832xbf16>
    %cst = arith.constant dense<0.000000e+00> : vector<8x832xf32>
    %3 = tpu.matmul %1, %2, %cst {dimension_numbers = #tpu.dot_dimension_numbers<[1], [0], [0], [1], [0, 0, 1, 1], [], []>} : vector<8x832xbf16>, vector<832x832xbf16>, vector<8x832xf32> -> vector<8x832xf32>
    %c0_3 = arith.constant 0 : index
    %c0_4 = arith.constant 0 : index
    %4 = vector.load %arg3[%c0_3, %c0_4] : memref<1x832xf32, #tpu.memory_space<vmem>>, vector<1x832xf32>
    %5 = vector.broadcast %4 : vector<1x832xf32> to vector<8x832xf32>
    %6 = arith.addf %3, %5 : vector<8x832xf32>
    %cst_5 = arith.constant 0.000000e+00 : f32
    %7 = vector.broadcast %cst_5 : f32 to vector<8x832xf32>
    %8 = arith.cmpf ogt, %6, %7 : vector<8x832xf32>
    %cst_6 = arith.constant 0.00999999977 : f32
    %9 = vector.broadcast %cst_6 : f32 to vector<8x832xf32>
    %10 = arith.mulf %9, %6 : vector<8x832xf32>
    %11 = arith.select %8, %6, %10 : vector<8x832xi1>, vector<8x832xf32>
    %12 = arith.truncf %11 : vector<8x832xf32> to vector<8x832xbf16>
    %c0_7 = arith.constant 0 : index
    %c0_8 = arith.constant 0 : index
    %13 = vector.load %arg4[%c0_7, %c0_8] : memref<832x416xbf16, #tpu.memory_space<vmem>>, vector<832x416xbf16>
    %cst_9 = arith.constant dense<0.000000e+00> : vector<8x416xf32>
    %14 = tpu.matmul %12, %13, %cst_9 {dimension_numbers = #tpu.dot_dimension_numbers<[1], [0], [0], [1], [0, 0, 1, 1], [], []>} : vector<8x832xbf16>, vector<832x416xbf16>, vector<8x416xf32> -> vector<8x416xf32>
    %c0_10 = arith.constant 0 : index
    %c0_11 = arith.constant 0 : index
    %15 = vector.load %arg5[%c0_10, %c0_11] : memref<1x416xf32, #tpu.memory_space<vmem>>, vector<1x416xf32>
    %16 = vector.broadcast %15 : vector<1x416xf32> to vector<8x416xf32>
    %17 = arith.addf %14, %16 : vector<8x416xf32>
    %cst_12 = arith.constant 0.000000e+00 : f32
    %18 = vector.broadcast %cst_12 : f32 to vector<8x416xf32>
    %19 = arith.cmpf ogt, %17, %18 : vector<8x416xf32>
    %cst_13 = arith.constant 0.00999999977 : f32
    %20 = vector.broadcast %cst_13 : f32 to vector<8x416xf32>
    %21 = arith.mulf %20, %17 : vector<8x416xf32>
    %22 = arith.select %19, %17, %21 : vector<8x416xi1>, vector<8x416xf32>
    %23 = arith.truncf %22 : vector<8x416xf32> to vector<8x416xbf16>
    %c0_14 = arith.constant 0 : index
    %c0_15 = arith.constant 0 : index
    %24 = vector.load %arg6[%c0_14, %c0_15] : memref<416x208xbf16, #tpu.memory_space<vmem>>, vector<416x208xbf16>
    %cst_16 = arith.constant dense<0.000000e+00> : vector<8x208xf32>
    %25 = tpu.matmul %23, %24, %cst_16 {dimension_numbers = #tpu.dot_dimension_numbers<[1], [0], [0], [1], [0, 0, 1, 1], [], []>} : vector<8x416xbf16>, vector<416x208xbf16>, vector<8x208xf32> -> vector<8x208xf32>
    %c0_17 = arith.constant 0 : index
    %c0_18 = arith.constant 0 : index
    %26 = vector.load %arg7[%c0_17, %c0_18] : memref<1x208xf32, #tpu.memory_space<vmem>>, vector<1x208xf32>
    %27 = vector.broadcast %26 : vector<1x208xf32> to vector<8x208xf32>
    %28 = arith.addf %25, %27 : vector<8x208xf32>
    %cst_19 = arith.constant 0.000000e+00 : f32
    %29 = vector.broadcast %cst_19 : f32 to vector<8x208xf32>
    %30 = arith.cmpf ogt, %28, %29 : vector<8x208xf32>
    %cst_20 = arith.constant 0.00999999977 : f32
    %31 = vector.broadcast %cst_20 : f32 to vector<8x208xf32>
    %32 = arith.mulf %31, %28 : vector<8x208xf32>
    %33 = arith.select %30, %28, %32 : vector<8x208xi1>, vector<8x208xf32>
    %34 = arith.truncf %33 : vector<8x208xf32> to vector<8x208xbf16>
    %c0_21 = arith.constant 0 : index
    %c0_22 = arith.constant 0 : index
    %35 = vector.load %arg8[%c0_21, %c0_22] : memref<208x104xbf16, #tpu.memory_space<vmem>>, vector<208x104xbf16>
    %cst_23 = arith.constant dense<0.000000e+00> : vector<8x104xf32>
    %36 = tpu.matmul %34, %35, %cst_23 {dimension_numbers = #tpu.dot_dimension_numbers<[1], [0], [0], [1], [0, 0, 1, 1], [], []>} : vector<8x208xbf16>, vector<208x104xbf16>, vector<8x104xf32> -> vector<8x104xf32>
    %c0_24 = arith.constant 0 : index
    %c0_25 = arith.constant 0 : index
    %37 = vector.load %arg9[%c0_24, %c0_25] : memref<1x104xf32, #tpu.memory_space<vmem>>, vector<1x104xf32>
    %38 = vector.broadcast %37 : vector<1x104xf32> to vector<8x104xf32>
    %39 = arith.addf %36, %38 : vector<8x104xf32>
    %cst_26 = arith.constant 0.000000e+00 : f32
    %40 = vector.broadcast %cst_26 : f32 to vector<8x104xf32>
    %41 = arith.cmpf ogt, %39, %40 : vector<8x104xf32>
    %cst_27 = arith.constant 0.00999999977 : f32
    %42 = vector.broadcast %cst_27 : f32 to vector<8x104xf32>
    %43 = arith.mulf %42, %39 : vector<8x104xf32>
    %44 = arith.select %41, %39, %43 : vector<8x104xi1>, vector<8x104xf32>
    %45 = arith.truncf %44 : vector<8x104xf32> to vector<8x104xbf16>
    %c0_28 = arith.constant 0 : index
    %c0_29 = arith.constant 0 : index
    %46 = vector.load %arg10[%c0_28, %c0_29] : memref<104x1xbf16, #tpu.memory_space<vmem>>, vector<104x1xbf16>
    %cst_30 = arith.constant dense<0.000000e+00> : vector<8x1xf32>
    %47 = tpu.matmul %45, %46, %cst_30 {dimension_numbers = #tpu.dot_dimension_numbers<[1], [0], [0], [1], [0, 0, 1, 1], [], []>} : vector<8x104xbf16>, vector<104x1xbf16>, vector<8x1xf32> -> vector<8x1xf32>
    %c0_31 = arith.constant 0 : index
    %c0_32 = arith.constant 0 : index
    %48 = vector.load %arg11[%c0_31, %c0_32] : memref<1x1xf32, #tpu.memory_space<vmem>>, vector<1x1xf32>
    %49 = vector.broadcast %48 : vector<1x1xf32> to vector<8x1xf32>
    %50 = arith.addf %47, %49 : vector<8x1xf32>
    %c0_33 = arith.constant 0 : index
    %c0_34 = arith.constant 0 : index
    %51 = vector.load %arg12[%c0_33, %c0_34] : memref<8x1xf32, #tpu.memory_space<vmem>>, vector<8x1xf32>
    tpu.vector_store %arg12[%c0_33, %c0_34], %50 {strides = array<i32>} : memref<8x1xf32, #tpu.memory_space<vmem>>, vector<8x1xf32>,
    return
  }
  func.func @transform_0(%arg0: i32) -> (i32, i32) {
    %c0_i32 = arith.constant 0 : i32
    %c0_i32_0 = arith.constant 0 : i32
    return %arg0, %c0_i32 : i32, i32
  }
  func.func @transform_1(%arg0: i32) -> (i32, i32) {
    %c0_i32 = arith.constant 0 : i32
    %c0_i32_0 = arith.constant 0 : i32
    %c0_i32_1 = arith.constant 0 : i32
    return %c0_i32, %c0_i32_0 : i32, i32
  }
  func.func @transform_2(%arg0: i32) -> (i32, i32) {
    %c0_i32 = arith.constant 0 : i32
    %c0_i32_0 = arith.constant 0 : i32
    %c0_i32_1 = arith.constant 0 : i32
    return %c0_i32, %c0_i32_0 : i32, i32
  }
  func.func @transform_3(%arg0: i32) -> (i32, i32) {
    %c0_i32 = arith.constant 0 : i32
    %c0_i32_0 = arith.constant 0 : i32
    %c0_i32_1 = arith.constant 0 : i32
    return %c0_i32, %c0_i32_0 : i32, i32
  }
  func.func @transform_4(%arg0: i32) -> (i32, i32) {
    %c0_i32 = arith.constant 0 : i32
    %c0_i32_0 = arith.constant 0 : i32
    %c0_i32_1 = arith.constant 0 : i32
    return %c0_i32, %c0_i32_0 : i32, i32
  }
  func.func @transform_5(%arg0: i32) -> (i32, i32) {
    %c0_i32 = arith.constant 0 : i32
    %c0_i32_0 = arith.constant 0 : i32
    %c0_i32_1 = arith.constant 0 : i32
    return %c0_i32, %c0_i32_0 : i32, i32
  }
  func.func @transform_6(%arg0: i32) -> (i32, i32) {
    %c0_i32 = arith.constant 0 : i32
    %c0_i32_0 = arith.constant 0 : i32
    %c0_i32_1 = arith.constant 0 : i32
    return %c0_i32, %c0_i32_0 : i32, i32
  }
  func.func @transform_7(%arg0: i32) -> (i32, i32) {
    %c0_i32 = arith.constant 0 : i32
    %c0_i32_0 = arith.constant 0 : i32
    %c0_i32_1 = arith.constant 0 : i32
    return %c0_i32, %c0_i32_0 : i32, i32
  }
  func.func @transform_8(%arg0: i32) -> (i32, i32) {
    %c0_i32 = arith.constant 0 : i32
    %c0_i32_0 = arith.constant 0 : i32
    %c0_i32_1 = arith.constant 0 : i32
    return %c0_i32, %c0_i32_0 : i32, i32
  }
  func.func @transform_9(%arg0: i32) -> (i32, i32) {
    %c0_i32 = arith.constant 0 : i32
    %c0_i32_0 = arith.constant 0 : i32
    %c0_i32_1 = arith.constant 0 : i32
    return %c0_i32, %c0_i32_0 : i32, i32
  }
  func.func @transform_10(%arg0: i32) -> (i32, i32) {
    %c0_i32 = arith.constant 0 : i32
    %c0_i32_0 = arith.constant 0 : i32
    %c0_i32_1 = arith.constant 0 : i32
    return %c0_i32, %c0_i32_0 : i32, i32
  }
  func.func @transform_11(%arg0: i32) -> (i32, i32) {
    %c0_i32 = arith.constant 0 : i32
    %c0_i32_0 = arith.constant 0 : i32
    return %arg0, %c0_i32 : i32, i32
  }
}

</mosaic_0001>

<llo_original>
// kernel: tpu_custom_call.1
$region0: #{tpu_custom_call.1}
  #allocation0 [shape = 'u32[]', space=smem, size = 0x4, offset = 0x4, fixed_abs, tag = 'smem constant byte address 0x4 - core index']
  #allocation1 [shape = 'u32[144,128]{1,0:T(1,128)}', space=vmem, size = 0x12000, scoped, tag = 'internal scratch']
  #allocation2 [shape = 'f32[1,1]{1,0:T(1,128)S(1)}', space=vmem, size = 0x200, scoped, tag = 'scoped memory for tpu_custom_call.1']
  %s0 = inlined_call_operand.vmem [shape: f32[8,832], index: 0, kind: input, shape index: {}]
  %s1 = inlined_call_operand.vmem [shape: bf16[832,832], index: 1, kind: input, shape index: {}]
  %s2 = inlined_call_operand.vmem [shape: f32[1,832], index: 2, kind: input, shape index: {}]
  %s3 = inlined_call_operand.vmem [shape: bf16[832,416], index: 3, kind: input, shape index: {}]
  %s4 = inlined_call_operand.vmem [shape: f32[1,416], index: 4, kind: input, shape index: {}]
  %s5 = inlined_call_operand.hbm [shape: bf16[416,208], index: 5, kind: input, shape index: {}]
  %s6 = inlined_call_operand.vmem [shape: f32[1,208], index: 6, kind: input, shape index: {}]
  %s7 = inlined_call_operand.vmem [shape: bf16[208,104], index: 7, kind: input, shape index: {}]
  %s8 = inlined_call_operand.vmem [shape: f32[1,104], index: 8, kind: input, shape index: {}]
  %s9 = inlined_call_operand.vmem [shape: bf16[104,1], index: 9, kind: input, shape index: {}]
  %s10 = inlined_call_operand.<no memory space> [shape: f32[1,1], index: 10, kind: input, shape index: {}]
  %s11 = inlined_call_operand.vmem [shape: f32[8,1], index: 11, kind: output, shape index: {}]
  %s12 = sld [smem:[#allocation0]]
  $region58: #{tpu_custom_call.1} parent=0
    _
  %s14 = ssub.s32 1, %s12
  %s15 = scalar_select 0, %s14, %s12
  %v16 = vstv %s10
  %17 = vst [vmem:[#allocation2] sm:$0x1] %v16
  $region1: #{tpu_custom_call.1} parent=0
    #allocation3 [shape = 'u8[212992]{0}', space=vmem, size = 0x34000, scoped, tag = 'input window, operand 5, single buffered']
    #allocation4 [shape = 's32[1]{0}', space=sflag, size = 0x4, scoped, tag = 'scoped memory for tpu_custom_call.1']
    %18 = vsyncpa [#allocation4], 0
    // Predicated region
    $region2: #{tpu_custom_call.1} parent=1 // pred_check
      _
    $region3: #{tpu_custom_call.1} parent=1 // pred_check_branch
      %20 = sbr.rel (0) target = $region5
    $region4: #{tpu_custom_call.1} parent=1 // pred_region
      _
    $region5: #{tpu_custom_call.1} parent=1 // pred_fallthru
      _
    // Predicated region
    $region6: #{tpu_custom_call.1} parent=1 // pred_check
      _
    $region7: #{tpu_custom_call.1} parent=1 // pred_check_branch
      %22 = sbr.rel (0) target = $region9
    $region8: #{tpu_custom_call.1} parent=1 // pred_region
      _
    $region9: #{tpu_custom_call.1} parent=1 // pred_fallthru
      _
    // Predicated region
    $region10: #{tpu_custom_call.1} parent=1 // pred_check
      _
    $region11: #{tpu_custom_call.1} parent=1 // pred_check_branch
      %24 = sbr.rel (0) target = $region13
    $region12: #{tpu_custom_call.1} parent=1 // pred_region
      _
    $region13: #{tpu_custom_call.1} parent=1 // pred_fallthru
      _
    // Predicated region
    $region14: #{tpu_custom_call.1} parent=1 // pred_check
      _
    $region15: #{tpu_custom_call.1} parent=1 // pred_check_branch
      %26 = sbr.rel (0) target = $region17
    $region16: #{tpu_custom_call.1} parent=1 // pred_region
      _
    $region17: #{tpu_custom_call.1} parent=1 // pred_fallthru
      _
    // Predicated region
    $region18: #{tpu_custom_call.1} parent=1 // pred_check
      _
    $region19: #{tpu_custom_call.1} parent=1 // pred_check_branch
      %28 = sbr.rel (0) target = $region21
    $region20: #{tpu_custom_call.1} parent=1 // pred_region
      _
    $region21: #{tpu_custom_call.1} parent=1 // pred_fallthru
      _
    // Predicated region
    $region22: #{tpu_custom_call.1} parent=1 // pred_check
      _
    $region23: #{tpu_custom_call.1} parent=1 // pred_check_branch
      %30 = sbr.rel (0) target = $region25
    $region24: #{tpu_custom_call.1} parent=1 // pred_region
      %s32 = ssub.s32 6656, 6656
      %33 = vsyncadd [#allocation4], %s32
      %s34 = sshll.u32 [#allocation3], 4
      %s35 = int_to_ptr.vmem [resolvable:$true] %s34
      %40 = dma.hbm_to_vmem [thread:$0]  %s5, 6656, %s35, [#allocation4], 128, 128, 8
    $region25: #{tpu_custom_call.1} parent=1 // pred_fallthru
      _
    // Predicated region
    $region26: #{tpu_custom_call.1} parent=1 // pred_check
      _
    $region27: #{tpu_custom_call.1} parent=1 // pred_check_branch
      %42 = sbr.rel (0) target = $region29
    $region28: #{tpu_custom_call.1} parent=1 // pred_region
      _
    $region29: #{tpu_custom_call.1} parent=1 // pred_fallthru
      _
    // Predicated region
    $region30: #{tpu_custom_call.1} parent=1 // pred_check
      _
    $region31: #{tpu_custom_call.1} parent=1 // pred_check_branch
      %44 = sbr.rel (0) target = $region33
    $region32: #{tpu_custom_call.1} parent=1 // pred_region
      _
    $region33: #{tpu_custom_call.1} parent=1 // pred_fallthru
      _
    // Predicated region
    $region34: #{tpu_custom_call.1} parent=1 // pred_check
      _
    $region35: #{tpu_custom_call.1} parent=1 // pred_check_branch
      %46 = sbr.rel (0) target = $region37
    $region36: #{tpu_custom_call.1} parent=1 // pred_region
      _
    $region37: #{tpu_custom_call.1} parent=1 // pred_fallthru
      _
    // Predicated region
    $region38: #{tpu_custom_call.1} parent=1 // pred_check
      _
    $region39: #{tpu_custom_call.1} parent=1 // pred_check_branch
      %48 = sbr.rel (0) target = $region41
    $region40: #{tpu_custom_call.1} parent=1 // pred_region
      _
    $region41: #{tpu_custom_call.1} parent=1 // pred_fallthru
      _
    // Predicated region
    $region42: #{tpu_custom_call.1} parent=1 // pred_check
      _
    $region43: #{tpu_custom_call.1} parent=1 // pred_check_branch
      %50 = sbr.rel (0) target = $region45
    $region44: #{tpu_custom_call.1} parent=1 // pred_region
      _
    $region45: #{tpu_custom_call.1} parent=1 // pred_fallthru
      _
    // Predicated region
    $region46: #{tpu_custom_call.1} parent=1 // pred_check
      _
    $region47: #{tpu_custom_call.1} parent=1 // pred_check_branch
      %52 = sbr.rel (0) target = $region49
    $region48: #{tpu_custom_call.1} parent=1 // pred_region
      %53 = dma.done [#allocation4], 6656
    $region49: #{tpu_custom_call.1} parent=1 // pred_fallthru
      _
    %v55 = vld [vmem:[%s0] sm:$0xff]
    %v56 = vld [vmem:[%s0 + $0x8] sm:$0xff]
    %v57 = vld [vmem:[%s0 + $0x10] sm:$0xff]
    %v58 = vld [vmem:[%s0 + $0x18] sm:$0xff]
    %v59 = vld [vmem:[%s0 + $0x20] sm:$0xff]
    %v60 = vld [vmem:[%s0 + $0x28] sm:$0xff]
    %v61 = vld [vmem:[%s0 + $0x30] sm:$0xff]
    %v62 = vpack.c.bf16 %v55, %v55
    %v63 = vpack.c.bf16 %v56, %v56
    %v64 = vpack.c.bf16 %v57, %v57
    %v65 = vpack.c.bf16 %v58, %v58
    %v66 = vpack.c.bf16 %v59, %v59
    %v67 = vpack.c.bf16 %v60, %v60
    %v68 = vpack.c.bf16 %v61, %v61
    %v69 = vld [vmem:[%s1] sm:$0xff]
    %v70 = vld [vmem:[%s1 + $0x8] sm:$0xff]
    %v71 = vld [vmem:[%s1 + $0x10] sm:$0xff]
    %v72 = vld [vmem:[%s1 + $0x18] sm:$0xf]
    %v73 = vld [vmem:[%s1 + $0x1c] sm:$0xff]
    %v74 = vld [vmem:[%s1 + $0x24] sm:$0xff]
    %v75 = vld [vmem:[%s1 + $0x2c] sm:$0xff]
    %v76 = vld [vmem:[%s1 + $0x34] sm:$0xf]
    %v77 = vld [vmem:[%s1 + $0x38] sm:$0xff]
    %v78 = vld [vmem:[%s1 + $0x40] sm:$0xff]
    %v79 = vld [vmem:[%s1 + $0x48] sm:$0xff]
    %v80 = vld [vmem:[%s1 + $0x50] sm:$0xf]
    %v81 = vld [vmem:[%s1 + $0x54] sm:$0xff]
    %v82 = vld [vmem:[%s1 + $0x5c] sm:$0xff]
    %v83 = vld [vmem:[%s1 + $0x64] sm:$0xff]
    %v84 = vld [vmem:[%s1 + $0x6c] sm:$0xf]
    %v85 = vld [vmem:[%s1 + $0x70] sm:$0xff]
    %v86 = vld [vmem:[%s1 + $0x78] sm:$0xff]
    %v87 = vld [vmem:[%s1 + $0x80] sm:$0xff]
    %v88 = vld [vmem:[%s1 + $0x88] sm:$0xf]
    %v89 = vld [vmem:[%s1 + $0x8c] sm:$0xff]
    %v90 = vld [vmem:[%s1 + $0x94] sm:$0xff]
    %v91 = vld [vmem:[%s1 + $0x9c] sm:$0xff]
    %v92 = vld [vmem:[%s1 + $0xa4] sm:$0xf]
    %v93 = vld [vmem:[%s1 + $0xa8] sm:$0xff]
    %v94 = vld [vmem:[%s1 + $0xb0] sm:$0xff]
    %v95 = vld [vmem:[%s1 + $0xb8] sm:$0xff]
    %v96 = vld [vmem:[%s1 + $0xc0] sm:$0xf]
    %v97 = vld [vmem:[%s1 + $0xc4] sm:$0xff]
    %v98 = vld [vmem:[%s1 + $0xcc] sm:$0xff]
    %v99 = vld [vmem:[%s1 + $0xd4] sm:$0xff]
    %v100 = vld [vmem:[%s1 + $0xdc] sm:$0xf]
    %v101 = vld [vmem:[%s1 + $0xe0] sm:$0xff]
    %v102 = vld [vmem:[%s1 + $0xe8] sm:$0xff]
    %v103 = vld [vmem:[%s1 + $0xf0] sm:$0xff]
    %v104 = vld [vmem:[%s1 + $0xf8] sm:$0xf]
    %v105 = vld [vmem:[%s1 + $0xfc] sm:$0xff]
    %v106 = vld [vmem:[%s1 + $0x104] sm:$0xff]
    %v107 = vld [vmem:[%s1 + $0x10c] sm:$0xff]
    %v108 = vld [vmem:[%s1 + $0x114] sm:$0xf]
    %v109 = vld [vmem:[%s1 + $0x118] sm:$0xff]
    %v110 = vld [vmem:[%s1 + $0x120] sm:$0xff]
    %v111 = vld [vmem:[%s1 + $0x128] sm:$0xff]
    %v112 = vld [vmem:[%s1 + $0x130] sm:$0xf]
    %v113 = vld [vmem:[%s1 + $0x134] sm:$0xff]
    %v114 = vld [vmem:[%s1 + $0x13c] sm:$0xff]
    %v115 = vld [vmem:[%s1 + $0x144] sm:$0xff]
    %v116 = vld [vmem:[%s1 + $0x14c] sm:$0xf]
    %v117 = vld [vmem:[%s1 + $0x150] sm:$0xff]
    %v118 = vld [vmem:[%s1 + $0x158] sm:$0xff]
    %v119 = vld [vmem:[%s1 + $0x160] sm:$0xff]
    %v120 = vld [vmem:[%s1 + $0x168] sm:$0xf]
    %v121 = vld [vmem:[%s1 + $0x16c] sm:$0xff]
    %v122 = vld [vmem:[%s1 + $0x174] sm:$0xff]
    %v123 = vld [vmem:[%s1 + $0x17c] sm:$0xff]
    %v124 = vld [vmem:[%s1 + $0x184] sm:$0xf]
    %v125 = vld [vmem:[%s1 + $0x188] sm:$0xff]
    %v126 = vld [vmem:[%s1 + $0x190] sm:$0xff]
    %v127 = vld [vmem:[%s1 + $0x198] sm:$0xff]
    %v128 = vld [vmem:[%s1 + $0x1a0] sm:$0xf]
    %v129 = vld [vmem:[%s1 + $0x1a4] sm:$0xff]
    %v130 = vld [vmem:[%s1 + $0x1ac] sm:$0xff]
    %v131 = vld [vmem:[%s1 + $0x1b4] sm:$0xff]
    %v132 = vld [vmem:[%s1 + $0x1bc] sm:$0xf]
    %v133 = vld [vmem:[%s1 + $0x1c0] sm:$0xff]
    %v134 = vld [vmem:[%s1 + $0x1c8] sm:$0xff]
    %v135 = vld [vmem:[%s1 + $0x1d0] sm:$0xff]
    %v136 = vld [vmem:[%s1 + $0x1d8] sm:$0xf]
    %v137 = vld [vmem:[%s1 + $0x1dc] sm:$0xff]
    %v138 = vld [vmem:[%s1 + $0x1e4] sm:$0xff]
    %v139 = vld [vmem:[%s1 + $0x1ec] sm:$0xff]
    %v140 = vld [vmem:[%s1 + $0x1f4] sm:$0xf]
    %v141 = vld [vmem:[%s1 + $0x1f8] sm:$0xff]
    %v142 = vld [vmem:[%s1 + $0x200] sm:$0xff]
    %v143 = vld [vmem:[%s1 + $0x208] sm:$0xff]
    %v144 = vld [vmem:[%s1 + $0x210] sm:$0xf]
    %v145 = vld [vmem:[%s1 + $0x214] sm:$0xff]
    %v146 = vld [vmem:[%s1 + $0x21c] sm:$0xff]
    %v147 = vld [vmem:[%s1 + $0x224] sm:$0xff]
    %v148 = vld [vmem:[%s1 + $0x22c] sm:$0xf]
    %v149 = vld [vmem:[%s1 + $0x230] sm:$0xff]
    %v150 = vld [vmem:[%s1 + $0x238] sm:$0xff]
    %v151 = vld [vmem:[%s1 + $0x240] sm:$0xff]
    %v152 = vld [vmem:[%s1 + $0x248] sm:$0xf]
    %v153 = vld [vmem:[%s1 + $0x24c] sm:$0xff]
    %v154 = vld [vmem:[%s1 + $0x254] sm:$0xff]
    %v155 = vld [vmem:[%s1 + $0x25c] sm:$0xff]
    %v156 = vld [vmem:[%s1 + $0x264] sm:$0xf]
    %v157 = vld [vmem:[%s1 + $0x268] sm:$0xff]
    %v158 = vld [vmem:[%s1 + $0x270] sm:$0xff]
    %v159 = vld [vmem:[%s1 + $0x278] sm:$0xff]
    %v160 = vld [vmem:[%s1 + $0x280] sm:$0xf]
    %v161 = vld [vmem:[%s1 + $0x284] sm:$0xff]
    %v162 = vld [vmem:[%s1 + $0x28c] sm:$0xff]
    %v163 = vld [vmem:[%s1 + $0x294] sm:$0xff]
    %v164 = vld [vmem:[%s1 + $0x29c] sm:$0xf]
    %v165 = vld [vmem:[%s1 + $0x2a0] sm:$0xff]
    %v166 = vld [vmem:[%s1 + $0x2a8] sm:$0xff]
    %v167 = vld [vmem:[%s1 + $0x2b0] sm:$0xff]
    %v168 = vld [vmem:[%s1 + $0x2b8] sm:$0xf]
    %v169 = vld [vmem:[%s1 + $0x2bc] sm:$0xff]
    %v170 = vld [vmem:[%s1 + $0x2c4] sm:$0xff]
    %v171 = vld [vmem:[%s1 + $0x2cc] sm:$0xff]
    %v172 = vld [vmem:[%s1 + $0x2d4] sm:$0xf]
    %v173 = vld [vmem:[%s1 + $0x2d8] sm:$0xff]
    %v174 = vld [vmem:[%s1 + $0x2e0] sm:$0xff]
    %v175 = vld [vmem:[%s1 + $0x2e8] sm:$0xff]
    %v176 = vld [vmem:[%s1 + $0x2f0] sm:$0xf]
    %v177 = vld [vmem:[%s1 + $0x2f4] sm:$0xff]
    %v178 = vld [vmem:[%s1 + $0x2fc] sm:$0xff]
    %v179 = vld [vmem:[%s1 + $0x304] sm:$0xff]
    %v180 = vld [vmem:[%s1 + $0x30c] sm:$0xf]
    %v181 = vld [vmem:[%s1 + $0x310] sm:$0xff]
    %v182 = vld [vmem:[%s1 + $0x318] sm:$0xff]
    %v183 = vld [vmem:[%s1 + $0x320] sm:$0xff]
    %v184 = vld [vmem:[%s1 + $0x328] sm:$0xf]
    %v185 = vld [vmem:[%s1 + $0x32c] sm:$0xff]
    %v186 = vld [vmem:[%s1 + $0x334] sm:$0xff]
    %v187 = vld [vmem:[%s1 + $0x33c] sm:$0xff]
    %v188 = vld [vmem:[%s1 + $0x344] sm:$0xf]
    %v189 = vld [vmem:[%s1 + $0x348] sm:$0xff]
    %v190 = vld [vmem:[%s1 + $0x350] sm:$0xff]
    %v191 = vld [vmem:[%s1 + $0x358] sm:$0xff]
    %v192 = vld [vmem:[%s1 + $0x360] sm:$0xf]
    %v193 = vld [vmem:[%s1 + $0x364] sm:$0xff]
    %v194 = vld [vmem:[%s1 + $0x36c] sm:$0xff]
    %v195 = vld [vmem:[%s1 + $0x374] sm:$0xff]
    %v196 = vld [vmem:[%s1 + $0x37c] sm:$0xf]
    %v197 = vld [vmem:[%s1 + $0x380] sm:$0xff]
    %v198 = vld [vmem:[%s1 + $0x388] sm:$0xff]
    %v199 = vld [vmem:[%s1 + $0x390] sm:$0xff]
    %v200 = vld [vmem:[%s1 + $0x398] sm:$0xf]
    %v201 = vld [vmem:[%s1 + $0x39c] sm:$0xff]
    %v202 = vld [vmem:[%s1 + $0x3a4] sm:$0xff]
    %v203 = vld [vmem:[%s1 + $0x3ac] sm:$0xff]
    %v204 = vld [vmem:[%s1 + $0x3b4] sm:$0xf]
    %v205 = vld [vmem:[%s1 + $0x3b8] sm:$0xff]
    %v206 = vld [vmem:[%s1 + $0x3c0] sm:$0xff]
    %v207 = vld [vmem:[%s1 + $0x3c8] sm:$0xff]
    %v208 = vld [vmem:[%s1 + $0x3d0] sm:$0xf]
    %v209 = vld [vmem:[%s1 + $0x3d4] sm:$0xff]
    %v210 = vld [vmem:[%s1 + $0x3dc] sm:$0xff]
    %v211 = vld [vmem:[%s1 + $0x3e4] sm:$0xff]
    %v212 = vld [vmem:[%s1 + $0x3ec] sm:$0xf]
    %v213 = vld [vmem:[%s1 + $0x3f0] sm:$0xff]
    %v214 = vld [vmem:[%s1 + $0x3f8] sm:$0xff]
    %v215 = vld [vmem:[%s1 + $0x400] sm:$0xff]
    %v216 = vld [vmem:[%s1 + $0x408] sm:$0xf]
    %v217 = vld [vmem:[%s1 + $0x40c] sm:$0xff]
    %v218 = vld [vmem:[%s1 + $0x414] sm:$0xff]
    %v219 = vld [vmem:[%s1 + $0x41c] sm:$0xff]
    %v220 = vld [vmem:[%s1 + $0x424] sm:$0xf]
    %v221 = vld [vmem:[%s1 + $0x428] sm:$0xff]
    %v222 = vld [vmem:[%s1 + $0x430] sm:$0xff]
    %v223 = vld [vmem:[%s1 + $0x438] sm:$0xff]
    %v224 = vld [vmem:[%s1 + $0x440] sm:$0xf]
    %v225 = vld [vmem:[%s1 + $0x444] sm:$0xff]
    %v226 = vld [vmem:[%s1 + $0x44c] sm:$0xff]
    %v227 = vld [vmem:[%s1 + $0x454] sm:$0xff]
    %v228 = vld [vmem:[%s1 + $0x45c] sm:$0xf]
    %v229 = vld [vmem:[%s1 + $0x460] sm:$0xff]
    %v230 = vld [vmem:[%s1 + $0x468] sm:$0xff]
    %v231 = vld [vmem:[%s1 + $0x470] sm:$0xff]
    %v232 = vld [vmem:[%s1 + $0x478] sm:$0xf]
    %v233 = vld [vmem:[%s1 + $0x47c] sm:$0xff]
    %v234 = vld [vmem:[%s1 + $0x484] sm:$0xff]
    %v235 = vld [vmem:[%s1 + $0x48c] sm:$0xff]
    %v236 = vld [vmem:[%s1 + $0x494] sm:$0xf]
    %v237 = vld [vmem:[%s1 + $0x498] sm:$0xff]
    %v238 = vld [vmem:[%s1 + $0x4a0] sm:$0xff]
    %v239 = vld [vmem:[%s1 + $0x4a8] sm:$0xff]
    %v240 = vld [vmem:[%s1 + $0x4b0] sm:$0xf]
    %v241 = vld [vmem:[%s1 + $0x4b4] sm:$0xff]
    %v242 = vld [vmem:[%s1 + $0x4bc] sm:$0xff]
    %v243 = vld [vmem:[%s1 + $0x4c4] sm:$0xff]
    %v244 = vld [vmem:[%s1 + $0x4cc] sm:$0xf]
    %v245 = vld [vmem:[%s1 + $0x4d0] sm:$0xff]
    %v246 = vld [vmem:[%s1 + $0x4d8] sm:$0xff]
    %v247 = vld [vmem:[%s1 + $0x4e0] sm:$0xff]
    %v248 = vld [vmem:[%s1 + $0x4e8] sm:$0xf]
    %v249 = vld [vmem:[%s1 + $0x4ec] sm:$0xff]
    %v250 = vld [vmem:[%s1 + $0x4f4] sm:$0xff]
    %v251 = vld [vmem:[%s1 + $0x4fc] sm:$0xff]
    %v252 = vld [vmem:[%s1 + $0x504] sm:$0xf]
    %v253 = vld [vmem:[%s1 + $0x508] sm:$0xff]
    %v254 = vld [vmem:[%s1 + $0x510] sm:$0xff]
    %v255 = vld [vmem:[%s1 + $0x518] sm:$0xff]
    %v256 = vld [vmem:[%s1 + $0x520] sm:$0xf]
    %v257 = vld [vmem:[%s1 + $0x524] sm:$0xff]
    %v258 = vld [vmem:[%s1 + $0x52c] sm:$0xff]
    %v259 = vld [vmem:[%s1 + $0x534] sm:$0xff]
    %v260 = vld [vmem:[%s1 + $0x53c] sm:$0xf]
    %v261 = vld [vmem:[%s1 + $0x540] sm:$0xff]
    %v262 = vld [vmem:[%s1 + $0x548] sm:$0xff]
    %v263 = vld [vmem:[%s1 + $0x550] sm:$0xff]
    %v264 = vld [vmem:[%s1 + $0x558] sm:$0xf]
    %v265 = vld [vmem:[%s1 + $0x55c] sm:$0xff]
    %v266 = vld [vmem:[%s1 + $0x564] sm:$0xff]
    %v267 = vld [vmem:[%s1 + $0x56c] sm:$0xff]
    %v268 = vld [vmem:[%s1 + $0x574] sm:$0xf]
    %v269 = vld [vmem:[%s1 + $0x578] sm:$0xff]
    %v270 = vld [vmem:[%s1 + $0x580] sm:$0xff]
    %v271 = vld [vmem:[%s1 + $0x588] sm:$0xff]
    %v272 = vld [vmem:[%s1 + $0x590] sm:$0xf]
    %v273 = vld [vmem:[%s1 + $0x594] sm:$0xff]
    %v274 = vld [vmem:[%s1 + $0x59c] sm:$0xff]
    %v275 = vld [vmem:[%s1 + $0x5a4] sm:$0xff]
    %v276 = vld [vmem:[%s1 + $0x5ac] sm:$0xf]
    %v277 = vld [vmem:[%s1 + $0x5b0] sm:$0xff]
    %v278 = vld [vmem:[%s1 + $0x5b8] sm:$0xff]
    %v279 = vld [vmem:[%s1 + $0x5c0] sm:$0xff]
    %v280 = vld [vmem:[%s1 + $0x5c8] sm:$0xf]
    %v281 = vld [vmem:[%s1 + $0x5cc] sm:$0xff]
    %v282 = vld [vmem:[%s1 + $0x5d4] sm:$0xff]
    %v283 = vld [vmem:[%s1 + $0x5dc] sm:$0xff]
    %v284 = vld [vmem:[%s1 + $0x5e4] sm:$0xf]
    %v285 = vld [vmem:[%s1 + $0x5e8] sm:$0xff]
    %v286 = vld [vmem:[%s1 + $0x5f0] sm:$0xff]
    %v287 = vld [vmem:[%s1 + $0x5f8] sm:$0xff]
    %v288 = vld [vmem:[%s1 + $0x600] sm:$0xf]
    %v289 = vld [vmem:[%s1 + $0x604] sm:$0xff]
    %v290 = vld [vmem:[%s1 + $0x60c] sm:$0xff]
    %v291 = vld [vmem:[%s1 + $0x614] sm:$0xff]
    %v292 = vld [vmem:[%s1 + $0x61c] sm:$0xf]
    %v293 = vld [vmem:[%s1 + $0x620] sm:$0xff]
    %v294 = vld [vmem:[%s1 + $0x628] sm:$0xff]
    %v295 = vld [vmem:[%s1 + $0x630] sm:$0xff]
    %v296 = vld [vmem:[%s1 + $0x638] sm:$0xf]
    %v297 = vld [vmem:[%s1 + $0x63c] sm:$0xff]
    %v298 = vld [vmem:[%s1 + $0x644] sm:$0xff]
    %v299 = vld [vmem:[%s1 + $0x64c] sm:$0xff]
    %v300 = vld [vmem:[%s1 + $0x654] sm:$0xf]
    %v301 = vld [vmem:[%s1 + $0x658] sm:$0xff]
    %v302 = vld [vmem:[%s1 + $0x660] sm:$0xff]
    %v303 = vld [vmem:[%s1 + $0x668] sm:$0xff]
    %v304 = vld [vmem:[%s1 + $0x670] sm:$0xf]
    %v305 = vld [vmem:[%s1 + $0x674] sm:$0xff]
    %v306 = vld [vmem:[%s1 + $0x67c] sm:$0xff]
    %v307 = vld [vmem:[%s1 + $0x684] sm:$0xff]
    %v308 = vld [vmem:[%s1 + $0x68c] sm:$0xf]
    %v309 = vld [vmem:[%s1 + $0x690] sm:$0xff]
    %v310 = vld [vmem:[%s1 + $0x698] sm:$0xff]
    %v311 = vld [vmem:[%s1 + $0x6a0] sm:$0xff]
    %v312 = vld [vmem:[%s1 + $0x6a8] sm:$0xf]
    %v313 = vld [vmem:[%s1 + $0x6ac] sm:$0xff]
    %v314 = vld [vmem:[%s1 + $0x6b4] sm:$0xff]
    %v315 = vld [vmem:[%s1 + $0x6bc] sm:$0xff]
    %v316 = vld [vmem:[%s1 + $0x6c4] sm:$0xf]
    %v317 = vld [vmem:[%s1 + $0x6c8] sm:$0xff]
    %v318 = vld [vmem:[%s1 + $0x6d0] sm:$0xff]
    %v319 = vld [vmem:[%s1 + $0x6d8] sm:$0xff]
    %v320 = vld [vmem:[%s1 + $0x6e0] sm:$0xf]
    %v321 = vld [vmem:[%s1 + $0x6e4] sm:$0xff]
    %v322 = vld [vmem:[%s1 + $0x6ec] sm:$0xff]
    %v323 = vld [vmem:[%s1 + $0x6f4] sm:$0xff]
    %v324 = vld [vmem:[%s1 + $0x6fc] sm:$0xf]
    %v325 = vld [vmem:[%s1 + $0x700] sm:$0xff]
    %v326 = vld [vmem:[%s1 + $0x708] sm:$0xff]
    %v327 = vld [vmem:[%s1 + $0x710] sm:$0xff]
    %v328 = vld [vmem:[%s1 + $0x718] sm:$0xf]
    %v329 = vld [vmem:[%s1 + $0x71c] sm:$0xff]
    %v330 = vld [vmem:[%s1 + $0x724] sm:$0xff]
    %v331 = vld [vmem:[%s1 + $0x72c] sm:$0xff]
    %v332 = vld [vmem:[%s1 + $0x734] sm:$0xf]
    %v333 = vld [vmem:[%s1 + $0x738] sm:$0xff]
    %v334 = vld [vmem:[%s1 + $0x740] sm:$0xff]
    %v335 = vld [vmem:[%s1 + $0x748] sm:$0xff]
    %v336 = vld [vmem:[%s1 + $0x750] sm:$0xf]
    %v337 = vld [vmem:[%s1 + $0x754] sm:$0xff]
    %v338 = vld [vmem:[%s1 + $0x75c] sm:$0xff]
    %v339 = vld [vmem:[%s1 + $0x764] sm:$0xff]
    %v340 = vld [vmem:[%s1 + $0x76c] sm:$0xf]
    %v341 = vld [vmem:[%s1 + $0x770] sm:$0xff]
    %v342 = vld [vmem:[%s1 + $0x778] sm:$0xff]
    %v343 = vld [vmem:[%s1 + $0x780] sm:$0xff]
    %v344 = vld [vmem:[%s1 + $0x788] sm:$0xf]
    %v345 = vld [vmem:[%s1 + $0x78c] sm:$0xff]
    %v346 = vld [vmem:[%s1 + $0x794] sm:$0xff]
    %v347 = vld [vmem:[%s1 + $0x79c] sm:$0xff]
    %v348 = vld [vmem:[%s1 + $0x7a4] sm:$0xf]
    %v349 = vld [vmem:[%s1 + $0x7a8] sm:$0xff]
    %v350 = vld [vmem:[%s1 + $0x7b0] sm:$0xff]
    %v351 = vld [vmem:[%s1 + $0x7b8] sm:$0xff]
    %v352 = vld [vmem:[%s1 + $0x7c0] sm:$0xf]
    %v353 = vld [vmem:[%s1 + $0x7c4] sm:$0xff]
    %v354 = vld [vmem:[%s1 + $0x7cc] sm:$0xff]
    %v355 = vld [vmem:[%s1 + $0x7d4] sm:$0xff]
    %v356 = vld [vmem:[%s1 + $0x7dc] sm:$0xf]
    %v357 = vld [vmem:[%s1 + $0x7e0] sm:$0xff]
    %v358 = vld [vmem:[%s1 + $0x7e8] sm:$0xff]
    %v359 = vld [vmem:[%s1 + $0x7f0] sm:$0xff]
    %v360 = vld [vmem:[%s1 + $0x7f8] sm:$0xf]
    %v361 = vld [vmem:[%s1 + $0x7fc] sm:$0xff]
    %v362 = vld [vmem:[%s1 + $0x804] sm:$0xff]
    %v363 = vld [vmem:[%s1 + $0x80c] sm:$0xff]
    %v364 = vld [vmem:[%s1 + $0x814] sm:$0xf]
    %v365 = vld [vmem:[%s1 + $0x818] sm:$0xff]
    %v366 = vld [vmem:[%s1 + $0x820] sm:$0xff]
    %v367 = vld [vmem:[%s1 + $0x828] sm:$0xff]
    %v368 = vld [vmem:[%s1 + $0x830] sm:$0xf]
    %v369 = vld [vmem:[%s1 + $0x834] sm:$0xff]
    %v370 = vld [vmem:[%s1 + $0x83c] sm:$0xff]
    %v371 = vld [vmem:[%s1 + $0x844] sm:$0xff]
    %v372 = vld [vmem:[%s1 + $0x84c] sm:$0xf]
    %v373 = vld [vmem:[%s1 + $0x850] sm:$0xff]
    %v374 = vld [vmem:[%s1 + $0x858] sm:$0xff]
    %v375 = vld [vmem:[%s1 + $0x860] sm:$0xff]
    %v376 = vld [vmem:[%s1 + $0x868] sm:$0xf]
    %v377 = vld [vmem:[%s1 + $0x86c] sm:$0xff]
    %v378 = vld [vmem:[%s1 + $0x874] sm:$0xff]
    %v379 = vld [vmem:[%s1 + $0x87c] sm:$0xff]
    %v380 = vld [vmem:[%s1 + $0x884] sm:$0xf]
    %v381 = vld [vmem:[%s1 + $0x888] sm:$0xff]
    %v382 = vld [vmem:[%s1 + $0x890] sm:$0xff]
    %v383 = vld [vmem:[%s1 + $0x898] sm:$0xff]
    %v384 = vld [vmem:[%s1 + $0x8a0] sm:$0xf]
    %v385 = vld [vmem:[%s1 + $0x8a4] sm:$0xff]
    %v386 = vld [vmem:[%s1 + $0x8ac] sm:$0xff]
    %v387 = vld [vmem:[%s1 + $0x8b4] sm:$0xff]
    %v388 = vld [vmem:[%s1 + $0x8bc] sm:$0xf]
    %v389 = vld [vmem:[%s1 + $0x8c0] sm:$0xff]
    %v390 = vld [vmem:[%s1 + $0x8c8] sm:$0xff]
    %v391 = vld [vmem:[%s1 + $0x8d0] sm:$0xff]
    %v392 = vld [vmem:[%s1 + $0x8d8] sm:$0xf]
    %v393 = vld [vmem:[%s1 + $0x8dc] sm:$0xff]
    %v394 = vld [vmem:[%s1 + $0x8e4] sm:$0xff]
    %v395 = vld [vmem:[%s1 + $0x8ec] sm:$0xff]
    %v396 = vld [vmem:[%s1 + $0x8f4] sm:$0xf]
    %v397 = vld [vmem:[%s1 + $0x8f8] sm:$0xff]
    %v398 = vld [vmem:[%s1 + $0x900] sm:$0xff]
    %v399 = vld [vmem:[%s1 + $0x908] sm:$0xff]
    %v400 = vld [vmem:[%s1 + $0x910] sm:$0xf]
    %v401 = vld [vmem:[%s1 + $0x914] sm:$0xff]
    %v402 = vld [vmem:[%s1 + $0x91c] sm:$0xff]
    %v403 = vld [vmem:[%s1 + $0x924] sm:$0xff]
    %v404 = vld [vmem:[%s1 + $0x92c] sm:$0xf]
    %v405 = vld [vmem:[%s1 + $0x930] sm:$0xff]
    %v406 = vld [vmem:[%s1 + $0x938] sm:$0xff]
    %v407 = vld [vmem:[%s1 + $0x940] sm:$0xff]
    %v408 = vld [vmem:[%s1 + $0x948] sm:$0xf]
    %v409 = vld [vmem:[%s1 + $0x94c] sm:$0xff]
    %v410 = vld [vmem:[%s1 + $0x954] sm:$0xff]
    %v411 = vld [vmem:[%s1 + $0x95c] sm:$0xff]
    %v412 = vld [vmem:[%s1 + $0x964] sm:$0xf]
    %v413 = vld [vmem:[%s1 + $0x968] sm:$0xff]
    %v414 = vld [vmem:[%s1 + $0x970] sm:$0xff]
    %v415 = vld [vmem:[%s1 + $0x978] sm:$0xff]
    %v416 = vld [vmem:[%s1 + $0x980] sm:$0xf]
    %v417 = vld [vmem:[%s1 + $0x984] sm:$0xff]
    %v418 = vld [vmem:[%s1 + $0x98c] sm:$0xff]
    %v419 = vld [vmem:[%s1 + $0x994] sm:$0xff]
    %v420 = vld [vmem:[%s1 + $0x99c] sm:$0xf]
    %v421 = vld [vmem:[%s1 + $0x9a0] sm:$0xff]
    %v422 = vld [vmem:[%s1 + $0x9a8] sm:$0xff]
    %v423 = vld [vmem:[%s1 + $0x9b0] sm:$0xff]
    %v424 = vld [vmem:[%s1 + $0x9b8] sm:$0xf]
    %v425 = vld [vmem:[%s1 + $0x9bc] sm:$0xff]
    %v426 = vld [vmem:[%s1 + $0x9c4] sm:$0xff]
    %v427 = vld [vmem:[%s1 + $0x9cc] sm:$0xff]
    %v428 = vld [vmem:[%s1 + $0x9d4] sm:$0xf]
    %v429 = vld [vmem:[%s1 + $0x9d8] sm:$0xff]
    %v430 = vld [vmem:[%s1 + $0x9e0] sm:$0xff]
    %v431 = vld [vmem:[%s1 + $0x9e8] sm:$0xff]
    %v432 = vld [vmem:[%s1 + $0x9f0] sm:$0xf]
    %v433 = vld [vmem:[%s1 + $0x9f4] sm:$0xff]
    %v434 = vld [vmem:[%s1 + $0x9fc] sm:$0xff]
    %v435 = vld [vmem:[%s1 + $0xa04] sm:$0xff]
    %v436 = vld [vmem:[%s1 + $0xa0c] sm:$0xf]
    %v437 = vld [vmem:[%s1 + $0xa10] sm:$0xff]
    %v438 = vld [vmem:[%s1 + $0xa18] sm:$0xff]
    %v439 = vld [vmem:[%s1 + $0xa20] sm:$0xff]
    %v440 = vld [vmem:[%s1 + $0xa28] sm:$0xf]
    %v441 = vld [vmem:[%s1 + $0xa2c] sm:$0xff]
    %v442 = vld [vmem:[%s1 + $0xa34] sm:$0xff]
    %v443 = vld [vmem:[%s1 + $0xa3c] sm:$0xff]
    %v444 = vld [vmem:[%s1 + $0xa44] sm:$0xf]
    %v445 = vld [vmem:[%s1 + $0xa48] sm:$0xff]
    %v446 = vld [vmem:[%s1 + $0xa50] sm:$0xff]
    %v447 = vld [vmem:[%s1 + $0xa58] sm:$0xff]
    %v448 = vld [vmem:[%s1 + $0xa60] sm:$0xf]
    %v449 = vld [vmem:[%s1 + $0xa64] sm:$0xff]
    %v450 = vld [vmem:[%s1 + $0xa6c] sm:$0xff]
    %v451 = vld [vmem:[%s1 + $0xa74] sm:$0xff]
    %v452 = vld [vmem:[%s1 + $0xa7c] sm:$0xf]
    %v453 = vld [vmem:[%s1 + $0xa80] sm:$0xff]
    %v454 = vld [vmem:[%s1 + $0xa88] sm:$0xff]
    %v455 = vld [vmem:[%s1 + $0xa90] sm:$0xff]
    %v456 = vld [vmem:[%s1 + $0xa98] sm:$0xf]
    %v457 = vld [vmem:[%s1 + $0xa9c] sm:$0xff]
    %v458 = vld [vmem:[%s1 + $0xaa4] sm:$0xff]
    %v459 = vld [vmem:[%s1 + $0xaac] sm:$0xff]
    %v460 = vld [vmem:[%s1 + $0xab4] sm:$0xf]
    %v461 = vld [vmem:[%s1 + $0xab8] sm:$0xff]
    %v462 = vld [vmem:[%s1 + $0xac0] sm:$0xff]
    %v463 = vld [vmem:[%s1 + $0xac8] sm:$0xff]
    %v464 = vld [vmem:[%s1 + $0xad0] sm:$0xf]
    %v465 = vld [vmem:[%s1 + $0xad4] sm:$0xff]
    %v466 = vld [vmem:[%s1 + $0xadc] sm:$0xff]
    %v467 = vld [vmem:[%s1 + $0xae4] sm:$0xff]
    %v468 = vld [vmem:[%s1 + $0xaec] sm:$0xf]
    %v469 = vld [vmem:[%s1 + $0xaf0] sm:$0xff]
    %v470 = vld [vmem:[%s1 + $0xaf8] sm:$0xff]
    %v471 = vld [vmem:[%s1 + $0xb00] sm:$0xff]
    %v472 = vld [vmem:[%s1 + $0xb08] sm:$0xf]
    %v473 = vld [vmem:[%s1 + $0xb0c] sm:$0xff]
    %v474 = vld [vmem:[%s1 + $0xb14] sm:$0xff]
    %v475 = vld [vmem:[%s1 + $0xb1c] sm:$0xff]
    %v476 = vld [vmem:[%s1 + $0xb24] sm:$0xf]
    %v477 = vld [vmem:[%s1 + $0xb28] sm:$0xff]
    %v478 = vld [vmem:[%s1 + $0xb30] sm:$0xff]
    %v479 = vld [vmem:[%s1 + $0xb38] sm:$0xff]
    %v480 = vld [vmem:[%s1 + $0xb40] sm:$0xf]
    %v481 = vld [vmem:[%s1 + $0xb44] sm:$0xff]
    %v482 = vld [vmem:[%s1 + $0xb4c] sm:$0xff]
    %v483 = vld [vmem:[%s1 + $0xb54] sm:$0xff]
    %v484 = vld [vmem:[%s1 + $0xb5c] sm:$0xf]
    %v485 = vld [vmem:[%s2] sm:$0x7f]
    %v487 = vlaneseq
    %v488 = vshrl.u32 %v487, 7
    %v489 = vsub.s32 0, %v488
    %v490 = vrot.slane %v485, %v489
    %v491 = vlaneseq
    %v492 = vshrl.u32 %v491, 7
    %v493 = vsub.s32 1, %v492
    %v494 = vrot.slane %v485, %v493
    %v495 = vlaneseq
    %v496 = vshrl.u32 %v495, 7
    %v497 = vsub.s32 2, %v496
    %v498 = vrot.slane %v485, %v497
    %v499 = vlaneseq
    %v500 = vshrl.u32 %v499, 7
    %v501 = vsub.s32 3, %v500
    %v502 = vrot.slane %v485, %v501
    %v503 = vlaneseq
    %v504 = vshrl.u32 %v503, 7
    %v505 = vsub.s32 4, %v504
    %v506 = vrot.slane %v485, %v505
    %v507 = vlaneseq
    %v508 = vshrl.u32 %v507, 7
    %v509 = vsub.s32 5, %v508
    %v510 = vrot.slane %v485, %v509
    %v511 = vlaneseq
    %v512 = vshrl.u32 %v511, 7
    %v513 = vsub.s32 6, %v512
    %v514 = vrot.slane %v485, %v513
    %v938 = vunpack.c.l.b16 %v69
    %v939 = vunpack.c.h.b16 %v69
    %v940 = vunpack.c.l.b16 %v70
    %v941 = vunpack.c.h.b16 %v70
    %v942 = vunpack.c.l.b16 %v71
    %v943 = vunpack.c.h.b16 %v71
    %v944 = vunpack.c.l.b16 %v72
    %v945 = vunpack.c.l.b16 %v73
    %v946 = vunpack.c.h.b16 %v73
    %v947 = vunpack.c.l.b16 %v74
    %v948 = vunpack.c.h.b16 %v74
    %v949 = vunpack.c.l.b16 %v75
    %v950 = vunpack.c.h.b16 %v75
    %v951 = vunpack.c.l.b16 %v76
    %v952 = vunpack.c.l.b16 %v77
    %v953 = vunpack.c.h.b16 %v77
    %v954 = vunpack.c.l.b16 %v78
    %v955 = vunpack.c.h.b16 %v78
    %v956 = vunpack.c.l.b16 %v79
    %v957 = vunpack.c.h.b16 %v79
    %v958 = vunpack.c.l.b16 %v80
    %v959 = vunpack.c.l.b16 %v81
    %v960 = vunpack.c.h.b16 %v81
    %v961 = vunpack.c.l.b16 %v82
    %v962 = vunpack.c.h.b16 %v82
    %v963 = vunpack.c.l.b16 %v83
    %v964 = vunpack.c.h.b16 %v83
    %v965 = vunpack.c.l.b16 %v84
    %v966 = vunpack.c.l.b16 %v85
    %v967 = vunpack.c.h.b16 %v85
    %v968 = vunpack.c.l.b16 %v86
    %v969 = vunpack.c.h.b16 %v86
    %v970 = vunpack.c.l.b16 %v87
    %v971 = vunpack.c.h.b16 %v87
    %v972 = vunpack.c.l.b16 %v88
    %v973 = vunpack.c.l.b16 %v89
    %v974 = vunpack.c.h.b16 %v89
    %v975 = vunpack.c.l.b16 %v90
    %v976 = vunpack.c.h.b16 %v90
    %v977 = vunpack.c.l.b16 %v91
    %v978 = vunpack.c.h.b16 %v91
    %v979 = vunpack.c.l.b16 %v92
    %v980 = vunpack.c.l.b16 %v93
    %v981 = vunpack.c.h.b16 %v93
    %v982 = vunpack.c.l.b16 %v94
    %v983 = vunpack.c.h.b16 %v94
    %v984 = vunpack.c.l.b16 %v95
    %v985 = vunpack.c.h.b16 %v95
    %v986 = vunpack.c.l.b16 %v96
    %v987 = vunpack.c.l.b16 %v97
    %v988 = vunpack.c.h.b16 %v97
    %v989 = vunpack.c.l.b16 %v98
    %v990 = vunpack.c.h.b16 %v98
    %v991 = vunpack.c.l.b16 %v99
    %v992 = vunpack.c.h.b16 %v99
    %v993 = vunpack.c.l.b16 %v100
    %v994 = vunpack.c.l.b16 %v101
    %v995 = vunpack.c.h.b16 %v101
    %v996 = vunpack.c.l.b16 %v102
    %v997 = vunpack.c.h.b16 %v102
    %v998 = vunpack.c.l.b16 %v103
    %v999 = vunpack.c.h.b16 %v103
    %v1000 = vunpack.c.l.b16 %v104
    %v1001 = vunpack.c.l.b16 %v105
    %v1002 = vunpack.c.h.b16 %v105
    %v1003 = vunpack.c.l.b16 %v106
    %v1004 = vunpack.c.h.b16 %v106
    %v1005 = vunpack.c.l.b16 %v107
    %v1006 = vunpack.c.h.b16 %v107
    %v1007 = vunpack.c.l.b16 %v108
    %v1008 = vunpack.c.l.b16 %v109
    %v1009 = vunpack.c.h.b16 %v109
    %v1010 = vunpack.c.l.b16 %v110
    %v1011 = vunpack.c.h.b16 %v110
    %v1012 = vunpack.c.l.b16 %v111
    %v1013 = vunpack.c.h.b16 %v111
    %v1014 = vunpack.c.l.b16 %v112
    %v1015 = vunpack.c.l.b16 %v113
    %v1016 = vunpack.c.h.b16 %v113
    %v1017 = vunpack.c.l.b16 %v114
    %v1018 = vunpack.c.h.b16 %v114
    %v1019 = vunpack.c.l.b16 %v115
    %v1020 = vunpack.c.h.b16 %v115
    %v1021 = vunpack.c.l.b16 %v116
    %v1022 = vunpack.c.l.b16 %v117
    %v1023 = vunpack.c.h.b16 %v117
    %v1024 = vunpack.c.l.b16 %v118
    %v1025 = vunpack.c.h.b16 %v118
    %v1026 = vunpack.c.l.b16 %v119
    %v1027 = vunpack.c.h.b16 %v119
    %v1028 = vunpack.c.l.b16 %v120
    %v1029 = vunpack.c.l.b16 %v121
    %v1030 = vunpack.c.h.b16 %v121
    %v1031 = vunpack.c.l.b16 %v122
    %v1032 = vunpack.c.h.b16 %v122
    %v1033 = vunpack.c.l.b16 %v123
    %v1034 = vunpack.c.h.b16 %v123
    %v1035 = vunpack.c.l.b16 %v124
    %v1036 = vunpack.c.l.b16 %v125
    %v1037 = vunpack.c.h.b16 %v125
    %v1038 = vunpack.c.l.b16 %v126
    %v1039 = vunpack.c.h.b16 %v126
    %v1040 = vunpack.c.l.b16 %v127
    %v1041 = vunpack.c.h.b16 %v127
    %v1042 = vunpack.c.l.b16 %v128
    %v1043 = vunpack.c.l.b16 %v129
    %v1044 = vunpack.c.h.b16 %v129
    %v1045 = vunpack.c.l.b16 %v130
    %v1046 = vunpack.c.h.b16 %v130
    %v1047 = vunpack.c.l.b16 %v131
    %v1048 = vunpack.c.h.b16 %v131
    %v1049 = vunpack.c.l.b16 %v132
    %v1050 = vunpack.c.l.b16 %v133
    %v1051 = vunpack.c.h.b16 %v133
    %v1052 = vunpack.c.l.b16 %v134
    %v1053 = vunpack.c.h.b16 %v134
    %v1054 = vunpack.c.l.b16 %v135
    %v1055 = vunpack.c.h.b16 %v135
    %v1056 = vunpack.c.l.b16 %v136
    %v1057 = vunpack.c.l.b16 %v137
    %v1058 = vunpack.c.h.b16 %v137
    %v1059 = vunpack.c.l.b16 %v138
    %v1060 = vunpack.c.h.b16 %v138
    %v1061 = vunpack.c.l.b16 %v139
    %v1062 = vunpack.c.h.b16 %v139
    %v1063 = vunpack.c.l.b16 %v140
    %v1064 = vunpack.c.l.b16 %v141
    %v1065 = vunpack.c.h.b16 %v141
    %v1066 = vunpack.c.l.b16 %v142
    %v1067 = vunpack.c.h.b16 %v142
    %v1068 = vunpack.c.l.b16 %v143
    %v1069 = vunpack.c.h.b16 %v143
    %v1070 = vunpack.c.l.b16 %v144
    %v1071 = vunpack.c.l.b16 %v145
    %v1072 = vunpack.c.h.b16 %v145
    %v1073 = vunpack.c.l.b16 %v146
    %v1074 = vunpack.c.h.b16 %v146
    %v1075 = vunpack.c.l.b16 %v147
    %v1076 = vunpack.c.h.b16 %v147
    %v1077 = vunpack.c.l.b16 %v148
    %v1078 = vunpack.c.l.b16 %v149
    %v1079 = vunpack.c.h.b16 %v149
    %v1080 = vunpack.c.l.b16 %v150
    %v1081 = vunpack.c.h.b16 %v150
    %v1082 = vunpack.c.l.b16 %v151
    %v1083 = vunpack.c.h.b16 %v151
    %v1084 = vunpack.c.l.b16 %v152
    %v1085 = vunpack.c.l.b16 %v153
    %v1086 = vunpack.c.h.b16 %v153
    %v1087 = vunpack.c.l.b16 %v154
    %v1088 = vunpack.c.h.b16 %v154
    %v1089 = vunpack.c.l.b16 %v155
    %v1090 = vunpack.c.h.b16 %v155
    %v1091 = vunpack.c.l.b16 %v156
    %v1092 = vunpack.c.l.b16 %v157
    %v1093 = vunpack.c.h.b16 %v157
    %v1094 = vunpack.c.l.b16 %v158
    %v1095 = vunpack.c.h.b16 %v158
    %v1096 = vunpack.c.l.b16 %v159
    %v1097 = vunpack.c.h.b16 %v159
    %v1098 = vunpack.c.l.b16 %v160
    %v1099 = vunpack.c.l.b16 %v161
    %v1100 = vunpack.c.h.b16 %v161
    %v1101 = vunpack.c.l.b16 %v162
    %v1102 = vunpack.c.h.b16 %v162
    %v1103 = vunpack.c.l.b16 %v163
    %v1104 = vunpack.c.h.b16 %v163
    %v1105 = vunpack.c.l.b16 %v164
    %v1106 = vunpack.c.l.b16 %v165
    %v1107 = vunpack.c.h.b16 %v165
    %v1108 = vunpack.c.l.b16 %v166
    %v1109 = vunpack.c.h.b16 %v166
    %v1110 = vunpack.c.l.b16 %v167
    %v1111 = vunpack.c.h.b16 %v167
    %v1112 = vunpack.c.l.b16 %v168
    %v1113 = vunpack.c.l.b16 %v169
    %v1114 = vunpack.c.h.b16 %v169
    %v1115 = vunpack.c.l.b16 %v170
    %v1116 = vunpack.c.h.b16 %v170
    %v1117 = vunpack.c.l.b16 %v171
    %v1118 = vunpack.c.h.b16 %v171
    %v1119 = vunpack.c.l.b16 %v172
    %v1120 = vunpack.c.l.b16 %v173
    %v1121 = vunpack.c.h.b16 %v173
    %v1122 = vunpack.c.l.b16 %v174
    %v1123 = vunpack.c.h.b16 %v174
    %v1124 = vunpack.c.l.b16 %v175
    %v1125 = vunpack.c.h.b16 %v175
    %v1126 = vunpack.c.l.b16 %v176
    %v1127 = vunpack.c.l.b16 %v177
    %v1128 = vunpack.c.h.b16 %v177
    %v1129 = vunpack.c.l.b16 %v178
    %v1130 = vunpack.c.h.b16 %v178
    %v1131 = vunpack.c.l.b16 %v179
    %v1132 = vunpack.c.h.b16 %v179
    %v1133 = vunpack.c.l.b16 %v180
    %v1134 = vunpack.c.l.b16 %v181
    %v1135 = vunpack.c.h.b16 %v181
    %v1136 = vunpack.c.l.b16 %v182
    %v1137 = vunpack.c.h.b16 %v182
    %v1138 = vunpack.c.l.b16 %v183
    %v1139 = vunpack.c.h.b16 %v183
    %v1140 = vunpack.c.l.b16 %v184
    %v1141 = vunpack.c.l.b16 %v185
    %v1142 = vunpack.c.h.b16 %v185
    %v1143 = vunpack.c.l.b16 %v186
    %v1144 = vunpack.c.h.b16 %v186
    %v1145 = vunpack.c.l.b16 %v187
    %v1146 = vunpack.c.h.b16 %v187
    %v1147 = vunpack.c.l.b16 %v188
    %v1148 = vunpack.c.l.b16 %v189
    %v1149 = vunpack.c.h.b16 %v189
    %v1150 = vunpack.c.l.b16 %v190
    %v1151 = vunpack.c.h.b16 %v190
    %v1152 = vunpack.c.l.b16 %v191
    %v1153 = vunpack.c.h.b16 %v191
    %v1154 = vunpack.c.l.b16 %v192
    %v1155 = vunpack.c.l.b16 %v193
    %v1156 = vunpack.c.h.b16 %v193
    %v1157 = vunpack.c.l.b16 %v194
    %v1158 = vunpack.c.h.b16 %v194
    %v1159 = vunpack.c.l.b16 %v195
    %v1160 = vunpack.c.h.b16 %v195
    %v1161 = vunpack.c.l.b16 %v196
    %v1162 = vunpack.c.l.b16 %v197
    %v1163 = vunpack.c.h.b16 %v197
    %v1164 = vunpack.c.l.b16 %v198
    %v1165 = vunpack.c.h.b16 %v198
    %v1166 = vunpack.c.l.b16 %v199
    %v1167 = vunpack.c.h.b16 %v199
    %v1168 = vunpack.c.l.b16 %v200
    %v1169 = vunpack.c.l.b16 %v201
    %v1170 = vunpack.c.h.b16 %v201
    %v1171 = vunpack.c.l.b16 %v202
    %v1172 = vunpack.c.h.b16 %v202
    %v1173 = vunpack.c.l.b16 %v203
    %v1174 = vunpack.c.h.b16 %v203
    %v1175 = vunpack.c.l.b16 %v204
    %v1176 = vunpack.c.l.b16 %v205
    %v1177 = vunpack.c.h.b16 %v205
    %v1178 = vunpack.c.l.b16 %v206
    %v1179 = vunpack.c.h.b16 %v206
    %v1180 = vunpack.c.l.b16 %v207
    %v1181 = vunpack.c.h.b16 %v207
    %v1182 = vunpack.c.l.b16 %v208
    %v1183 = vunpack.c.l.b16 %v209
    %v1184 = vunpack.c.h.b16 %v209
    %v1185 = vunpack.c.l.b16 %v210
    %v1186 = vunpack.c.h.b16 %v210
    %v1187 = vunpack.c.l.b16 %v211
    %v1188 = vunpack.c.h.b16 %v211
    %v1189 = vunpack.c.l.b16 %v212
    %v1190 = vunpack.c.l.b16 %v213
    %v1191 = vunpack.c.h.b16 %v213
    %v1192 = vunpack.c.l.b16 %v214
    %v1193 = vunpack.c.h.b16 %v214
    %v1194 = vunpack.c.l.b16 %v215
    %v1195 = vunpack.c.h.b16 %v215
    %v1196 = vunpack.c.l.b16 %v216
    %v1197 = vunpack.c.l.b16 %v217
    %v1198 = vunpack.c.h.b16 %v217
    %v1199 = vunpack.c.l.b16 %v218
    %v1200 = vunpack.c.h.b16 %v218
    %v1201 = vunpack.c.l.b16 %v219
    %v1202 = vunpack.c.h.b16 %v219
    %v1203 = vunpack.c.l.b16 %v220
    %v1204 = vunpack.c.l.b16 %v221
    %v1205 = vunpack.c.h.b16 %v221
    %v1206 = vunpack.c.l.b16 %v222
    %v1207 = vunpack.c.h.b16 %v222
    %v1208 = vunpack.c.l.b16 %v223
    %v1209 = vunpack.c.h.b16 %v223
    %v1210 = vunpack.c.l.b16 %v224
    %v1211 = vunpack.c.l.b16 %v225
    %v1212 = vunpack.c.h.b16 %v225
    %v1213 = vunpack.c.l.b16 %v226
    %v1214 = vunpack.c.h.b16 %v226
    %v1215 = vunpack.c.l.b16 %v227
    %v1216 = vunpack.c.h.b16 %v227
    %v1217 = vunpack.c.l.b16 %v228
    %v1218 = vunpack.c.l.b16 %v229
    %v1219 = vunpack.c.h.b16 %v229
    %v1220 = vunpack.c.l.b16 %v230
    %v1221 = vunpack.c.h.b16 %v230
    %v1222 = vunpack.c.l.b16 %v231
    %v1223 = vunpack.c.h.b16 %v231
    %v1224 = vunpack.c.l.b16 %v232
    %v1225 = vunpack.c.l.b16 %v233
    %v1226 = vunpack.c.h.b16 %v233
    %v1227 = vunpack.c.l.b16 %v234
    %v1228 = vunpack.c.h.b16 %v234
    %v1229 = vunpack.c.l.b16 %v235
    %v1230 = vunpack.c.h.b16 %v235
    %v1231 = vunpack.c.l.b16 %v236
    %v1232 = vunpack.c.l.b16 %v237
    %v1233 = vunpack.c.h.b16 %v237
    %v1234 = vunpack.c.l.b16 %v238
    %v1235 = vunpack.c.h.b16 %v238
    %v1236 = vunpack.c.l.b16 %v239
    %v1237 = vunpack.c.h.b16 %v239
    %v1238 = vunpack.c.l.b16 %v240
    %v1239 = vunpack.c.l.b16 %v241
    %v1240 = vunpack.c.h.b16 %v241
    %v1241 = vunpack.c.l.b16 %v242
    %v1242 = vunpack.c.h.b16 %v242
    %v1243 = vunpack.c.l.b16 %v243
    %v1244 = vunpack.c.h.b16 %v243
    %v1245 = vunpack.c.l.b16 %v244
    %v1246 = vunpack.c.l.b16 %v245
    %v1247 = vunpack.c.h.b16 %v245
    %v1248 = vunpack.c.l.b16 %v246
    %v1249 = vunpack.c.h.b16 %v246
    %v1250 = vunpack.c.l.b16 %v247
    %v1251 = vunpack.c.h.b16 %v247
    %v1252 = vunpack.c.l.b16 %v248
    %v1253 = vunpack.c.l.b16 %v249
    %v1254 = vunpack.c.h.b16 %v249
    %v1255 = vunpack.c.l.b16 %v250
    %v1256 = vunpack.c.h.b16 %v250
    %v1257 = vunpack.c.l.b16 %v251
    %v1258 = vunpack.c.h.b16 %v251
    %v1259 = vunpack.c.l.b16 %v252
    %v1260 = vunpack.c.l.b16 %v253
    %v1261 = vunpack.c.h.b16 %v253
    %v1262 = vunpack.c.l.b16 %v254
    %v1263 = vunpack.c.h.b16 %v254
    %v1264 = vunpack.c.l.b16 %v255
    %v1265 = vunpack.c.h.b16 %v255
    %v1266 = vunpack.c.l.b16 %v256
    %v1267 = vunpack.c.l.b16 %v257
    %v1268 = vunpack.c.h.b16 %v257
    %v1269 = vunpack.c.l.b16 %v258
    %v1270 = vunpack.c.h.b16 %v258
    %v1271 = vunpack.c.l.b16 %v259
    %v1272 = vunpack.c.h.b16 %v259
    %v1273 = vunpack.c.l.b16 %v260
    %v1274 = vunpack.c.l.b16 %v261
    %v1275 = vunpack.c.h.b16 %v261
    %v1276 = vunpack.c.l.b16 %v262
    %v1277 = vunpack.c.h.b16 %v262
    %v1278 = vunpack.c.l.b16 %v263
    %v1279 = vunpack.c.h.b16 %v263
    %v1280 = vunpack.c.l.b16 %v264
    %v1281 = vunpack.c.l.b16 %v265
    %v1282 = vunpack.c.h.b16 %v265
    %v1283 = vunpack.c.l.b16 %v266
    %v1284 = vunpack.c.h.b16 %v266
    %v1285 = vunpack.c.l.b16 %v267
    %v1286 = vunpack.c.h.b16 %v267
    %v1287 = vunpack.c.l.b16 %v268
    %v1288 = vunpack.c.l.b16 %v269
    %v1289 = vunpack.c.h.b16 %v269
    %v1290 = vunpack.c.l.b16 %v270
    %v1291 = vunpack.c.h.b16 %v270
    %v1292 = vunpack.c.l.b16 %v271
    %v1293 = vunpack.c.h.b16 %v271
    %v1294 = vunpack.c.l.b16 %v272
    %v1295 = vunpack.c.l.b16 %v273
    %v1296 = vunpack.c.h.b16 %v273
    %v1297 = vunpack.c.l.b16 %v274
    %v1298 = vunpack.c.h.b16 %v274
    %v1299 = vunpack.c.l.b16 %v275
    %v1300 = vunpack.c.h.b16 %v275
    %v1301 = vunpack.c.l.b16 %v276
    %v1302 = vunpack.c.l.b16 %v277
    %v1303 = vunpack.c.h.b16 %v277
    %v1304 = vunpack.c.l.b16 %v278
    %v1305 = vunpack.c.h.b16 %v278
    %v1306 = vunpack.c.l.b16 %v279
    %v1307 = vunpack.c.h.b16 %v279
    %v1308 = vunpack.c.l.b16 %v280
    %v1309 = vunpack.c.l.b16 %v281
    %v1310 = vunpack.c.h.b16 %v281
    %v1311 = vunpack.c.l.b16 %v282
    %v1312 = vunpack.c.h.b16 %v282
    %v1313 = vunpack.c.l.b16 %v283
    %v1314 = vunpack.c.h.b16 %v283
    %v1315 = vunpack.c.l.b16 %v284
    %v1316 = vunpack.c.l.b16 %v285
    %v1317 = vunpack.c.h.b16 %v285
    %v1318 = vunpack.c.l.b16 %v286
    %v1319 = vunpack.c.h.b16 %v286
    %v1320 = vunpack.c.l.b16 %v287
    %v1321 = vunpack.c.h.b16 %v287
    %v1322 = vunpack.c.l.b16 %v288
    %v1323 = vunpack.c.l.b16 %v289
    %v1324 = vunpack.c.h.b16 %v289
    %v1325 = vunpack.c.l.b16 %v290
    %v1326 = vunpack.c.h.b16 %v290
    %v1327 = vunpack.c.l.b16 %v291
    %v1328 = vunpack.c.h.b16 %v291
    %v1329 = vunpack.c.l.b16 %v292
    %v1330 = vunpack.c.l.b16 %v293
    %v1331 = vunpack.c.h.b16 %v293
    %v1332 = vunpack.c.l.b16 %v294
    %v1333 = vunpack.c.h.b16 %v294
    %v1334 = vunpack.c.l.b16 %v295
    %v1335 = vunpack.c.h.b16 %v295
    %v1336 = vunpack.c.l.b16 %v296
    %v1337 = vunpack.c.l.b16 %v297
    %v1338 = vunpack.c.h.b16 %v297
    %v1339 = vunpack.c.l.b16 %v298
    %v1340 = vunpack.c.h.b16 %v298
    %v1341 = vunpack.c.l.b16 %v299
    %v1342 = vunpack.c.h.b16 %v299
    %v1343 = vunpack.c.l.b16 %v300
    %v1344 = vunpack.c.l.b16 %v301
    %v1345 = vunpack.c.h.b16 %v301
    %v1346 = vunpack.c.l.b16 %v302
    %v1347 = vunpack.c.h.b16 %v302
    %v1348 = vunpack.c.l.b16 %v303
    %v1349 = vunpack.c.h.b16 %v303
    %v1350 = vunpack.c.l.b16 %v304
    %v1351 = vunpack.c.l.b16 %v305
    %v1352 = vunpack.c.h.b16 %v305
    %v1353 = vunpack.c.l.b16 %v306
    %v1354 = vunpack.c.h.b16 %v306
    %v1355 = vunpack.c.l.b16 %v307
    %v1356 = vunpack.c.h.b16 %v307
    %v1357 = vunpack.c.l.b16 %v308
    %v1358 = vunpack.c.l.b16 %v309
    %v1359 = vunpack.c.h.b16 %v309
    %v1360 = vunpack.c.l.b16 %v310
    %v1361 = vunpack.c.h.b16 %v310
    %v1362 = vunpack.c.l.b16 %v311
    %v1363 = vunpack.c.h.b16 %v311
    %v1364 = vunpack.c.l.b16 %v312
    %v1365 = vunpack.c.l.b16 %v313
    %v1366 = vunpack.c.h.b16 %v313
    %v1367 = vunpack.c.l.b16 %v314
    %v1368 = vunpack.c.h.b16 %v314
    %v1369 = vunpack.c.l.b16 %v315
    %v1370 = vunpack.c.h.b16 %v315
    %v1371 = vunpack.c.l.b16 %v316
    %v1372 = vunpack.c.l.b16 %v317
    %v1373 = vunpack.c.h.b16 %v317
    %v1374 = vunpack.c.l.b16 %v318
    %v1375 = vunpack.c.h.b16 %v318
    %v1376 = vunpack.c.l.b16 %v319
    %v1377 = vunpack.c.h.b16 %v319
    %v1378 = vunpack.c.l.b16 %v320
    %v1379 = vunpack.c.l.b16 %v321
    %v1380 = vunpack.c.h.b16 %v321
    %v1381 = vunpack.c.l.b16 %v322
    %v1382 = vunpack.c.h.b16 %v322
    %v1383 = vunpack.c.l.b16 %v323
    %v1384 = vunpack.c.h.b16 %v323
    %v1385 = vunpack.c.l.b16 %v324
    %v1386 = vunpack.c.l.b16 %v325
    %v1387 = vunpack.c.h.b16 %v325
    %v1388 = vunpack.c.l.b16 %v326
    %v1389 = vunpack.c.h.b16 %v326
    %v1390 = vunpack.c.l.b16 %v327
    %v1391 = vunpack.c.h.b16 %v327
    %v1392 = vunpack.c.l.b16 %v328
    %v1393 = vunpack.c.l.b16 %v329
    %v1394 = vunpack.c.h.b16 %v329
    %v1395 = vunpack.c.l.b16 %v330
    %v1396 = vunpack.c.h.b16 %v330
    %v1397 = vunpack.c.l.b16 %v331
    %v1398 = vunpack.c.h.b16 %v331
    %v1399 = vunpack.c.l.b16 %v332
    %v1400 = vunpack.c.l.b16 %v333
    %v1401 = vunpack.c.h.b16 %v333
    %v1402 = vunpack.c.l.b16 %v334
    %v1403 = vunpack.c.h.b16 %v334
    %v1404 = vunpack.c.l.b16 %v335
    %v1405 = vunpack.c.h.b16 %v335
    %v1406 = vunpack.c.l.b16 %v336
    %v1407 = vunpack.c.l.b16 %v337
    %v1408 = vunpack.c.h.b16 %v337
    %v1409 = vunpack.c.l.b16 %v338
    %v1410 = vunpack.c.h.b16 %v338
    %v1411 = vunpack.c.l.b16 %v339
    %v1412 = vunpack.c.h.b16 %v339
    %v1413 = vunpack.c.l.b16 %v340
    %v1414 = vunpack.c.l.b16 %v341
    %v1415 = vunpack.c.h.b16 %v341
    %v1416 = vunpack.c.l.b16 %v342
    %v1417 = vunpack.c.h.b16 %v342
    %v1418 = vunpack.c.l.b16 %v343
    %v1419 = vunpack.c.h.b16 %v343
    %v1420 = vunpack.c.l.b16 %v344
    %v1421 = vunpack.c.l.b16 %v345
    %v1422 = vunpack.c.h.b16 %v345
    %v1423 = vunpack.c.l.b16 %v346
    %v1424 = vunpack.c.h.b16 %v346
    %v1425 = vunpack.c.l.b16 %v347
    %v1426 = vunpack.c.h.b16 %v347
    %v1427 = vunpack.c.l.b16 %v348
    %v1428 = vunpack.c.l.b16 %v349
    %v1429 = vunpack.c.h.b16 %v349
    %v1430 = vunpack.c.l.b16 %v350
    %v1431 = vunpack.c.h.b16 %v350
    %v1432 = vunpack.c.l.b16 %v351
    %v1433 = vunpack.c.h.b16 %v351
    %v1434 = vunpack.c.l.b16 %v352
    %v1435 = vunpack.c.l.b16 %v353
    %v1436 = vunpack.c.h.b16 %v353
    %v1437 = vunpack.c.l.b16 %v354
    %v1438 = vunpack.c.h.b16 %v354
    %v1439 = vunpack.c.l.b16 %v355
    %v1440 = vunpack.c.h.b16 %v355
    %v1441 = vunpack.c.l.b16 %v356
    %v1442 = vunpack.c.l.b16 %v357
    %v1443 = vunpack.c.h.b16 %v357
    %v1444 = vunpack.c.l.b16 %v358
    %v1445 = vunpack.c.h.b16 %v358
    %v1446 = vunpack.c.l.b16 %v359
    %v1447 = vunpack.c.h.b16 %v359
    %v1448 = vunpack.c.l.b16 %v360
    %v1449 = vunpack.c.l.b16 %v361
    %v1450 = vunpack.c.h.b16 %v361
    %v1451 = vunpack.c.l.b16 %v362
    %v1452 = vunpack.c.h.b16 %v362
    %v1453 = vunpack.c.l.b16 %v363
    %v1454 = vunpack.c.h.b16 %v363
    %v1455 = vunpack.c.l.b16 %v364
    %v1456 = vunpack.c.l.b16 %v365
    %v1457 = vunpack.c.h.b16 %v365
    %v1458 = vunpack.c.l.b16 %v366
    %v1459 = vunpack.c.h.b16 %v366
    %v1460 = vunpack.c.l.b16 %v367
    %v1461 = vunpack.c.h.b16 %v367
    %v1462 = vunpack.c.l.b16 %v368
    %v1463 = vunpack.c.l.b16 %v369
    %v1464 = vunpack.c.h.b16 %v369
    %v1465 = vunpack.c.l.b16 %v370
    %v1466 = vunpack.c.h.b16 %v370
    %v1467 = vunpack.c.l.b16 %v371
    %v1468 = vunpack.c.h.b16 %v371
    %v1469 = vunpack.c.l.b16 %v372
    %v1470 = vunpack.c.l.b16 %v373
    %v1471 = vunpack.c.h.b16 %v373
    %v1472 = vunpack.c.l.b16 %v374
    %v1473 = vunpack.c.h.b16 %v374
    %v1474 = vunpack.c.l.b16 %v375
    %v1475 = vunpack.c.h.b16 %v375
    %v1476 = vunpack.c.l.b16 %v376
    %v1477 = vunpack.c.l.b16 %v377
    %v1478 = vunpack.c.h.b16 %v377
    %v1479 = vunpack.c.l.b16 %v378
    %v1480 = vunpack.c.h.b16 %v378
    %v1481 = vunpack.c.l.b16 %v379
    %v1482 = vunpack.c.h.b16 %v379
    %v1483 = vunpack.c.l.b16 %v380
    %v1484 = vunpack.c.l.b16 %v381
    %v1485 = vunpack.c.h.b16 %v381
    %v1486 = vunpack.c.l.b16 %v382
    %v1487 = vunpack.c.h.b16 %v382
    %v1488 = vunpack.c.l.b16 %v383
    %v1489 = vunpack.c.h.b16 %v383
    %v1490 = vunpack.c.l.b16 %v384
    %v1491 = vunpack.c.l.b16 %v385
    %v1492 = vunpack.c.h.b16 %v385
    %v1493 = vunpack.c.l.b16 %v386
    %v1494 = vunpack.c.h.b16 %v386
    %v1495 = vunpack.c.l.b16 %v387
    %v1496 = vunpack.c.h.b16 %v387
    %v1497 = vunpack.c.l.b16 %v388
    %v1498 = vunpack.c.l.b16 %v389
    %v1499 = vunpack.c.h.b16 %v389
    %v1500 = vunpack.c.l.b16 %v390
    %v1501 = vunpack.c.h.b16 %v390
    %v1502 = vunpack.c.l.b16 %v391
    %v1503 = vunpack.c.h.b16 %v391
    %v1504 = vunpack.c.l.b16 %v392
    %v1505 = vunpack.c.l.b16 %v393
    %v1506 = vunpack.c.h.b16 %v393
    %v1507 = vunpack.c.l.b16 %v394
    %v1508 = vunpack.c.h.b16 %v394
    %v1509 = vunpack.c.l.b16 %v395
    %v1510 = vunpack.c.h.b16 %v395
    %v1511 = vunpack.c.l.b16 %v396
    %v1512 = vunpack.c.l.b16 %v397
    %v1513 = vunpack.c.h.b16 %v397
    %v1514 = vunpack.c.l.b16 %v398
    %v1515 = vunpack.c.h.b16 %v398
    %v1516 = vunpack.c.l.b16 %v399
    %v1517 = vunpack.c.h.b16 %v399
    %v1518 = vunpack.c.l.b16 %v400
    %v1519 = vunpack.c.l.b16 %v401
    %v1520 = vunpack.c.h.b16 %v401
    %v1521 = vunpack.c.l.b16 %v402
    %v1522 = vunpack.c.h.b16 %v402
    %v1523 = vunpack.c.l.b16 %v403
    %v1524 = vunpack.c.h.b16 %v403
    %v1525 = vunpack.c.l.b16 %v404
    %v1526 = vunpack.c.l.b16 %v405
    %v1527 = vunpack.c.h.b16 %v405
    %v1528 = vunpack.c.l.b16 %v406
    %v1529 = vunpack.c.h.b16 %v406
    %v1530 = vunpack.c.l.b16 %v407
    %v1531 = vunpack.c.h.b16 %v407
    %v1532 = vunpack.c.l.b16 %v408
    %v1533 = vunpack.c.l.b16 %v409
    %v1534 = vunpack.c.h.b16 %v409
    %v1535 = vunpack.c.l.b16 %v410
    %v1536 = vunpack.c.h.b16 %v410
    %v1537 = vunpack.c.l.b16 %v411
    %v1538 = vunpack.c.h.b16 %v411
    %v1539 = vunpack.c.l.b16 %v412
    %v1540 = vunpack.c.l.b16 %v413
    %v1541 = vunpack.c.h.b16 %v413
    %v1542 = vunpack.c.l.b16 %v414
    %v1543 = vunpack.c.h.b16 %v414
    %v1544 = vunpack.c.l.b16 %v415
    %v1545 = vunpack.c.h.b16 %v415
    %v1546 = vunpack.c.l.b16 %v416
    %v1547 = vunpack.c.l.b16 %v417
    %v1548 = vunpack.c.h.b16 %v417
    %v1549 = vunpack.c.l.b16 %v418
    %v1550 = vunpack.c.h.b16 %v418
    %v1551 = vunpack.c.l.b16 %v419
    %v1552 = vunpack.c.h.b16 %v419
    %v1553 = vunpack.c.l.b16 %v420
    %v1554 = vunpack.c.l.b16 %v421
    %v1555 = vunpack.c.h.b16 %v421
    %v1556 = vunpack.c.l.b16 %v422
    %v1557 = vunpack.c.h.b16 %v422
    %v1558 = vunpack.c.l.b16 %v423
    %v1559 = vunpack.c.h.b16 %v423
    %v1560 = vunpack.c.l.b16 %v424
    %v1561 = vunpack.c.l.b16 %v425
    %v1562 = vunpack.c.h.b16 %v425
    %v1563 = vunpack.c.l.b16 %v426
    %v1564 = vunpack.c.h.b16 %v426
    %v1565 = vunpack.c.l.b16 %v427
    %v1566 = vunpack.c.h.b16 %v427
    %v1567 = vunpack.c.l.b16 %v428
    %v1568 = vunpack.c.l.b16 %v429
    %v1569 = vunpack.c.h.b16 %v429
    %v1570 = vunpack.c.l.b16 %v430
    %v1571 = vunpack.c.h.b16 %v430
    %v1572 = vunpack.c.l.b16 %v431
    %v1573 = vunpack.c.h.b16 %v431
    %v1574 = vunpack.c.l.b16 %v432
    %v1575 = vunpack.c.l.b16 %v433
    %v1576 = vunpack.c.h.b16 %v433
    %v1577 = vunpack.c.l.b16 %v434
    %v1578 = vunpack.c.h.b16 %v434
    %v1579 = vunpack.c.l.b16 %v435
    %v1580 = vunpack.c.h.b16 %v435
    %v1581 = vunpack.c.l.b16 %v436
    %v1582 = vunpack.c.l.b16 %v437
    %v1583 = vunpack.c.h.b16 %v437
    %v1584 = vunpack.c.l.b16 %v438
    %v1585 = vunpack.c.h.b16 %v438
    %v1586 = vunpack.c.l.b16 %v439
    %v1587 = vunpack.c.h.b16 %v439
    %v1588 = vunpack.c.l.b16 %v440
    %v1589 = vunpack.c.l.b16 %v441
    %v1590 = vunpack.c.h.b16 %v441
    %v1591 = vunpack.c.l.b16 %v442
    %v1592 = vunpack.c.h.b16 %v442
    %v1593 = vunpack.c.l.b16 %v443
    %v1594 = vunpack.c.h.b16 %v443
    %v1595 = vunpack.c.l.b16 %v444
    %v1596 = vunpack.c.l.b16 %v445
    %v1597 = vunpack.c.h.b16 %v445
    %v1598 = vunpack.c.l.b16 %v446
    %v1599 = vunpack.c.h.b16 %v446
    %v1600 = vunpack.c.l.b16 %v447
    %v1601 = vunpack.c.h.b16 %v447
    %v1602 = vunpack.c.l.b16 %v448
    %v1603 = vunpack.c.l.b16 %v449
    %v1604 = vunpack.c.h.b16 %v449
    %v1605 = vunpack.c.l.b16 %v450
    %v1606 = vunpack.c.h.b16 %v450
    %v1607 = vunpack.c.l.b16 %v451
    %v1608 = vunpack.c.h.b16 %v451
    %v1609 = vunpack.c.l.b16 %v452
    %v1610 = vunpack.c.l.b16 %v453
    %v1611 = vunpack.c.h.b16 %v453
    %v1612 = vunpack.c.l.b16 %v454
    %v1613 = vunpack.c.h.b16 %v454
    %v1614 = vunpack.c.l.b16 %v455
    %v1615 = vunpack.c.h.b16 %v455
    %v1616 = vunpack.c.l.b16 %v456
    %v1617 = vunpack.c.l.b16 %v457
    %v1618 = vunpack.c.h.b16 %v457
    %v1619 = vunpack.c.l.b16 %v458
    %v1620 = vunpack.c.h.b16 %v458
    %v1621 = vunpack.c.l.b16 %v459
    %v1622 = vunpack.c.h.b16 %v459
    %v1623 = vunpack.c.l.b16 %v460
    %v1624 = vunpack.c.l.b16 %v461
    %v1625 = vunpack.c.h.b16 %v461
    %v1626 = vunpack.c.l.b16 %v462
    %v1627 = vunpack.c.h.b16 %v462
    %v1628 = vunpack.c.l.b16 %v463
    %v1629 = vunpack.c.h.b16 %v463
    %v1630 = vunpack.c.l.b16 %v464
    %v1631 = vunpack.c.l.b16 %v465
    %v1632 = vunpack.c.h.b16 %v465
    %v1633 = vunpack.c.l.b16 %v466
    %v1634 = vunpack.c.h.b16 %v466
    %v1635 = vunpack.c.l.b16 %v467
    %v1636 = vunpack.c.h.b16 %v467
    %v1637 = vunpack.c.l.b16 %v468
    %v1638 = vunpack.c.l.b16 %v469
    %v1639 = vunpack.c.h.b16 %v469
    %v1640 = vunpack.c.l.b16 %v470
    %v1641 = vunpack.c.h.b16 %v470
    %v1642 = vunpack.c.l.b16 %v471
    %v1643 = vunpack.c.h.b16 %v471
    %v1644 = vunpack.c.l.b16 %v472
    %v1645 = vunpack.c.l.b16 %v473
    %v1646 = vunpack.c.h.b16 %v473
    %v1647 = vunpack.c.l.b16 %v474
    %v1648 = vunpack.c.h.b16 %v474
    %v1649 = vunpack.c.l.b16 %v475
    %v1650 = vunpack.c.h.b16 %v475
    %v1651 = vunpack.c.l.b16 %v476
    %v1652 = vunpack.c.l.b16 %v477
    %v1653 = vunpack.c.h.b16 %v477
    %v1654 = vunpack.c.l.b16 %v478
    %v1655 = vunpack.c.h.b16 %v478
    %v1656 = vunpack.c.l.b16 %v479
    %v1657 = vunpack.c.h.b16 %v479
    %v1658 = vunpack.c.l.b16 %v480
    %v1659 = vunpack.c.l.b16 %v481
    %v1660 = vunpack.c.h.b16 %v481
    %v1661 = vunpack.c.l.b16 %v482
    %v1662 = vunpack.c.h.b16 %v482
    %v1663 = vunpack.c.l.b16 %v483
    %v1664 = vunpack.c.h.b16 %v483
    %v1665 = vunpack.c.l.b16 %v484
    %v1666 = vpack.c.b16 %v945, %v938
    %v1667 = vpack.c.b16 %v946, %v939
    %v1668 = vpack.c.b16 %v947, %v940
    %v1669 = vpack.c.b16 %v948, %v941
    %v1670 = vpack.c.b16 %v949, %v942
    %v1671 = vpack.c.b16 %v950, %v943
    %v1672 = vpack.c.b16 %v951, %v944
    %v1673 = vpack.c.b16 %v959, %v952
    %v1674 = vpack.c.b16 %v960, %v953
    %v1675 = vpack.c.b16 %v961, %v954
    %v1676 = vpack.c.b16 %v962, %v955
    %v1677 = vpack.c.b16 %v963, %v956
    %v1678 = vpack.c.b16 %v964, %v957
    %v1679 = vpack.c.b16 %v965, %v958
    %v1680 = vpack.c.b16 %v973, %v966
    %v1681 = vpack.c.b16 %v974, %v967
    %v1682 = vpack.c.b16 %v975, %v968
    %v1683 = vpack.c.b16 %v976, %v969
    %v1684 = vpack.c.b16 %v977, %v970
    %v1685 = vpack.c.b16 %v978, %v971
    %v1686 = vpack.c.b16 %v979, %v972
    %v1687 = vpack.c.b16 %v987, %v980
    %v1688 = vpack.c.b16 %v988, %v981
    %v1689 = vpack.c.b16 %v989, %v982
    %v1690 = vpack.c.b16 %v990, %v983
    %v1691 = vpack.c.b16 %v991, %v984
    %v1692 = vpack.c.b16 %v992, %v985
    %v1693 = vpack.c.b16 %v993, %v986
    %v1694 = vpack.c.b16 %v1001, %v994
    %v1695 = vpack.c.b16 %v1002, %v995
    %v1696 = vpack.c.b16 %v1003, %v996
    %v1697 = vpack.c.b16 %v1004, %v997
    %v1698 = vpack.c.b16 %v1005, %v998
    %v1699 = vpack.c.b16 %v1006, %v999
    %v1700 = vpack.c.b16 %v1007, %v1000
    %v1701 = vpack.c.b16 %v1015, %v1008
    %v1702 = vpack.c.b16 %v1016, %v1009
    %v1703 = vpack.c.b16 %v1017, %v1010
    %v1704 = vpack.c.b16 %v1018, %v1011
    %v1705 = vpack.c.b16 %v1019, %v1012
    %v1706 = vpack.c.b16 %v1020, %v1013
    %v1707 = vpack.c.b16 %v1021, %v1014
    %v1708 = vpack.c.b16 %v1029, %v1022
    %v1709 = vpack.c.b16 %v1030, %v1023
    %v1710 = vpack.c.b16 %v1031, %v1024
    %v1711 = vpack.c.b16 %v1032, %v1025
    %v1712 = vpack.c.b16 %v1033, %v1026
    %v1713 = vpack.c.b16 %v1034, %v1027
    %v1714 = vpack.c.b16 %v1035, %v1028
    %v1715 = vpack.c.b16 %v1043, %v1036
    %v1716 = vpack.c.b16 %v1044, %v1037
    %v1717 = vpack.c.b16 %v1045, %v1038
    %v1718 = vpack.c.b16 %v1046, %v1039
    %v1719 = vpack.c.b16 %v1047, %v1040
    %v1720 = vpack.c.b16 %v1048, %v1041
    %v1721 = vpack.c.b16 %v1049, %v1042
    %v1722 = vpack.c.b16 %v1057, %v1050
    %v1723 = vpack.c.b16 %v1058, %v1051
    %v1724 = vpack.c.b16 %v1059, %v1052
    %v1725 = vpack.c.b16 %v1060, %v1053
    %v1726 = vpack.c.b16 %v1061, %v1054
    %v1727 = vpack.c.b16 %v1062, %v1055
    %v1728 = vpack.c.b16 %v1063, %v1056
    %v1729 = vpack.c.b16 %v1071, %v1064
    %v1730 = vpack.c.b16 %v1072, %v1065
    %v1731 = vpack.c.b16 %v1073, %v1066
    %v1732 = vpack.c.b16 %v1074, %v1067
    %v1733 = vpack.c.b16 %v1075, %v1068
    %v1734 = vpack.c.b16 %v1076, %v1069
    %v1735 = vpack.c.b16 %v1077, %v1070
    %v1736 = vpack.c.b16 %v1085, %v1078
    %v1737 = vpack.c.b16 %v1086, %v1079
    %v1738 = vpack.c.b16 %v1087, %v1080
    %v1739 = vpack.c.b16 %v1088, %v1081
    %v1740 = vpack.c.b16 %v1089, %v1082
    %v1741 = vpack.c.b16 %v1090, %v1083
    %v1742 = vpack.c.b16 %v1091, %v1084
    %v1743 = vpack.c.b16 %v1099, %v1092
    %v1744 = vpack.c.b16 %v1100, %v1093
    %v1745 = vpack.c.b16 %v1101, %v1094
    %v1746 = vpack.c.b16 %v1102, %v1095
    %v1747 = vpack.c.b16 %v1103, %v1096
    %v1748 = vpack.c.b16 %v1104, %v1097
    %v1749 = vpack.c.b16 %v1105, %v1098
    %v1750 = vpack.c.b16 %v1113, %v1106
    %v1751 = vpack.c.b16 %v1114, %v1107
    %v1752 = vpack.c.b16 %v1115, %v1108
    %v1753 = vpack.c.b16 %v1116, %v1109
    %v1754 = vpack.c.b16 %v1117, %v1110
    %v1755 = vpack.c.b16 %v1118, %v1111
    %v1756 = vpack.c.b16 %v1119, %v1112
    %v1757 = vpack.c.b16 %v1127, %v1120
    %v1758 = vpack.c.b16 %v1128, %v1121
    %v1759 = vpack.c.b16 %v1129, %v1122
    %v1760 = vpack.c.b16 %v1130, %v1123
    %v1761 = vpack.c.b16 %v1131, %v1124
    %v1762 = vpack.c.b16 %v1132, %v1125
    %v1763 = vpack.c.b16 %v1133, %v1126
    %v1764 = vpack.c.b16 %v1141, %v1134
    %v1765 = vpack.c.b16 %v1142, %v1135
    %v1766 = vpack.c.b16 %v1143, %v1136
    %v1767 = vpack.c.b16 %v1144, %v1137
    %v1768 = vpack.c.b16 %v1145, %v1138
    %v1769 = vpack.c.b16 %v1146, %v1139
    %v1770 = vpack.c.b16 %v1147, %v1140
    %v1771 = vpack.c.b16 %v1155, %v1148
    %v1772 = vpack.c.b16 %v1156, %v1149
    %v1773 = vpack.c.b16 %v1157, %v1150
    %v1774 = vpack.c.b16 %v1158, %v1151
    %v1775 = vpack.c.b16 %v1159, %v1152
    %v1776 = vpack.c.b16 %v1160, %v1153
    %v1777 = vpack.c.b16 %v1161, %v1154
    %v1778 = vpack.c.b16 %v1169, %v1162
    %v1779 = vpack.c.b16 %v1170, %v1163
    %v1780 = vpack.c.b16 %v1171, %v1164
    %v1781 = vpack.c.b16 %v1172, %v1165
    %v1782 = vpack.c.b16 %v1173, %v1166
    %v1783 = vpack.c.b16 %v1174, %v1167
    %v1784 = vpack.c.b16 %v1175, %v1168
    %v1785 = vpack.c.b16 %v1183, %v1176
    %v1786 = vpack.c.b16 %v1184, %v1177
    %v1787 = vpack.c.b16 %v1185, %v1178
    %v1788 = vpack.c.b16 %v1186, %v1179
    %v1789 = vpack.c.b16 %v1187, %v1180
    %v1790 = vpack.c.b16 %v1188, %v1181
    %v1791 = vpack.c.b16 %v1189, %v1182
    %v1792 = vpack.c.b16 %v1197, %v1190
    %v1793 = vpack.c.b16 %v1198, %v1191
    %v1794 = vpack.c.b16 %v1199, %v1192
    %v1795 = vpack.c.b16 %v1200, %v1193
    %v1796 = vpack.c.b16 %v1201, %v1194
    %v1797 = vpack.c.b16 %v1202, %v1195
    %v1798 = vpack.c.b16 %v1203, %v1196
    %v1799 = vpack.c.b16 %v1211, %v1204
    %v1800 = vpack.c.b16 %v1212, %v1205
    %v1801 = vpack.c.b16 %v1213, %v1206
    %v1802 = vpack.c.b16 %v1214, %v1207
    %v1803 = vpack.c.b16 %v1215, %v1208
    %v1804 = vpack.c.b16 %v1216, %v1209
    %v1805 = vpack.c.b16 %v1217, %v1210
    %v1806 = vpack.c.b16 %v1225, %v1218
    %v1807 = vpack.c.b16 %v1226, %v1219
    %v1808 = vpack.c.b16 %v1227, %v1220
    %v1809 = vpack.c.b16 %v1228, %v1221
    %v1810 = vpack.c.b16 %v1229, %v1222
    %v1811 = vpack.c.b16 %v1230, %v1223
    %v1812 = vpack.c.b16 %v1231, %v1224
    %v1813 = vpack.c.b16 %v1239, %v1232
    %v1814 = vpack.c.b16 %v1240, %v1233
    %v1815 = vpack.c.b16 %v1241, %v1234
    %v1816 = vpack.c.b16 %v1242, %v1235
    %v1817 = vpack.c.b16 %v1243, %v1236
    %v1818 = vpack.c.b16 %v1244, %v1237
    %v1819 = vpack.c.b16 %v1245, %v1238
    %v1820 = vpack.c.b16 %v1253, %v1246
    %v1821 = vpack.c.b16 %v1254, %v1247
    %v1822 = vpack.c.b16 %v1255, %v1248
    %v1823 = vpack.c.b16 %v1256, %v1249
    %v1824 = vpack.c.b16 %v1257, %v1250
    %v1825 = vpack.c.b16 %v1258, %v1251
    %v1826 = vpack.c.b16 %v1259, %v1252
    %v1827 = vpack.c.b16 %v1267, %v1260
    %v1828 = vpack.c.b16 %v1268, %v1261
    %v1829 = vpack.c.b16 %v1269, %v1262
    %v1830 = vpack.c.b16 %v1270, %v1263
    %v1831 = vpack.c.b16 %v1271, %v1264
    %v1832 = vpack.c.b16 %v1272, %v1265
    %v1833 = vpack.c.b16 %v1273, %v1266
    %v1834 = vpack.c.b16 %v1281, %v1274
    %v1835 = vpack.c.b16 %v1282, %v1275
    %v1836 = vpack.c.b16 %v1283, %v1276
    %v1837 = vpack.c.b16 %v1284, %v1277
    %v1838 = vpack.c.b16 %v1285, %v1278
    %v1839 = vpack.c.b16 %v1286, %v1279
    %v1840 = vpack.c.b16 %v1287, %v1280
    %v1841 = vpack.c.b16 %v1295, %v1288
    %v1842 = vpack.c.b16 %v1296, %v1289
    %v1843 = vpack.c.b16 %v1297, %v1290
    %v1844 = vpack.c.b16 %v1298, %v1291
    %v1845 = vpack.c.b16 %v1299, %v1292
    %v1846 = vpack.c.b16 %v1300, %v1293
    %v1847 = vpack.c.b16 %v1301, %v1294
    %v1848 = vpack.c.b16 %v1309, %v1302
    %v1849 = vpack.c.b16 %v1310, %v1303
    %v1850 = vpack.c.b16 %v1311, %v1304
    %v1851 = vpack.c.b16 %v1312, %v1305
    %v1852 = vpack.c.b16 %v1313, %v1306
    %v1853 = vpack.c.b16 %v1314, %v1307
    %v1854 = vpack.c.b16 %v1315, %v1308
    %v1855 = vpack.c.b16 %v1323, %v1316
    %v1856 = vpack.c.b16 %v1324, %v1317
    %v1857 = vpack.c.b16 %v1325, %v1318
    %v1858 = vpack.c.b16 %v1326, %v1319
    %v1859 = vpack.c.b16 %v1327, %v1320
    %v1860 = vpack.c.b16 %v1328, %v1321
    %v1861 = vpack.c.b16 %v1329, %v1322
    %v1862 = vpack.c.b16 %v1337, %v1330
    %v1863 = vpack.c.b16 %v1338, %v1331
    %v1864 = vpack.c.b16 %v1339, %v1332
    %v1865 = vpack.c.b16 %v1340, %v1333
    %v1866 = vpack.c.b16 %v1341, %v1334
    %v1867 = vpack.c.b16 %v1342, %v1335
    %v1868 = vpack.c.b16 %v1343, %v1336
    %v1869 = vpack.c.b16 %v1351, %v1344
    %v1870 = vpack.c.b16 %v1352, %v1345
    %v1871 = vpack.c.b16 %v1353, %v1346
    %v1872 = vpack.c.b16 %v1354, %v1347
    %v1873 = vpack.c.b16 %v1355, %v1348
    %v1874 = vpack.c.b16 %v1356, %v1349
    %v1875 = vpack.c.b16 %v1357, %v1350
    %v1876 = vpack.c.b16 %v1365, %v1358
    %v1877 = vpack.c.b16 %v1366, %v1359
    %v1878 = vpack.c.b16 %v1367, %v1360
    %v1879 = vpack.c.b16 %v1368, %v1361
    %v1880 = vpack.c.b16 %v1369, %v1362
    %v1881 = vpack.c.b16 %v1370, %v1363
    %v1882 = vpack.c.b16 %v1371, %v1364
    %v1883 = vpack.c.b16 %v1379, %v1372
    %v1884 = vpack.c.b16 %v1380, %v1373
    %v1885 = vpack.c.b16 %v1381, %v1374
    %v1886 = vpack.c.b16 %v1382, %v1375
    %v1887 = vpack.c.b16 %v1383, %v1376
    %v1888 = vpack.c.b16 %v1384, %v1377
    %v1889 = vpack.c.b16 %v1385, %v1378
    %v1890 = vpack.c.b16 %v1393, %v1386
    %v1891 = vpack.c.b16 %v1394, %v1387
    %v1892 = vpack.c.b16 %v1395, %v1388
    %v1893 = vpack.c.b16 %v1396, %v1389
    %v1894 = vpack.c.b16 %v1397, %v1390
    %v1895 = vpack.c.b16 %v1398, %v1391
    %v1896 = vpack.c.b16 %v1399, %v1392
    %v1897 = vpack.c.b16 %v1407, %v1400
    %v1898 = vpack.c.b16 %v1408, %v1401
    %v1899 = vpack.c.b16 %v1409, %v1402
    %v1900 = vpack.c.b16 %v1410, %v1403
    %v1901 = vpack.c.b16 %v1411, %v1404
    %v1902 = vpack.c.b16 %v1412, %v1405
    %v1903 = vpack.c.b16 %v1413, %v1406
    %v1904 = vpack.c.b16 %v1421, %v1414
    %v1905 = vpack.c.b16 %v1422, %v1415
    %v1906 = vpack.c.b16 %v1423, %v1416
    %v1907 = vpack.c.b16 %v1424, %v1417
    %v1908 = vpack.c.b16 %v1425, %v1418
    %v1909 = vpack.c.b16 %v1426, %v1419
    %v1910 = vpack.c.b16 %v1427, %v1420
    %v1911 = vpack.c.b16 %v1435, %v1428
    %v1912 = vpack.c.b16 %v1436, %v1429
    %v1913 = vpack.c.b16 %v1437, %v1430
    %v1914 = vpack.c.b16 %v1438, %v1431
    %v1915 = vpack.c.b16 %v1439, %v1432
    %v1916 = vpack.c.b16 %v1440, %v1433
    %v1917 = vpack.c.b16 %v1441, %v1434
    %v1918 = vpack.c.b16 %v1449, %v1442
    %v1919 = vpack.c.b16 %v1450, %v1443
    %v1920 = vpack.c.b16 %v1451, %v1444
    %v1921 = vpack.c.b16 %v1452, %v1445
    %v1922 = vpack.c.b16 %v1453, %v1446
    %v1923 = vpack.c.b16 %v1454, %v1447
    %v1924 = vpack.c.b16 %v1455, %v1448
    %v1925 = vpack.c.b16 %v1463, %v1456
    %v1926 = vpack.c.b16 %v1464, %v1457
    %v1927 = vpack.c.b16 %v1465, %v1458
    %v1928 = vpack.c.b16 %v1466, %v1459
    %v1929 = vpack.c.b16 %v1467, %v1460
    %v1930 = vpack.c.b16 %v1468, %v1461
    %v1931 = vpack.c.b16 %v1469, %v1462
    %v1932 = vpack.c.b16 %v1477, %v1470
    %v1933 = vpack.c.b16 %v1478, %v1471
    %v1934 = vpack.c.b16 %v1479, %v1472
    %v1935 = vpack.c.b16 %v1480, %v1473
    %v1936 = vpack.c.b16 %v1481, %v1474
    %v1937 = vpack.c.b16 %v1482, %v1475
    %v1938 = vpack.c.b16 %v1483, %v1476
    %v1939 = vpack.c.b16 %v1491, %v1484
    %v1940 = vpack.c.b16 %v1492, %v1485
    %v1941 = vpack.c.b16 %v1493, %v1486
    %v1942 = vpack.c.b16 %v1494, %v1487
    %v1943 = vpack.c.b16 %v1495, %v1488
    %v1944 = vpack.c.b16 %v1496, %v1489
    %v1945 = vpack.c.b16 %v1497, %v1490
    %v1946 = vpack.c.b16 %v1505, %v1498
    %v1947 = vpack.c.b16 %v1506, %v1499
    %v1948 = vpack.c.b16 %v1507, %v1500
    %v1949 = vpack.c.b16 %v1508, %v1501
    %v1950 = vpack.c.b16 %v1509, %v1502
    %v1951 = vpack.c.b16 %v1510, %v1503
    %v1952 = vpack.c.b16 %v1511, %v1504
    %v1953 = vpack.c.b16 %v1519, %v1512
    %v1954 = vpack.c.b16 %v1520, %v1513
    %v1955 = vpack.c.b16 %v1521, %v1514
    %v1956 = vpack.c.b16 %v1522, %v1515
    %v1957 = vpack.c.b16 %v1523, %v1516
    %v1958 = vpack.c.b16 %v1524, %v1517
    %v1959 = vpack.c.b16 %v1525, %v1518
    %v1960 = vpack.c.b16 %v1533, %v1526
    %v1961 = vpack.c.b16 %v1534, %v1527
    %v1962 = vpack.c.b16 %v1535, %v1528
    %v1963 = vpack.c.b16 %v1536, %v1529
    %v1964 = vpack.c.b16 %v1537, %v1530
    %v1965 = vpack.c.b16 %v1538, %v1531
    %v1966 = vpack.c.b16 %v1539, %v1532
    %v1967 = vpack.c.b16 %v1547, %v1540
    %v1968 = vpack.c.b16 %v1548, %v1541
    %v1969 = vpack.c.b16 %v1549, %v1542
    %v1970 = vpack.c.b16 %v1550, %v1543
    %v1971 = vpack.c.b16 %v1551, %v1544
    %v1972 = vpack.c.b16 %v1552, %v1545
    %v1973 = vpack.c.b16 %v1553, %v1546
    %v1974 = vpack.c.b16 %v1561, %v1554
    %v1975 = vpack.c.b16 %v1562, %v1555
    %v1976 = vpack.c.b16 %v1563, %v1556
    %v1977 = vpack.c.b16 %v1564, %v1557
    %v1978 = vpack.c.b16 %v1565, %v1558
    %v1979 = vpack.c.b16 %v1566, %v1559
    %v1980 = vpack.c.b16 %v1567, %v1560
    %v1981 = vpack.c.b16 %v1575, %v1568
    %v1982 = vpack.c.b16 %v1576, %v1569
    %v1983 = vpack.c.b16 %v1577, %v1570
    %v1984 = vpack.c.b16 %v1578, %v1571
    %v1985 = vpack.c.b16 %v1579, %v1572
    %v1986 = vpack.c.b16 %v1580, %v1573
    %v1987 = vpack.c.b16 %v1581, %v1574
    %v1988 = vpack.c.b16 %v1589, %v1582
    %v1989 = vpack.c.b16 %v1590, %v1583
    %v1990 = vpack.c.b16 %v1591, %v1584
    %v1991 = vpack.c.b16 %v1592, %v1585
    %v1992 = vpack.c.b16 %v1593, %v1586
    %v1993 = vpack.c.b16 %v1594, %v1587
    %v1994 = vpack.c.b16 %v1595, %v1588
    %v1995 = vpack.c.b16 %v1603, %v1596
    %v1996 = vpack.c.b16 %v1604, %v1597
    %v1997 = vpack.c.b16 %v1605, %v1598
    %v1998 = vpack.c.b16 %v1606, %v1599
    %v1999 = vpack.c.b16 %v1607, %v1600
    %v2000 = vpack.c.b16 %v1608, %v1601
    %v2001 = vpack.c.b16 %v1609, %v1602
    %v2002 = vpack.c.b16 %v1617, %v1610
    %v2003 = vpack.c.b16 %v1618, %v1611
    %v2004 = vpack.c.b16 %v1619, %v1612
    %v2005 = vpack.c.b16 %v1620, %v1613
    %v2006 = vpack.c.b16 %v1621, %v1614
    %v2007 = vpack.c.b16 %v1622, %v1615
    %v2008 = vpack.c.b16 %v1623, %v1616
    %v2009 = vpack.c.b16 %v1631, %v1624
    %v2010 = vpack.c.b16 %v1632, %v1625
    %v2011 = vpack.c.b16 %v1633, %v1626
    %v2012 = vpack.c.b16 %v1634, %v1627
    %v2013 = vpack.c.b16 %v1635, %v1628
    %v2014 = vpack.c.b16 %v1636, %v1629
    %v2015 = vpack.c.b16 %v1637, %v1630
    %v2016 = vpack.c.b16 %v1645, %v1638
    %v2017 = vpack.c.b16 %v1646, %v1639
    %v2018 = vpack.c.b16 %v1647, %v1640
    %v2019 = vpack.c.b16 %v1648, %v1641
    %v2020 = vpack.c.b16 %v1649, %v1642
    %v2021 = vpack.c.b16 %v1650, %v1643
    %v2022 = vpack.c.b16 %v1651, %v1644
    %v2023 = vpack.c.b16 %v1659, %v1652
    %v2024 = vpack.c.b16 %v1660, %v1653
    %v2025 = vpack.c.b16 %v1661, %v1654
    %v2026 = vpack.c.b16 %v1662, %v1655
    %v2027 = vpack.c.b16 %v1663, %v1656
    %v2028 = vpack.c.b16 %v1664, %v1657
    %v2029 = vpack.c.b16 %v1665, %v1658
    %vm2394 = vcmask 523264
    %v2396 = vsel %vm2394, %v68, 0
    %2398 = vmatprep.subr.bf16.mxu0 %v1667
    %2399 = vmatpush1.bf16.msra.mxu0 %v1666
    %2400 = vmatprep.subr.bf16.mxu0 %v1674
    %2401 = vmatpush1.bf16.msra.mxu0 %v1673
    %2402 = vmatprep.subr.bf16.mxu0 %v1681
    %2403 = vmatpush1.bf16.msra.mxu0 %v1680
    %2404 = vmatprep.subr.bf16.mxu0 %v1688
    %2405 = vmatpush1.bf16.msra.mxu0 %v1687
    %2406 = vmatprep.subr.bf16.mxu0 %v1695
    %2407 = vmatpush1.bf16.msra.mxu0 %v1694
    %2408 = vmatprep.subr.bf16.mxu0 %v1702
    %2409 = vmatpush1.bf16.msra.mxu0 %v1701
    %2410 = vmatprep.subr.bf16.mxu0 %v1709
    %2411 = vmatpush1.bf16.msra.mxu0 %v1708
    %2412 = vmatprep.subr.bf16.mxu0 %v1716
    %2413 = vmatpush1.bf16.msra.mxu0 %v1715
    %2414 = vmatprep.subr.bf16.mxu0 %v1723
    %2415 = vmatpush1.bf16.msra.mxu0 %v1722
    %2416 = vmatprep.subr.bf16.mxu0 %v1730
    %2417 = vmatpush1.bf16.msra.mxu0 %v1729
    %2418 = vmatprep.subr.bf16.mxu0 %v1737
    %2419 = vmatpush1.bf16.msra.mxu0 %v1736
    %2420 = vmatprep.subr.bf16.mxu0 %v1744
    %2421 = vmatpush1.bf16.msra.mxu0 %v1743
    %2422 = vmatprep.subr.bf16.mxu0 %v1751
    %2423 = vmatpush1.bf16.msra.mxu0 %v1750
    %2424 = vmatprep.subr.bf16.mxu0 %v1758
    %2425 = vmatpush1.bf16.msra.mxu0 %v1757
    %2426 = vmatprep.subr.bf16.mxu0 %v1765
    %2427 = vmatpush1.bf16.msra.mxu0 %v1764
    %2428 = vmatprep.subr.bf16.mxu0 %v1772
    %2429 = vmatpush1.bf16.msra.mxu0 %v1771
    %2430 = vmatprep.mubr.bf16.mxu0 %v63
    %2431 = vmatmul.mubr.bf16.gmra.mrb[0].mxu0 %v62
    %v2432 = vpop.f32.mrb[0].mxu0
    %v2433 = vadd.f32 %v490, %v2432
    %v2434 = vpop.f32.mrb[0].mxu0
    %v2435 = vadd.f32 %v494, %v2434
    %v2436 = vpop.f32.mrb[0].mxu0
    %v2437 = vpop.f32.mrb[0].mxu0
    %2438 = vdwg.mxu0
    %2439 = vmatprep.subr.bf16.mxu0 %v1779
    %2440 = vmatpush1.bf16.msra.mxu0 %v1778
    %2441 = vmatprep.subr.bf16.mxu0 %v1786
    %2442 = vmatpush1.bf16.msra.mxu0 %v1785
    %2443 = vmatprep.subr.bf16.mxu0 %v1793
    %2444 = vmatpush1.bf16.msra.mxu0 %v1792
    %2445 = vmatprep.subr.bf16.mxu0 %v1800
    %2446 = vmatpush1.bf16.msra.mxu0 %v1799
    %2447 = vmatprep.subr.bf16.mxu0 %v1807
    %2448 = vmatpush1.bf16.msra.mxu0 %v1806
    %2449 = vmatprep.subr.bf16.mxu0 %v1814
    %2450 = vmatpush1.bf16.msra.mxu0 %v1813
    %2451 = vmatprep.subr.bf16.mxu0 %v1821
    %2452 = vmatpush1.bf16.msra.mxu0 %v1820
    %2453 = vmatprep.subr.bf16.mxu0 %v1828
    %2454 = vmatpush1.bf16.msra.mxu0 %v1827
    %2455 = vmatprep.subr.bf16.mxu0 %v1835
    %2456 = vmatpush1.bf16.msra.mxu0 %v1834
    %2457 = vmatprep.subr.bf16.mxu0 %v1842
    %2458 = vmatpush1.bf16.msra.mxu0 %v1841
    %2459 = vmatprep.subr.bf16.mxu0 %v1849
    %2460 = vmatpush1.bf16.msra.mxu0 %v1848
    %2461 = vmatprep.subr.bf16.mxu0 %v1856
    %2462 = vmatpush1.bf16.msra.mxu0 %v1855
    %2463 = vmatprep.subr.bf16.mxu0 %v1863
    %2464 = vmatpush1.bf16.msra.mxu0 %v1862
    %2465 = vmatprep.subr.bf16.mxu0 %v1870
    %2466 = vmatpush1.bf16.msra.mxu0 %v1869
    %2467 = vmatprep.subr.bf16.mxu0 %v1877
    %2468 = vmatpush1.bf16.msra.mxu0 %v1876
    %2469 = vmatprep.subr.bf16.mxu0 %v1884
    %2470 = vmatpush1.bf16.msra.mxu0 %v1883
    %2471 = vmatprep.mubr.bf16.mxu0 %v65
    %2472 = vmatmul.mubr.bf16.gmra.mrb[0].mxu0 %v64
    %v2473 = vpop.f32.mrb[0].mxu0
    %v2474 = vadd.f32 %v2433, %v2473
    %v2475 = vpop.f32.mrb[0].mxu0
    %v2476 = vadd.f32 %v2435, %v2475
    %v2477 = vpop.f32.mrb[0].mxu0
    %v2478 = vpop.f32.mrb[0].mxu0
    %2479 = vdwg.mxu0
    %2480 = vmatprep.subr.bf16.mxu0 %v1891
    %2481 = vmatpush1.bf16.msra.mxu0 %v1890
    %2482 = vmatprep.subr.bf16.mxu0 %v1898
    %2483 = vmatpush1.bf16.msra.mxu0 %v1897
    %2484 = vmatprep.subr.bf16.mxu0 %v1905
    %2485 = vmatpush1.bf16.msra.mxu0 %v1904
    %2486 = vmatprep.subr.bf16.mxu0 %v1912
    %2487 = vmatpush1.bf16.msra.mxu0 %v1911
    %2488 = vmatprep.subr.bf16.mxu0 %v1919
    %2489 = vmatpush1.bf16.msra.mxu0 %v1918
    %2490 = vmatprep.subr.bf16.mxu0 %v1926
    %2491 = vmatpush1.bf16.msra.mxu0 %v1925
    %2492 = vmatprep.subr.bf16.mxu0 %v1933
    %2493 = vmatpush1.bf16.msra.mxu0 %v1932
    %2494 = vmatprep.subr.bf16.mxu0 %v1940
    %2495 = vmatpush1.bf16.msra.mxu0 %v1939
    %2496 = vmatprep.subr.bf16.mxu0 %v1947
    %2497 = vmatpush1.bf16.msra.mxu0 %v1946
    %2498 = vmatprep.subr.bf16.mxu0 %v1954
    %2499 = vmatpush1.bf16.msra.mxu0 %v1953
    %2500 = vmatprep.subr.bf16.mxu0 %v1961
    %2501 = vmatpush1.bf16.msra.mxu0 %v1960
    %2502 = vmatprep.subr.bf16.mxu0 %v1968
    %2503 = vmatpush1.bf16.msra.mxu0 %v1967
    %2504 = vmatprep.subr.bf16.mxu0 %v1975
    %2505 = vmatpush1.bf16.msra.mxu0 %v1974
    %2506 = vmatprep.subr.bf16.mxu0 %v1982
    %2507 = vmatpush1.bf16.msra.mxu0 %v1981
    %2508 = vmatprep.subr.bf16.mxu0 %v1989
    %2509 = vmatpush1.bf16.msra.mxu0 %v1988
    %2510 = vmatprep.subr.bf16.mxu0 %v1996
    %2511 = vmatpush1.bf16.msra.mxu0 %v1995
    %2512 = vmatprep.mubr.bf16.mxu0 %v67
    %2513 = vmatmul.mubr.bf16.gmra.mrb[0].mxu0 %v66
    %v2514 = vpop.f32.mrb[0].mxu0
    %v2515 = vadd.f32 %v2474, %v2514
    %v2516 = vpop.f32.mrb[0].mxu0
    %v2517 = vadd.f32 %v2476, %v2516
    %v2518 = vpop.f32.mrb[0].mxu0
    %v2519 = vpop.f32.mrb[0].mxu0
    %2520 = vdwg.mxu0
    %2521 = vmatprep.subr.bf16.mxu0 %v2003
    %2522 = vmatpush1.bf16.msra.mxu0 %v2002
    %2523 = vmatprep.subr.bf16.mxu0 %v2010
    %2524 = vmatpush1.bf16.msra.mxu0 %v2009
    %2525 = vmatprep.subr.bf16.mxu0 %v2017
    %2526 = vmatpush1.bf16.msra.mxu0 %v2016
    %2527 = vmatprep.subr.bf16.mxu0 %v2024
    %2528 = vmatpush1.bf16.msra.mxu0 %v2023
    %2529 = vmatprep.subr.bf16.mxu0 0
    %2530 = vmatpush1.bf16.msra.mxu0 0
    %2531 = vmatprep.subr.bf16.mxu0 0
    %2532 = vmatpush1.bf16.msra.mxu0 0
    %2533 = vmatprep.subr.bf16.mxu0 0
    %2534 = vmatpush1.bf16.msra.mxu0 0
    %2535 = vmatprep.subr.bf16.mxu0 0
    %2536 = vmatpush1.bf16.msra.mxu0 0
    %2537 = vmatprep.subr.bf16.mxu0 0
    %2538 = vmatpush1.bf16.msra.mxu0 0
    %2539 = vmatprep.subr.bf16.mxu0 0
    %2540 = vmatpush1.bf16.msra.mxu0 0
    %2541 = vmatprep.subr.bf16.mxu0 0
    %2542 = vmatpush1.bf16.msra.mxu0 0
    %2543 = vmatprep.subr.bf16.mxu0 0
    %2544 = vmatpush1.bf16.msra.mxu0 0
    %2545 = vmatprep.subr.bf16.mxu0 0
    %2546 = vmatpush1.bf16.msra.mxu0 0
    %2547 = vmatprep.subr.bf16.mxu0 0
    %2548 = vmatpush1.bf16.msra.mxu0 0
    %2549 = vmatprep.subr.bf16.mxu0 0
    %2550 = vmatpush1.bf16.msra.mxu0 0
    %2551 = vmatprep.subr.bf16.mxu0 0
    %2552 = vmatpush1.bf16.msra.mxu0 0
    %2553 = vmatprep.mubr.bf16.mxu0 0
    %2554 = vmatmul.mubr.bf16.gmra.mrb[0].mxu0 %v2396
    %v2555 = vpop.f32.mrb[0].mxu0
    %v2556 = vadd.f32 %v2515, %v2555
    %v2557 = vpop.f32.mrb[0].mxu0
    %v2558 = vadd.f32 %v2517, %v2557
    %v2559 = vpop.f32.mrb[0].mxu0
    %v2560 = vpop.f32.mrb[0].mxu0
    %2561 = vdwg.mxu0
    %2562 = vmatprep.subr.bf16.mxu0 %v1669
    %2563 = vmatpush1.bf16.msra.mxu0 %v1668
    %2564 = vmatprep.subr.bf16.mxu0 %v1676
    %2565 = vmatpush1.bf16.msra.mxu0 %v1675
    %2566 = vmatprep.subr.bf16.mxu0 %v1683
    %2567 = vmatpush1.bf16.msra.mxu0 %v1682
    %2568 = vmatprep.subr.bf16.mxu0 %v1690
    %2569 = vmatpush1.bf16.msra.mxu0 %v1689
    %2570 = vmatprep.subr.bf16.mxu0 %v1697
    %2571 = vmatpush1.bf16.msra.mxu0 %v1696
    %2572 = vmatprep.subr.bf16.mxu0 %v1704
    %2573 = vmatpush1.bf16.msra.mxu0 %v1703
    %2574 = vmatprep.subr.bf16.mxu0 %v1711
    %2575 = vmatpush1.bf16.msra.mxu0 %v1710
    %2576 = vmatprep.subr.bf16.mxu0 %v1718
    %2577 = vmatpush1.bf16.msra.mxu0 %v1717
    %2578 = vmatprep.subr.bf16.mxu0 %v1725
    %2579 = vmatpush1.bf16.msra.mxu0 %v1724
    %2580 = vmatprep.subr.bf16.mxu0 %v1732
    %2581 = vmatpush1.bf16.msra.mxu0 %v1731
    %2582 = vmatprep.subr.bf16.mxu0 %v1739
    %2583 = vmatpush1.bf16.msra.mxu0 %v1738
    %2584 = vmatprep.subr.bf16.mxu0 %v1746
    %2585 = vmatpush1.bf16.msra.mxu0 %v1745
    %2586 = vmatprep.subr.bf16.mxu0 %v1753
    %2587 = vmatpush1.bf16.msra.mxu0 %v1752
    %2588 = vmatprep.subr.bf16.mxu0 %v1760
    %2589 = vmatpush1.bf16.msra.mxu0 %v1759
    %2590 = vmatprep.subr.bf16.mxu0 %v1767
    %2591 = vmatpush1.bf16.msra.mxu0 %v1766
    %2592 = vmatprep.subr.bf16.mxu0 %v1774
    %2593 = vmatpush1.bf16.msra.mxu0 %v1773
    %2594 = vmatprep.mubr.bf16.mxu0 %v63
    %2595 = vmatmul.mubr.bf16.gmra.mrb[0].mxu0 %v62
    %v2596 = vpop.f32.mrb[0].mxu0
    %v2597 = vadd.f32 %v498, %v2596
    %v2598 = vpop.f32.mrb[0].mxu0
    %v2599 = vadd.f32 %v502, %v2598
    %v2600 = vpop.f32.mrb[0].mxu0
    %v2601 = vpop.f32.mrb[0].mxu0
    %2602 = vdwg.mxu0
    %2603 = vmatprep.subr.bf16.mxu0 %v1781
    %2604 = vmatpush1.bf16.msra.mxu0 %v1780
    %2605 = vmatprep.subr.bf16.mxu0 %v1788
    %2606 = vmatpush1.bf16.msra.mxu0 %v1787
    %2607 = vmatprep.subr.bf16.mxu0 %v1795
    %2608 = vmatpush1.bf16.msra.mxu0 %v1794
    %2609 = vmatprep.subr.bf16.mxu0 %v1802
    %2610 = vmatpush1.bf16.msra.mxu0 %v1801
    %2611 = vmatprep.subr.bf16.mxu0 %v1809
    %2612 = vmatpush1.bf16.msra.mxu0 %v1808
    %2613 = vmatprep.subr.bf16.mxu0 %v1816
    %2614 = vmatpush1.bf16.msra.mxu0 %v1815
    %2615 = vmatprep.subr.bf16.mxu0 %v1823
    %2616 = vmatpush1.bf16.msra.mxu0 %v1822
    %2617 = vmatprep.subr.bf16.mxu0 %v1830
    %2618 = vmatpush1.bf16.msra.mxu0 %v1829
    %2619 = vmatprep.subr.bf16.mxu0 %v1837
    %2620 = vmatpush1.bf16.msra.mxu0 %v1836
    %2621 = vmatprep.subr.bf16.mxu0 %v1844
    %2622 = vmatpush1.bf16.msra.mxu0 %v1843
    %2623 = vmatprep.subr.bf16.mxu0 %v1851
    %2624 = vmatpush1.bf16.msra.mxu0 %v1850
    %2625 = vmatprep.subr.bf16.mxu0 %v1858
    %2626 = vmatpush1.bf16.msra.mxu0 %v1857
    %2627 = vmatprep.subr.bf16.mxu0 %v1865
    %2628 = vmatpush1.bf16.msra.mxu0 %v1864
    %2629 = vmatprep.subr.bf16.mxu0 %v1872
    %2630 = vmatpush1.bf16.msra.mxu0 %v1871
    %2631 = vmatprep.subr.bf16.mxu0 %v1879
    %2632 = vmatpush1.bf16.msra.mxu0 %v1878
    %2633 = vmatprep.subr.bf16.mxu0 %v1886
    %2634 = vmatpush1.bf16.msra.mxu0 %v1885
    %2635 = vmatprep.mubr.bf16.mxu0 %v65
    %2636 = vmatmul.mubr.bf16.gmra.mrb[0].mxu0 %v64
    %v2637 = vpop.f32.mrb[0].mxu0
    %v2638 = vadd.f32 %v2597, %v2637
    %v2639 = vpop.f32.mrb[0].mxu0
    %v2640 = vadd.f32 %v2599, %v2639
    %v2641 = vpop.f32.mrb[0].mxu0
    %v2642 = vpop.f32.mrb[0].mxu0
    %2643 = vdwg.mxu0
    %2644 = vmatprep.subr.bf16.mxu0 %v1893
    %2645 = vmatpush1.bf16.msra.mxu0 %v1892
    %2646 = vmatprep.subr.bf16.mxu0 %v1900
    %2647 = vmatpush1.bf16.msra.mxu0 %v1899
    %2648 = vmatprep.subr.bf16.mxu0 %v1907
    %2649 = vmatpush1.bf16.msra.mxu0 %v1906
    %2650 = vmatprep.subr.bf16.mxu0 %v1914
    %2651 = vmatpush1.bf16.msra.mxu0 %v1913
    %2652 = vmatprep.subr.bf16.mxu0 %v1921
    %2653 = vmatpush1.bf16.msra.mxu0 %v1920
    %2654 = vmatprep.subr.bf16.mxu0 %v1928
    %2655 = vmatpush1.bf16.msra.mxu0 %v1927
    %2656 = vmatprep.subr.bf16.mxu0 %v1935
    %2657 = vmatpush1.bf16.msra.mxu0 %v1934
    %2658 = vmatprep.subr.bf16.mxu0 %v1942
    %2659 = vmatpush1.bf16.msra.mxu0 %v1941
    %2660 = vmatprep.subr.bf16.mxu0 %v1949
    %2661 = vmatpush1.bf16.msra.mxu0 %v1948
    %2662 = vmatprep.subr.bf16.mxu0 %v1956
    %2663 = vmatpush1.bf16.msra.mxu0 %v1955
    %2664 = vmatprep.subr.bf16.mxu0 %v1963
    %2665 = vmatpush1.bf16.msra.mxu0 %v1962
    %2666 = vmatprep.subr.bf16.mxu0 %v1970
    %2667 = vmatpush1.bf16.msra.mxu0 %v1969
    %2668 = vmatprep.subr.bf16.mxu0 %v1977
    %2669 = vmatpush1.bf16.msra.mxu0 %v1976
    %2670 = vmatprep.subr.bf16.mxu0 %v1984
    %2671 = vmatpush1.bf16.msra.mxu0 %v1983
    %2672 = vmatprep.subr.bf16.mxu0 %v1991
    %2673 = vmatpush1.bf16.msra.mxu0 %v1990
    %2674 = vmatprep.subr.bf16.mxu0 %v1998
    %2675 = vmatpush1.bf16.msra.mxu0 %v1997
    %2676 = vmatprep.mubr.bf16.mxu0 %v67
    %2677 = vmatmul.mubr.bf16.gmra.mrb[0].mxu0 %v66
    %v2678 = vpop.f32.mrb[0].mxu0
    %v2679 = vadd.f32 %v2638, %v2678
    %v2680 = vpop.f32.mrb[0].mxu0
    %v2681 = vadd.f32 %v2640, %v2680
    %v2682 = vpop.f32.mrb[0].mxu0
    %v2683 = vpop.f32.mrb[0].mxu0
    %2684 = vdwg.mxu0
    %2685 = vmatprep.subr.bf16.mxu0 %v2005
    %2686 = vmatpush1.bf16.msra.mxu0 %v2004
    %2687 = vmatprep.subr.bf16.mxu0 %v2012
    %2688 = vmatpush1.bf16.msra.mxu0 %v2011
    %2689 = vmatprep.subr.bf16.mxu0 %v2019
    %2690 = vmatpush1.bf16.msra.mxu0 %v2018
    %2691 = vmatprep.subr.bf16.mxu0 %v2026
    %2692 = vmatpush1.bf16.msra.mxu0 %v2025
    %2693 = vmatprep.subr.bf16.mxu0 0
    %2694 = vmatpush1.bf16.msra.mxu0 0
    %2695 = vmatprep.subr.bf16.mxu0 0
    %2696 = vmatpush1.bf16.msra.mxu0 0
    %2697 = vmatprep.subr.bf16.mxu0 0
    %2698 = vmatpush1.bf16.msra.mxu0 0
    %2699 = vmatprep.subr.bf16.mxu0 0
    %2700 = vmatpush1.bf16.msra.mxu0 0
    %2701 = vmatprep.subr.bf16.mxu0 0
    %2702 = vmatpush1.bf16.msra.mxu0 0
    %2703 = vmatprep.subr.bf16.mxu0 0
    %2704 = vmatpush1.bf16.msra.mxu0 0
    %2705 = vmatprep.subr.bf16.mxu0 0
    %2706 = vmatpush1.bf16.msra.mxu0 0
    %2707 = vmatprep.subr.bf16.mxu0 0
    %2708 = vmatpush1.bf16.msra.mxu0 0
    %2709 = vmatprep.subr.bf16.mxu0 0
    %2710 = vmatpush1.bf16.msra.mxu0 0
    %2711 = vmatprep.subr.bf16.mxu0 0
    %2712 = vmatpush1.bf16.msra.mxu0 0
    %2713 = vmatprep.subr.bf16.mxu0 0
    %2714 = vmatpush1.bf16.msra.mxu0 0
    %2715 = vmatprep.subr.bf16.mxu0 0
    %2716 = vmatpush1.bf16.msra.mxu0 0
    %2717 = vmatprep.mubr.bf16.mxu0 0
    %2718 = vmatmul.mubr.bf16.gmra.mrb[0].mxu0 %v2396
    %v2719 = vpop.f32.mrb[0].mxu0
    %v2720 = vadd.f32 %v2679, %v2719
    %v2721 = vpop.f32.mrb[0].mxu0
    %v2722 = vadd.f32 %v2681, %v2721
    %v2723 = vpop.f32.mrb[0].mxu0
    %v2724 = vpop.f32.mrb[0].mxu0
    %2725 = vdwg.mxu0
    %2726 = vmatprep.subr.bf16.mxu0 %v1671
    %2727 = vmatpush1.bf16.msra.mxu0 %v1670
    %2728 = vmatprep.subr.bf16.mxu0 %v1678
    %2729 = vmatpush1.bf16.msra.mxu0 %v1677
    %2730 = vmatprep.subr.bf16.mxu0 %v1685
    %2731 = vmatpush1.bf16.msra.mxu0 %v1684
    %2732 = vmatprep.subr.bf16.mxu0 %v1692
    %2733 = vmatpush1.bf16.msra.mxu0 %v1691
    %2734 = vmatprep.subr.bf16.mxu0 %v1699
    %2735 = vmatpush1.bf16.msra.mxu0 %v1698
    %2736 = vmatprep.subr.bf16.mxu0 %v1706
    %2737 = vmatpush1.bf16.msra.mxu0 %v1705
    %2738 = vmatprep.subr.bf16.mxu0 %v1713
    %2739 = vmatpush1.bf16.msra.mxu0 %v1712
    %2740 = vmatprep.subr.bf16.mxu0 %v1720
    %2741 = vmatpush1.bf16.msra.mxu0 %v1719
    %2742 = vmatprep.subr.bf16.mxu0 %v1727
    %2743 = vmatpush1.bf16.msra.mxu0 %v1726
    %2744 = vmatprep.subr.bf16.mxu0 %v1734
    %2745 = vmatpush1.bf16.msra.mxu0 %v1733
    %2746 = vmatprep.subr.bf16.mxu0 %v1741
    %2747 = vmatpush1.bf16.msra.mxu0 %v1740
    %2748 = vmatprep.subr.bf16.mxu0 %v1748
    %2749 = vmatpush1.bf16.msra.mxu0 %v1747
    %2750 = vmatprep.subr.bf16.mxu0 %v1755
    %2751 = vmatpush1.bf16.msra.mxu0 %v1754
    %2752 = vmatprep.subr.bf16.mxu0 %v1762
    %2753 = vmatpush1.bf16.msra.mxu0 %v1761
    %2754 = vmatprep.subr.bf16.mxu0 %v1769
    %2755 = vmatpush1.bf16.msra.mxu0 %v1768
    %2756 = vmatprep.subr.bf16.mxu0 %v1776
    %2757 = vmatpush1.bf16.msra.mxu0 %v1775
    %2758 = vmatprep.mubr.bf16.mxu0 %v63
    %2759 = vmatmul.mubr.bf16.gmra.mrb[0].mxu0 %v62
    %v2760 = vpop.f32.mrb[0].mxu0
    %v2761 = vadd.f32 %v506, %v2760
    %v2762 = vpop.f32.mrb[0].mxu0
    %v2763 = vadd.f32 %v510, %v2762
    %v2764 = vpop.f32.mrb[0].mxu0
    %v2765 = vpop.f32.mrb[0].mxu0
    %2766 = vdwg.mxu0
    %2767 = vmatprep.subr.bf16.mxu0 %v1783
    %2768 = vmatpush1.bf16.msra.mxu0 %v1782
    %2769 = vmatprep.subr.bf16.mxu0 %v1790
    %2770 = vmatpush1.bf16.msra.mxu0 %v1789
    %2771 = vmatprep.subr.bf16.mxu0 %v1797
    %2772 = vmatpush1.bf16.msra.mxu0 %v1796
    %2773 = vmatprep.subr.bf16.mxu0 %v1804
    %2774 = vmatpush1.bf16.msra.mxu0 %v1803
    %2775 = vmatprep.subr.bf16.mxu0 %v1811
    %2776 = vmatpush1.bf16.msra.mxu0 %v1810
    %2777 = vmatprep.subr.bf16.mxu0 %v1818
    %2778 = vmatpush1.bf16.msra.mxu0 %v1817
    %2779 = vmatprep.subr.bf16.mxu0 %v1825
    %2780 = vmatpush1.bf16.msra.mxu0 %v1824
    %2781 = vmatprep.subr.bf16.mxu0 %v1832
    %2782 = vmatpush1.bf16.msra.mxu0 %v1831
    %2783 = vmatprep.subr.bf16.mxu0 %v1839
    %2784 = vmatpush1.bf16.msra.mxu0 %v1838
    %2785 = vmatprep.subr.bf16.mxu0 %v1846
    %2786 = vmatpush1.bf16.msra.mxu0 %v1845
    %2787 = vmatprep.subr.bf16.mxu0 %v1853
    %2788 = vmatpush1.bf16.msra.mxu0 %v1852
    %2789 = vmatprep.subr.bf16.mxu0 %v1860
    %2790 = vmatpush1.bf16.msra.mxu0 %v1859
    %2791 = vmatprep.subr.bf16.mxu0 %v1867
    %2792 = vmatpush1.bf16.msra.mxu0 %v1866
    %2793 = vmatprep.subr.bf16.mxu0 %v1874
    %2794 = vmatpush1.bf16.msra.mxu0 %v1873
    %2795 = vmatprep.subr.bf16.mxu0 %v1881
    %2796 = vmatpush1.bf16.msra.mxu0 %v1880
    %2797 = vmatprep.subr.bf16.mxu0 %v1888
    %2798 = vmatpush1.bf16.msra.mxu0 %v1887
    %2799 = vmatprep.mubr.bf16.mxu0 %v65
    %2800 = vmatmul.mubr.bf16.gmra.mrb[0].mxu0 %v64
    %v2801 = vpop.f32.mrb[0].mxu0
    %v2802 = vadd.f32 %v2761, %v2801
    %v2803 = vpop.f32.mrb[0].mxu0
    %v2804 = vadd.f32 %v2763, %v2803
    %v2805 = vpop.f32.mrb[0].mxu0
    %v2806 = vpop.f32.mrb[0].mxu0
    %2807 = vdwg.mxu0
    %2808 = vmatprep.subr.bf16.mxu0 %v1895
    %2809 = vmatpush1.bf16.msra.mxu0 %v1894
    %2810 = vmatprep.subr.bf16.mxu0 %v1902
    %2811 = vmatpush1.bf16.msra.mxu0 %v1901
    %2812 = vmatprep.subr.bf16.mxu0 %v1909
    %2813 = vmatpush1.bf16.msra.mxu0 %v1908
    %2814 = vmatprep.subr.bf16.mxu0 %v1916
    %2815 = vmatpush1.bf16.msra.mxu0 %v1915
    %2816 = vmatprep.subr.bf16.mxu0 %v1923
    %2817 = vmatpush1.bf16.msra.mxu0 %v1922
    %2818 = vmatprep.subr.bf16.mxu0 %v1930
    %2819 = vmatpush1.bf16.msra.mxu0 %v1929
    %2820 = vmatprep.subr.bf16.mxu0 %v1937
    %2821 = vmatpush1.bf16.msra.mxu0 %v1936
    %2822 = vmatprep.subr.bf16.mxu0 %v1944
    %2823 = vmatpush1.bf16.msra.mxu0 %v1943
    %2824 = vmatprep.subr.bf16.mxu0 %v1951
    %2825 = vmatpush1.bf16.msra.mxu0 %v1950
    %2826 = vmatprep.subr.bf16.mxu0 %v1958
    %2827 = vmatpush1.bf16.msra.mxu0 %v1957
    %2828 = vmatprep.subr.bf16.mxu0 %v1965
    %2829 = vmatpush1.bf16.msra.mxu0 %v1964
    %2830 = vmatprep.subr.bf16.mxu0 %v1972
    %2831 = vmatpush1.bf16.msra.mxu0 %v1971
    %2832 = vmatprep.subr.bf16.mxu0 %v1979
    %2833 = vmatpush1.bf16.msra.mxu0 %v1978
    %2834 = vmatprep.subr.bf16.mxu0 %v1986
    %2835 = vmatpush1.bf16.msra.mxu0 %v1985
    %2836 = vmatprep.subr.bf16.mxu0 %v1993
    %2837 = vmatpush1.bf16.msra.mxu0 %v1992
    %2838 = vmatprep.subr.bf16.mxu0 %v2000
    %2839 = vmatpush1.bf16.msra.mxu0 %v1999
    %2840 = vmatprep.mubr.bf16.mxu0 %v67
    %2841 = vmatmul.mubr.bf16.gmra.mrb[0].mxu0 %v66
    %v2842 = vpop.f32.mrb[0].mxu0
    %v2843 = vadd.f32 %v2802, %v2842
    %v2844 = vpop.f32.mrb[0].mxu0
    %v2845 = vadd.f32 %v2804, %v2844
    %v2846 = vpop.f32.mrb[0].mxu0
    %v2847 = vpop.f32.mrb[0].mxu0
    %2848 = vdwg.mxu0
    %2849 = vmatprep.subr.bf16.mxu0 %v2007
    %2850 = vmatpush1.bf16.msra.mxu0 %v2006
    %2851 = vmatprep.subr.bf16.mxu0 %v2014
    %2852 = vmatpush1.bf16.msra.mxu0 %v2013
    %2853 = vmatprep.subr.bf16.mxu0 %v2021
    %2854 = vmatpush1.bf16.msra.mxu0 %v2020
    %2855 = vmatprep.subr.bf16.mxu0 %v2028
    %2856 = vmatpush1.bf16.msra.mxu0 %v2027
    %2857 = vmatprep.subr.bf16.mxu0 0
    %2858 = vmatpush1.bf16.msra.mxu0 0
    %2859 = vmatprep.subr.bf16.mxu0 0
    %2860 = vmatpush1.bf16.msra.mxu0 0
    %2861 = vmatprep.subr.bf16.mxu0 0
    %2862 = vmatpush1.bf16.msra.mxu0 0
    %2863 = vmatprep.subr.bf16.mxu0 0
    %2864 = vmatpush1.bf16.msra.mxu0 0
    %2865 = vmatprep.subr.bf16.mxu0 0
    %2866 = vmatpush1.bf16.msra.mxu0 0
    %2867 = vmatprep.subr.bf16.mxu0 0
    %2868 = vmatpush1.bf16.msra.mxu0 0
    %2869 = vmatprep.subr.bf16.mxu0 0
    %2870 = vmatpush1.bf16.msra.mxu0 0
    %2871 = vmatprep.subr.bf16.mxu0 0
    %2872 = vmatpush1.bf16.msra.mxu0 0
    %2873 = vmatprep.subr.bf16.mxu0 0
    %2874 = vmatpush1.bf16.msra.mxu0 0
    %2875 = vmatprep.subr.bf16.mxu0 0
    %2876 = vmatpush1.bf16.msra.mxu0 0
    %2877 = vmatprep.subr.bf16.mxu0 0
    %2878 = vmatpush1.bf16.msra.mxu0 0
    %2879 = vmatprep.subr.bf16.mxu0 0
    %2880 = vmatpush1.bf16.msra.mxu0 0
    %2881 = vmatprep.mubr.bf16.mxu0 0
    %2882 = vmatmul.mubr.bf16.gmra.mrb[0].mxu0 %v2396
    %v2883 = vpop.f32.mrb[0].mxu0
    %v2884 = vadd.f32 %v2843, %v2883
    %v2885 = vpop.f32.mrb[0].mxu0
    %v2886 = vadd.f32 %v2845, %v2885
    %v2887 = vpop.f32.mrb[0].mxu0
    %v2888 = vpop.f32.mrb[0].mxu0
    %2889 = vdwg.mxu0
    %2890 = vmatprep.subr.bf16.mxu0 0
    %2891 = vmatpush1.bf16.msra.mxu0 %v1672
    %2892 = vmatprep.subr.bf16.mxu0 0
    %2893 = vmatpush1.bf16.msra.mxu0 %v1679
    %2894 = vmatprep.subr.bf16.mxu0 0
    %2895 = vmatpush1.bf16.msra.mxu0 %v1686
    %2896 = vmatprep.subr.bf16.mxu0 0
    %2897 = vmatpush1.bf16.msra.mxu0 %v1693
    %2898 = vmatprep.subr.bf16.mxu0 0
    %2899 = vmatpush1.bf16.msra.mxu0 %v1700
    %2900 = vmatprep.subr.bf16.mxu0 0
    %2901 = vmatpush1.bf16.msra.mxu0 %v1707
    %2902 = vmatprep.subr.bf16.mxu0 0
    %2903 = vmatpush1.bf16.msra.mxu0 %v1714
    %2904 = vmatprep.subr.bf16.mxu0 0
    %2905 = vmatpush1.bf16.msra.mxu0 %v1721
    %2906 = vmatprep.subr.bf16.mxu0 0
    %2907 = vmatpush1.bf16.msra.mxu0 %v1728
    %2908 = vmatprep.subr.bf16.mxu0 0
    %2909 = vmatpush1.bf16.msra.mxu0 %v1735
    %2910 = vmatprep.subr.bf16.mxu0 0
    %2911 = vmatpush1.bf16.msra.mxu0 %v1742
    %2912 = vmatprep.subr.bf16.mxu0 0
    %2913 = vmatpush1.bf16.msra.mxu0 %v1749
    %2914 = vmatprep.subr.bf16.mxu0 0
    %2915 = vmatpush1.bf16.msra.mxu0 %v1756
    %2916 = vmatprep.subr.bf16.mxu0 0
    %2917 = vmatpush1.bf16.msra.mxu0 %v1763
    %2918 = vmatprep.subr.bf16.mxu0 0
    %2919 = vmatpush1.bf16.msra.mxu0 %v1770
    %2920 = vmatprep.subr.bf16.mxu0 0
    %2921 = vmatpush1.bf16.msra.mxu0 %v1777
    %2922 = vmatprep.mubr.bf16.mxu0 %v63
    %2923 = vmatmul.mubr.bf16.gmra.mrb[0].mxu0 %v62
    %v2924 = vpop.f32.mrb[0].mxu0
    %v2925 = vadd.f32 %v514, %v2924
    %v2926 = vpop.f32.mrb[0].mxu0
    %v2927 = vpop.f32.mrb[0].mxu0
    %v2928 = vpop.f32.mrb[0].mxu0
    %2929 = vdwg.mxu0
    %2930 = vmatprep.subr.bf16.mxu0 0
    %2931 = vmatpush1.bf16.msra.mxu0 %v1784
    %2932 = vmatprep.subr.bf16.mxu0 0
    %2933 = vmatpush1.bf16.msra.mxu0 %v1791
    %2934 = vmatprep.subr.bf16.mxu0 0
    %2935 = vmatpush1.bf16.msra.mxu0 %v1798
    %2936 = vmatprep.subr.bf16.mxu0 0
    %2937 = vmatpush1.bf16.msra.mxu0 %v1805
    %2938 = vmatprep.subr.bf16.mxu0 0
    %2939 = vmatpush1.bf16.msra.mxu0 %v1812
    %2940 = vmatprep.subr.bf16.mxu0 0
    %2941 = vmatpush1.bf16.msra.mxu0 %v1819
    %2942 = vmatprep.subr.bf16.mxu0 0
    %2943 = vmatpush1.bf16.msra.mxu0 %v1826
    %2944 = vmatprep.subr.bf16.mxu0 0
    %2945 = vmatpush1.bf16.msra.mxu0 %v1833
    %2946 = vmatprep.subr.bf16.mxu0 0
    %2947 = vmatpush1.bf16.msra.mxu0 %v1840
    %2948 = vmatprep.subr.bf16.mxu0 0
    %2949 = vmatpush1.bf16.msra.mxu0 %v1847
    %2950 = vmatprep.subr.bf16.mxu0 0
    %2951 = vmatpush1.bf16.msra.mxu0 %v1854
    %2952 = vmatprep.subr.bf16.mxu0 0
    %2953 = vmatpush1.bf16.msra.mxu0 %v1861
    %2954 = vmatprep.subr.bf16.mxu0 0
    %2955 = vmatpush1.bf16.msra.mxu0 %v1868
    %2956 = vmatprep.subr.bf16.mxu0 0
    %2957 = vmatpush1.bf16.msra.mxu0 %v1875
    %2958 = vmatprep.subr.bf16.mxu0 0
    %2959 = vmatpush1.bf16.msra.mxu0 %v1882
    %2960 = vmatprep.subr.bf16.mxu0 0
    %2961 = vmatpush1.bf16.msra.mxu0 %v1889
    %2962 = vmatprep.mubr.bf16.mxu0 %v65
    %2963 = vmatmul.mubr.bf16.gmra.mrb[0].mxu0 %v64
    %v2964 = vpop.f32.mrb[0].mxu0
    %v2965 = vadd.f32 %v2925, %v2964
    %v2966 = vpop.f32.mrb[0].mxu0
    %v2967 = vpop.f32.mrb[0].mxu0
    %v2968 = vpop.f32.mrb[0].mxu0
    %2969 = vdwg.mxu0
    %2970 = vmatprep.subr.bf16.mxu0 0
    %2971 = vmatpush1.bf16.msra.mxu0 %v1896
    %2972 = vmatprep.subr.bf16.mxu0 0
    %2973 = vmatpush1.bf16.msra.mxu0 %v1903
    %2974 = vmatprep.subr.bf16.mxu0 0
    %2975 = vmatpush1.bf16.msra.mxu0 %v1910
    %2976 = vmatprep.subr.bf16.mxu0 0
    %2977 = vmatpush1.bf16.msra.mxu0 %v1917
    %2978 = vmatprep.subr.bf16.mxu0 0
    %2979 = vmatpush1.bf16.msra.mxu0 %v1924
    %2980 = vmatprep.subr.bf16.mxu0 0
    %2981 = vmatpush1.bf16.msra.mxu0 %v1931
    %2982 = vmatprep.subr.bf16.mxu0 0
    %2983 = vmatpush1.bf16.msra.mxu0 %v1938
    %2984 = vmatprep.subr.bf16.mxu0 0
    %2985 = vmatpush1.bf16.msra.mxu0 %v1945
    %2986 = vmatprep.subr.bf16.mxu0 0
    %2987 = vmatpush1.bf16.msra.mxu0 %v1952
    %2988 = vmatprep.subr.bf16.mxu0 0
    %2989 = vmatpush1.bf16.msra.mxu0 %v1959
    %2990 = vmatprep.subr.bf16.mxu0 0
    %2991 = vmatpush1.bf16.msra.mxu0 %v1966
    %2992 = vmatprep.subr.bf16.mxu0 0
    %2993 = vmatpush1.bf16.msra.mxu0 %v1973
    %2994 = vmatprep.subr.bf16.mxu0 0
    %2995 = vmatpush1.bf16.msra.mxu0 %v1980
    %2996 = vmatprep.subr.bf16.mxu0 0
    %2997 = vmatpush1.bf16.msra.mxu0 %v1987
    %2998 = vmatprep.subr.bf16.mxu0 0
    %2999 = vmatpush1.bf16.msra.mxu0 %v1994
    %3000 = vmatprep.subr.bf16.mxu0 0
    %3001 = vmatpush1.bf16.msra.mxu0 %v2001
    %3002 = vmatprep.mubr.bf16.mxu0 %v67
    %3003 = vmatmul.mubr.bf16.gmra.mrb[0].mxu0 %v66
    %v3004 = vpop.f32.mrb[0].mxu0
    %v3005 = vadd.f32 %v2965, %v3004
    %v3006 = vpop.f32.mrb[0].mxu0
    %v3007 = vpop.f32.mrb[0].mxu0
    %v3008 = vpop.f32.mrb[0].mxu0
    %3009 = vdwg.mxu0
    %3010 = vmatprep.subr.bf16.mxu0 0
    %3011 = vmatpush1.bf16.msra.mxu0 %v2008
    %3012 = vmatprep.subr.bf16.mxu0 0
    %3013 = vmatpush1.bf16.msra.mxu0 %v2015
    %3014 = vmatprep.subr.bf16.mxu0 0
    %3015 = vmatpush1.bf16.msra.mxu0 %v2022
    %3016 = vmatprep.subr.bf16.mxu0 0
    %3017 = vmatpush1.bf16.msra.mxu0 %v2029
    %3018 = vmatprep.subr.bf16.mxu0 0
    %3019 = vmatpush1.bf16.msra.mxu0 0
    %3020 = vmatprep.subr.bf16.mxu0 0
    %3021 = vmatpush1.bf16.msra.mxu0 0
    %3022 = vmatprep.subr.bf16.mxu0 0
    %3023 = vmatpush1.bf16.msra.mxu0 0
    %3024 = vmatprep.subr.bf16.mxu0 0
    %3025 = vmatpush1.bf16.msra.mxu0 0
    %3026 = vmatprep.subr.bf16.mxu0 0
    %3027 = vmatpush1.bf16.msra.mxu0 0
    %3028 = vmatprep.subr.bf16.mxu0 0
    %3029 = vmatpush1.bf16.msra.mxu0 0
    %3030 = vmatprep.subr.bf16.mxu0 0
    %3031 = vmatpush1.bf16.msra.mxu0 0
    %3032 = vmatprep.subr.bf16.mxu0 0
    %3033 = vmatpush1.bf16.msra.mxu0 0
    %3034 = vmatprep.subr.bf16.mxu0 0
    %3035 = vmatpush1.bf16.msra.mxu0 0
    %3036 = vmatprep.subr.bf16.mxu0 0
    %3037 = vmatpush1.bf16.msra.mxu0 0
    %3038 = vmatprep.subr.bf16.mxu0 0
    %3039 = vmatpush1.bf16.msra.mxu0 0
    %3040 = vmatprep.subr.bf16.mxu0 0
    %3041 = vmatpush1.bf16.msra.mxu0 0
    %3042 = vmatprep.mubr.bf16.mxu0 0
    %3043 = vmatmul.mubr.bf16.gmra.mrb[0].mxu0 %v2396
    %v3044 = vpop.f32.mrb[0].mxu0
    %v3045 = vadd.f32 %v3005, %v3044
    %v3046 = vpop.f32.mrb[0].mxu0
    %v3047 = vpop.f32.mrb[0].mxu0
    %v3048 = vpop.f32.mrb[0].mxu0
    %3049 = vdwg.mxu0
    %vm3050 = vcmp.gt.f32.partialorder %v2556, 0.0
    %vm3051 = vcmp.gt.f32.partialorder %v2558, 0.0
    %vm3052 = vcmp.gt.f32.partialorder %v2720, 0.0
    %vm3053 = vcmp.gt.f32.partialorder %v2722, 0.0
    %vm3054 = vcmp.gt.f32.partialorder %v2884, 0.0
    %vm3055 = vcmp.gt.f32.partialorder %v2886, 0.0
    %vm3056 = vcmp.gt.f32.partialorder %v3045, 0.0
    %v3057 = vmul.f32 %v2556, 0.01
    %v3058 = vmul.f32 %v2558, 0.01
    %v3059 = vmul.f32 %v2720, 0.01
    %v3060 = vmul.f32 %v2722, 0.01
    %v3061 = vmul.f32 %v2884, 0.01
    %v3062 = vmul.f32 %v2886, 0.01
    %v3063 = vmul.f32 %v3045, 0.01
    %v3064 = vsel %vm3050, %v2556, %v3057
    %v3065 = vsel %vm3051, %v2558, %v3058
    %v3066 = vsel %vm3052, %v2720, %v3059
    %v3067 = vsel %vm3053, %v2722, %v3060
    %v3068 = vsel %vm3054, %v2884, %v3061
    %v3069 = vsel %vm3055, %v2886, %v3062
    %v3070 = vsel %vm3056, %v3045, %v3063
    %v3071 = vpack.c.bf16 %v3064, %v3064
    %v3072 = vpack.c.bf16 %v3065, %v3065
    %v3073 = vpack.c.bf16 %v3066, %v3066
    %v3074 = vpack.c.bf16 %v3067, %v3067
    %v3075 = vpack.c.bf16 %v3068, %v3068
    %v3076 = vpack.c.bf16 %v3069, %v3069
    %v3077 = vpack.c.bf16 %v3070, %v3070
    %v3078 = vld [vmem:[%s3] sm:$0xff]
    %v3079 = vld [vmem:[%s3 + $0x8] sm:$0xff]
    %v3080 = vld [vmem:[%s3 + $0x10] sm:$0xff]
    %v3081 = vld [vmem:[%s3 + $0x18] sm:$0xff]
    %v3082 = vld [vmem:[%s3 + $0x20] sm:$0xff]
    %v3083 = vld [vmem:[%s3 + $0x28] sm:$0xff]
    %v3084 = vld [vmem:[%s3 + $0x30] sm:$0xff]
    %v3085 = vld [vmem:[%s3 + $0x38] sm:$0xff]
    %v3086 = vld [vmem:[%s3 + $0x40] sm:$0xff]
    %v3087 = vld [vmem:[%s3 + $0x48] sm:$0xff]
    %v3088 = vld [vmem:[%s3 + $0x50] sm:$0xff]
    %v3089 = vld [vmem:[%s3 + $0x58] sm:$0xff]
    %v3090 = vld [vmem:[%s3 + $0x60] sm:$0xff]
    %v3091 = vld [vmem:[%s3 + $0x68] sm:$0xff]
    %v3092 = vld [vmem:[%s3 + $0x70] sm:$0xff]
    %v3093 = vld [vmem:[%s3 + $0x78] sm:$0xff]
    %v3094 = vld [vmem:[%s3 + $0x80] sm:$0xff]
    %v3095 = vld [vmem:[%s3 + $0x88] sm:$0xff]
    %v3096 = vld [vmem:[%s3 + $0x90] sm:$0xff]
    %v3097 = vld [vmem:[%s3 + $0x98] sm:$0xff]
    %v3098 = vld [vmem:[%s3 + $0xa0] sm:$0xff]
    %v3099 = vld [vmem:[%s3 + $0xa8] sm:$0xff]
    %v3100 = vld [vmem:[%s3 + $0xb0] sm:$0xff]
    %v3101 = vld [vmem:[%s3 + $0xb8] sm:$0xff]
    %v3102 = vld [vmem:[%s3 + $0xc0] sm:$0xff]
    %v3103 = vld [vmem:[%s3 + $0xc8] sm:$0xff]
    %v3104 = vld [vmem:[%s3 + $0xd0] sm:$0xff]
    %v3105 = vld [vmem:[%s3 + $0xd8] sm:$0xff]
    %v3106 = vld [vmem:[%s3 + $0xe0] sm:$0xff]
    %v3107 = vld [vmem:[%s3 + $0xe8] sm:$0xff]
    %v3108 = vld [vmem:[%s3 + $0xf0] sm:$0xff]
    %v3109 = vld [vmem:[%s3 + $0xf8] sm:$0xff]
    %v3110 = vld [vmem:[%s3 + $0x100] sm:$0xff]
    %v3111 = vld [vmem:[%s3 + $0x108] sm:$0xff]
    %v3112 = vld [vmem:[%s3 + $0x110] sm:$0xff]
    %v3113 = vld [vmem:[%s3 + $0x118] sm:$0xff]
    %v3114 = vld [vmem:[%s3 + $0x120] sm:$0xff]
    %v3115 = vld [vmem:[%s3 + $0x128] sm:$0xff]
    %v3116 = vld [vmem:[%s3 + $0x130] sm:$0xff]
    %v3117 = vld [vmem:[%s3 + $0x138] sm:$0xff]
    %v3118 = vld [vmem:[%s3 + $0x140] sm:$0xff]
    %v3119 = vld [vmem:[%s3 + $0x148] sm:$0xff]
    %v3120 = vld [vmem:[%s3 + $0x150] sm:$0xff]
    %v3121 = vld [vmem:[%s3 + $0x158] sm:$0xff]
    %v3122 = vld [vmem:[%s3 + $0x160] sm:$0xff]
    %v3123 = vld [vmem:[%s3 + $0x168] sm:$0xff]
    %v3124 = vld [vmem:[%s3 + $0x170] sm:$0xff]
    %v3125 = vld [vmem:[%s3 + $0x178] sm:$0xff]
    %v3126 = vld [vmem:[%s3 + $0x180] sm:$0xff]
    %v3127 = vld [vmem:[%s3 + $0x188] sm:$0xff]
    %v3128 = vld [vmem:[%s3 + $0x190] sm:$0xff]
    %v3129 = vld [vmem:[%s3 + $0x198] sm:$0xff]
    %v3130 = vld [vmem:[%s3 + $0x1a0] sm:$0xff]
    %v3131 = vld [vmem:[%s3 + $0x1a8] sm:$0xff]
    %v3132 = vld [vmem:[%s3 + $0x1b0] sm:$0xff]
    %v3133 = vld [vmem:[%s3 + $0x1b8] sm:$0xff]
    %v3134 = vld [vmem:[%s3 + $0x1c0] sm:$0xff]
    %v3135 = vld [vmem:[%s3 + $0x1c8] sm:$0xff]
    %v3136 = vld [vmem:[%s3 + $0x1d0] sm:$0xff]
    %v3137 = vld [vmem:[%s3 + $0x1d8] sm:$0xff]
    %v3138 = vld [vmem:[%s3 + $0x1e0] sm:$0xff]
    %v3139 = vld [vmem:[%s3 + $0x1e8] sm:$0xff]
    %v3140 = vld [vmem:[%s3 + $0x1f0] sm:$0xff]
    %v3141 = vld [vmem:[%s3 + $0x1f8] sm:$0xff]
    %v3142 = vld [vmem:[%s3 + $0x200] sm:$0xff]
    %v3143 = vld [vmem:[%s3 + $0x208] sm:$0xff]
    %v3144 = vld [vmem:[%s3 + $0x210] sm:$0xff]
    %v3145 = vld [vmem:[%s3 + $0x218] sm:$0xff]
    %v3146 = vld [vmem:[%s3 + $0x220] sm:$0xff]
    %v3147 = vld [vmem:[%s3 + $0x228] sm:$0xff]
    %v3148 = vld [vmem:[%s3 + $0x230] sm:$0xff]
    %v3149 = vld [vmem:[%s3 + $0x238] sm:$0xff]
    %v3150 = vld [vmem:[%s3 + $0x240] sm:$0xff]
    %v3151 = vld [vmem:[%s3 + $0x248] sm:$0xff]
    %v3152 = vld [vmem:[%s3 + $0x250] sm:$0xff]
    %v3153 = vld [vmem:[%s3 + $0x258] sm:$0xff]
    %v3154 = vld [vmem:[%s3 + $0x260] sm:$0xff]
    %v3155 = vld [vmem:[%s3 + $0x268] sm:$0xff]
    %v3156 = vld [vmem:[%s3 + $0x270] sm:$0xff]
    %v3157 = vld [vmem:[%s3 + $0x278] sm:$0xff]
    %v3158 = vld [vmem:[%s3 + $0x280] sm:$0xff]
    %v3159 = vld [vmem:[%s3 + $0x288] sm:$0xff]
    %v3160 = vld [vmem:[%s3 + $0x290] sm:$0xff]
    %v3161 = vld [vmem:[%s3 + $0x298] sm:$0xff]
    %v3162 = vld [vmem:[%s3 + $0x2a0] sm:$0xff]
    %v3163 = vld [vmem:[%s3 + $0x2a8] sm:$0xff]
    %v3164 = vld [vmem:[%s3 + $0x2b0] sm:$0xff]
    %v3165 = vld [vmem:[%s3 + $0x2b8] sm:$0xff]
    %v3166 = vld [vmem:[%s3 + $0x2c0] sm:$0xff]
    %v3167 = vld [vmem:[%s3 + $0x2c8] sm:$0xff]
    %v3168 = vld [vmem:[%s3 + $0x2d0] sm:$0xff]
    %v3169 = vld [vmem:[%s3 + $0x2d8] sm:$0xff]
    %v3170 = vld [vmem:[%s3 + $0x2e0] sm:$0xff]
    %v3171 = vld [vmem:[%s3 + $0x2e8] sm:$0xff]
    %v3172 = vld [vmem:[%s3 + $0x2f0] sm:$0xff]
    %v3173 = vld [vmem:[%s3 + $0x2f8] sm:$0xff]
    %v3174 = vld [vmem:[%s3 + $0x300] sm:$0xff]
    %v3175 = vld [vmem:[%s3 + $0x308] sm:$0xff]
    %v3176 = vld [vmem:[%s3 + $0x310] sm:$0xff]
    %v3177 = vld [vmem:[%s3 + $0x318] sm:$0xff]
    %v3178 = vld [vmem:[%s3 + $0x320] sm:$0xff]
    %v3179 = vld [vmem:[%s3 + $0x328] sm:$0xff]
    %v3180 = vld [vmem:[%s3 + $0x330] sm:$0xff]
    %v3181 = vld [vmem:[%s3 + $0x338] sm:$0xff]
    %v3182 = vld [vmem:[%s3 + $0x340] sm:$0xff]
    %v3183 = vld [vmem:[%s3 + $0x348] sm:$0xff]
    %v3184 = vld [vmem:[%s3 + $0x350] sm:$0xff]
    %v3185 = vld [vmem:[%s3 + $0x358] sm:$0xff]
    %v3186 = vld [vmem:[%s3 + $0x360] sm:$0xff]
    %v3187 = vld [vmem:[%s3 + $0x368] sm:$0xff]
    %v3188 = vld [vmem:[%s3 + $0x370] sm:$0xff]
    %v3189 = vld [vmem:[%s3 + $0x378] sm:$0xff]
    %v3190 = vld [vmem:[%s3 + $0x380] sm:$0xff]
    %v3191 = vld [vmem:[%s3 + $0x388] sm:$0xff]
    %v3192 = vld [vmem:[%s3 + $0x390] sm:$0xff]
    %v3193 = vld [vmem:[%s3 + $0x398] sm:$0xff]
    %v3194 = vld [vmem:[%s3 + $0x3a0] sm:$0xff]
    %v3195 = vld [vmem:[%s3 + $0x3a8] sm:$0xff]
    %v3196 = vld [vmem:[%s3 + $0x3b0] sm:$0xff]
    %v3197 = vld [vmem:[%s3 + $0x3b8] sm:$0xff]
    %v3198 = vld [vmem:[%s3 + $0x3c0] sm:$0xff]
    %v3199 = vld [vmem:[%s3 + $0x3c8] sm:$0xff]
    %v3200 = vld [vmem:[%s3 + $0x3d0] sm:$0xff]
    %v3201 = vld [vmem:[%s3 + $0x3d8] sm:$0xff]
    %v3202 = vld [vmem:[%s3 + $0x3e0] sm:$0xff]
    %v3203 = vld [vmem:[%s3 + $0x3e8] sm:$0xff]
    %v3204 = vld [vmem:[%s3 + $0x3f0] sm:$0xff]
    %v3205 = vld [vmem:[%s3 + $0x3f8] sm:$0xff]
    %v3206 = vld [vmem:[%s3 + $0x400] sm:$0xff]
    %v3207 = vld [vmem:[%s3 + $0x408] sm:$0xff]
    %v3208 = vld [vmem:[%s3 + $0x410] sm:$0xff]
    %v3209 = vld [vmem:[%s3 + $0x418] sm:$0xff]
    %v3210 = vld [vmem:[%s3 + $0x420] sm:$0xff]
    %v3211 = vld [vmem:[%s3 + $0x428] sm:$0xff]
    %v3212 = vld [vmem:[%s3 + $0x430] sm:$0xff]
    %v3213 = vld [vmem:[%s3 + $0x438] sm:$0xff]
    %v3214 = vld [vmem:[%s3 + $0x440] sm:$0xff]
    %v3215 = vld [vmem:[%s3 + $0x448] sm:$0xff]
    %v3216 = vld [vmem:[%s3 + $0x450] sm:$0xff]
    %v3217 = vld [vmem:[%s3 + $0x458] sm:$0xff]
    %v3218 = vld [vmem:[%s3 + $0x460] sm:$0xff]
    %v3219 = vld [vmem:[%s3 + $0x468] sm:$0xff]
    %v3220 = vld [vmem:[%s3 + $0x470] sm:$0xff]
    %v3221 = vld [vmem:[%s3 + $0x478] sm:$0xff]
    %v3222 = vld [vmem:[%s3 + $0x480] sm:$0xff]
    %v3223 = vld [vmem:[%s3 + $0x488] sm:$0xff]
    %v3224 = vld [vmem:[%s3 + $0x490] sm:$0xff]
    %v3225 = vld [vmem:[%s3 + $0x498] sm:$0xff]
    %v3226 = vld [vmem:[%s3 + $0x4a0] sm:$0xff]
    %v3227 = vld [vmem:[%s3 + $0x4a8] sm:$0xff]
    %v3228 = vld [vmem:[%s3 + $0x4b0] sm:$0xff]
    %v3229 = vld [vmem:[%s3 + $0x4b8] sm:$0xff]
    %v3230 = vld [vmem:[%s3 + $0x4c0] sm:$0xff]
    %v3231 = vld [vmem:[%s3 + $0x4c8] sm:$0xff]
    %v3232 = vld [vmem:[%s3 + $0x4d0] sm:$0xff]
    %v3233 = vld [vmem:[%s3 + $0x4d8] sm:$0xff]
    %v3234 = vld [vmem:[%s3 + $0x4e0] sm:$0xff]
    %v3235 = vld [vmem:[%s3 + $0x4e8] sm:$0xff]
    %v3236 = vld [vmem:[%s3 + $0x4f0] sm:$0xff]
    %v3237 = vld [vmem:[%s3 + $0x4f8] sm:$0xff]
    %v3238 = vld [vmem:[%s3 + $0x500] sm:$0xff]
    %v3239 = vld [vmem:[%s3 + $0x508] sm:$0xff]
    %v3240 = vld [vmem:[%s3 + $0x510] sm:$0xff]
    %v3241 = vld [vmem:[%s3 + $0x518] sm:$0xff]
    %v3242 = vld [vmem:[%s3 + $0x520] sm:$0xff]
    %v3243 = vld [vmem:[%s3 + $0x528] sm:$0xff]
    %v3244 = vld [vmem:[%s3 + $0x530] sm:$0xff]
    %v3245 = vld [vmem:[%s3 + $0x538] sm:$0xff]
    %v3246 = vld [vmem:[%s3 + $0x540] sm:$0xff]
    %v3247 = vld [vmem:[%s3 + $0x548] sm:$0xff]
    %v3248 = vld [vmem:[%s3 + $0x550] sm:$0xff]
    %v3249 = vld [vmem:[%s3 + $0x558] sm:$0xff]
    %v3250 = vld [vmem:[%s3 + $0x560] sm:$0xff]
    %v3251 = vld [vmem:[%s3 + $0x568] sm:$0xff]
    %v3252 = vld [vmem:[%s3 + $0x570] sm:$0xff]
    %v3253 = vld [vmem:[%s3 + $0x578] sm:$0xff]
    %v3254 = vld [vmem:[%s3 + $0x580] sm:$0xff]
    %v3255 = vld [vmem:[%s3 + $0x588] sm:$0xff]
    %v3256 = vld [vmem:[%s3 + $0x590] sm:$0xff]
    %v3257 = vld [vmem:[%s3 + $0x598] sm:$0xff]
    %v3258 = vld [vmem:[%s3 + $0x5a0] sm:$0xff]
    %v3259 = vld [vmem:[%s3 + $0x5a8] sm:$0xff]
    %v3260 = vld [vmem:[%s3 + $0x5b0] sm:$0xff]
    %v3261 = vld [vmem:[%s3 + $0x5b8] sm:$0xff]
    %v3262 = vld [vmem:[%s3 + $0x5c0] sm:$0xff]
    %v3263 = vld [vmem:[%s3 + $0x5c8] sm:$0xff]
    %v3264 = vld [vmem:[%s3 + $0x5d0] sm:$0xff]
    %v3265 = vld [vmem:[%s3 + $0x5d8] sm:$0xff]
    %v3266 = vld [vmem:[%s3 + $0x5e0] sm:$0xff]
    %v3267 = vld [vmem:[%s3 + $0x5e8] sm:$0xff]
    %v3268 = vld [vmem:[%s3 + $0x5f0] sm:$0xff]
    %v3269 = vld [vmem:[%s3 + $0x5f8] sm:$0xff]
    %v3270 = vld [vmem:[%s3 + $0x600] sm:$0xff]
    %v3271 = vld [vmem:[%s3 + $0x608] sm:$0xff]
    %v3272 = vld [vmem:[%s3 + $0x610] sm:$0xff]
    %v3273 = vld [vmem:[%s3 + $0x618] sm:$0xff]
    %v3274 = vld [vmem:[%s3 + $0x620] sm:$0xff]
    %v3275 = vld [vmem:[%s3 + $0x628] sm:$0xff]
    %v3276 = vld [vmem:[%s3 + $0x630] sm:$0xff]
    %v3277 = vld [vmem:[%s3 + $0x638] sm:$0xff]
    %v3278 = vld [vmem:[%s3 + $0x640] sm:$0xff]
    %v3279 = vld [vmem:[%s3 + $0x648] sm:$0xff]
    %v3280 = vld [vmem:[%s3 + $0x650] sm:$0xff]
    %v3281 = vld [vmem:[%s3 + $0x658] sm:$0xff]
    %v3282 = vld [vmem:[%s3 + $0x660] sm:$0xff]
    %v3283 = vld [vmem:[%s3 + $0x668] sm:$0xff]
    %v3284 = vld [vmem:[%s3 + $0x670] sm:$0xff]
    %v3285 = vld [vmem:[%s3 + $0x678] sm:$0xff]
    %v3286 = vld [vmem:[%s4] sm:$0xf]
    %v3288 = vlaneseq
    %v3289 = vshrl.u32 %v3288, 7
    %v3290 = vsub.s32 0, %v3289
    %v3291 = vrot.slane %v3286, %v3290
    %v3292 = vlaneseq
    %v3293 = vshrl.u32 %v3292, 7
    %v3294 = vsub.s32 1, %v3293
    %v3295 = vrot.slane %v3286, %v3294
    %v3296 = vlaneseq
    %v3297 = vshrl.u32 %v3296, 7
    %v3298 = vsub.s32 2, %v3297
    %v3299 = vrot.slane %v3286, %v3298
    %v3300 = vlaneseq
    %v3301 = vshrl.u32 %v3300, 7
    %v3302 = vsub.s32 3, %v3301
    %v3303 = vrot.slane %v3286, %v3302
    %v3516 = vunpack.c.l.b16 %v3078
    %v3517 = vunpack.c.h.b16 %v3078
    %v3518 = vunpack.c.l.b16 %v3079
    %v3519 = vunpack.c.h.b16 %v3079
    %v3520 = vunpack.c.l.b16 %v3080
    %v3521 = vunpack.c.h.b16 %v3080
    %v3522 = vunpack.c.l.b16 %v3081
    %v3523 = vunpack.c.h.b16 %v3081
    %v3524 = vunpack.c.l.b16 %v3082
    %v3525 = vunpack.c.h.b16 %v3082
    %v3526 = vunpack.c.l.b16 %v3083
    %v3527 = vunpack.c.h.b16 %v3083
    %v3528 = vunpack.c.l.b16 %v3084
    %v3529 = vunpack.c.h.b16 %v3084
    %v3530 = vunpack.c.l.b16 %v3085
    %v3531 = vunpack.c.h.b16 %v3085
    %v3532 = vunpack.c.l.b16 %v3086
    %v3533 = vunpack.c.h.b16 %v3086
    %v3534 = vunpack.c.l.b16 %v3087
    %v3535 = vunpack.c.h.b16 %v3087
    %v3536 = vunpack.c.l.b16 %v3088
    %v3537 = vunpack.c.h.b16 %v3088
    %v3538 = vunpack.c.l.b16 %v3089
    %v3539 = vunpack.c.h.b16 %v3089
    %v3540 = vunpack.c.l.b16 %v3090
    %v3541 = vunpack.c.h.b16 %v3090
    %v3542 = vunpack.c.l.b16 %v3091
    %v3543 = vunpack.c.h.b16 %v3091
    %v3544 = vunpack.c.l.b16 %v3092
    %v3545 = vunpack.c.h.b16 %v3092
    %v3546 = vunpack.c.l.b16 %v3093
    %v3547 = vunpack.c.h.b16 %v3093
    %v3548 = vunpack.c.l.b16 %v3094
    %v3549 = vunpack.c.h.b16 %v3094
    %v3550 = vunpack.c.l.b16 %v3095
    %v3551 = vunpack.c.h.b16 %v3095
    %v3552 = vunpack.c.l.b16 %v3096
    %v3553 = vunpack.c.h.b16 %v3096
    %v3554 = vunpack.c.l.b16 %v3097
    %v3555 = vunpack.c.h.b16 %v3097
    %v3556 = vunpack.c.l.b16 %v3098
    %v3557 = vunpack.c.h.b16 %v3098
    %v3558 = vunpack.c.l.b16 %v3099
    %v3559 = vunpack.c.h.b16 %v3099
    %v3560 = vunpack.c.l.b16 %v3100
    %v3561 = vunpack.c.h.b16 %v3100
    %v3562 = vunpack.c.l.b16 %v3101
    %v3563 = vunpack.c.h.b16 %v3101
    %v3564 = vunpack.c.l.b16 %v3102
    %v3565 = vunpack.c.h.b16 %v3102
    %v3566 = vunpack.c.l.b16 %v3103
    %v3567 = vunpack.c.h.b16 %v3103
    %v3568 = vunpack.c.l.b16 %v3104
    %v3569 = vunpack.c.h.b16 %v3104
    %v3570 = vunpack.c.l.b16 %v3105
    %v3571 = vunpack.c.h.b16 %v3105
    %v3572 = vunpack.c.l.b16 %v3106
    %v3573 = vunpack.c.h.b16 %v3106
    %v3574 = vunpack.c.l.b16 %v3107
    %v3575 = vunpack.c.h.b16 %v3107
    %v3576 = vunpack.c.l.b16 %v3108
    %v3577 = vunpack.c.h.b16 %v3108
    %v3578 = vunpack.c.l.b16 %v3109
    %v3579 = vunpack.c.h.b16 %v3109
    %v3580 = vunpack.c.l.b16 %v3110
    %v3581 = vunpack.c.h.b16 %v3110
    %v3582 = vunpack.c.l.b16 %v3111
    %v3583 = vunpack.c.h.b16 %v3111
    %v3584 = vunpack.c.l.b16 %v3112
    %v3585 = vunpack.c.h.b16 %v3112
    %v3586 = vunpack.c.l.b16 %v3113
    %v3587 = vunpack.c.h.b16 %v3113
    %v3588 = vunpack.c.l.b16 %v3114
    %v3589 = vunpack.c.h.b16 %v3114
    %v3590 = vunpack.c.l.b16 %v3115
    %v3591 = vunpack.c.h.b16 %v3115
    %v3592 = vunpack.c.l.b16 %v3116
    %v3593 = vunpack.c.h.b16 %v3116
    %v3594 = vunpack.c.l.b16 %v3117
    %v3595 = vunpack.c.h.b16 %v3117
    %v3596 = vunpack.c.l.b16 %v3118
    %v3597 = vunpack.c.h.b16 %v3118
    %v3598 = vunpack.c.l.b16 %v3119
    %v3599 = vunpack.c.h.b16 %v3119
    %v3600 = vunpack.c.l.b16 %v3120
    %v3601 = vunpack.c.h.b16 %v3120
    %v3602 = vunpack.c.l.b16 %v3121
    %v3603 = vunpack.c.h.b16 %v3121
    %v3604 = vunpack.c.l.b16 %v3122
    %v3605 = vunpack.c.h.b16 %v3122
    %v3606 = vunpack.c.l.b16 %v3123
    %v3607 = vunpack.c.h.b16 %v3123
    %v3608 = vunpack.c.l.b16 %v3124
    %v3609 = vunpack.c.h.b16 %v3124
    %v3610 = vunpack.c.l.b16 %v3125
    %v3611 = vunpack.c.h.b16 %v3125
    %v3612 = vunpack.c.l.b16 %v3126
    %v3613 = vunpack.c.h.b16 %v3126
    %v3614 = vunpack.c.l.b16 %v3127
    %v3615 = vunpack.c.h.b16 %v3127
    %v3616 = vunpack.c.l.b16 %v3128
    %v3617 = vunpack.c.h.b16 %v3128
    %v3618 = vunpack.c.l.b16 %v3129
    %v3619 = vunpack.c.h.b16 %v3129
    %v3620 = vunpack.c.l.b16 %v3130
    %v3621 = vunpack.c.h.b16 %v3130
    %v3622 = vunpack.c.l.b16 %v3131
    %v3623 = vunpack.c.h.b16 %v3131
    %v3624 = vunpack.c.l.b16 %v3132
    %v3625 = vunpack.c.h.b16 %v3132
    %v3626 = vunpack.c.l.b16 %v3133
    %v3627 = vunpack.c.h.b16 %v3133
    %v3628 = vunpack.c.l.b16 %v3134
    %v3629 = vunpack.c.h.b16 %v3134
    %v3630 = vunpack.c.l.b16 %v3135
    %v3631 = vunpack.c.h.b16 %v3135
    %v3632 = vunpack.c.l.b16 %v3136
    %v3633 = vunpack.c.h.b16 %v3136
    %v3634 = vunpack.c.l.b16 %v3137
    %v3635 = vunpack.c.h.b16 %v3137
    %v3636 = vunpack.c.l.b16 %v3138
    %v3637 = vunpack.c.h.b16 %v3138
    %v3638 = vunpack.c.l.b16 %v3139
    %v3639 = vunpack.c.h.b16 %v3139
    %v3640 = vunpack.c.l.b16 %v3140
    %v3641 = vunpack.c.h.b16 %v3140
    %v3642 = vunpack.c.l.b16 %v3141
    %v3643 = vunpack.c.h.b16 %v3141
    %v3644 = vunpack.c.l.b16 %v3142
    %v3645 = vunpack.c.h.b16 %v3142
    %v3646 = vunpack.c.l.b16 %v3143
    %v3647 = vunpack.c.h.b16 %v3143
    %v3648 = vunpack.c.l.b16 %v3144
    %v3649 = vunpack.c.h.b16 %v3144
    %v3650 = vunpack.c.l.b16 %v3145
    %v3651 = vunpack.c.h.b16 %v3145
    %v3652 = vunpack.c.l.b16 %v3146
    %v3653 = vunpack.c.h.b16 %v3146
    %v3654 = vunpack.c.l.b16 %v3147
    %v3655 = vunpack.c.h.b16 %v3147
    %v3656 = vunpack.c.l.b16 %v3148
    %v3657 = vunpack.c.h.b16 %v3148
    %v3658 = vunpack.c.l.b16 %v3149
    %v3659 = vunpack.c.h.b16 %v3149
    %v3660 = vunpack.c.l.b16 %v3150
    %v3661 = vunpack.c.h.b16 %v3150
    %v3662 = vunpack.c.l.b16 %v3151
    %v3663 = vunpack.c.h.b16 %v3151
    %v3664 = vunpack.c.l.b16 %v3152
    %v3665 = vunpack.c.h.b16 %v3152
    %v3666 = vunpack.c.l.b16 %v3153
    %v3667 = vunpack.c.h.b16 %v3153
    %v3668 = vunpack.c.l.b16 %v3154
    %v3669 = vunpack.c.h.b16 %v3154
    %v3670 = vunpack.c.l.b16 %v3155
    %v3671 = vunpack.c.h.b16 %v3155
    %v3672 = vunpack.c.l.b16 %v3156
    %v3673 = vunpack.c.h.b16 %v3156
    %v3674 = vunpack.c.l.b16 %v3157
    %v3675 = vunpack.c.h.b16 %v3157
    %v3676 = vunpack.c.l.b16 %v3158
    %v3677 = vunpack.c.h.b16 %v3158
    %v3678 = vunpack.c.l.b16 %v3159
    %v3679 = vunpack.c.h.b16 %v3159
    %v3680 = vunpack.c.l.b16 %v3160
    %v3681 = vunpack.c.h.b16 %v3160
    %v3682 = vunpack.c.l.b16 %v3161
    %v3683 = vunpack.c.h.b16 %v3161
    %v3684 = vunpack.c.l.b16 %v3162
    %v3685 = vunpack.c.h.b16 %v3162
    %v3686 = vunpack.c.l.b16 %v3163
    %v3687 = vunpack.c.h.b16 %v3163
    %v3688 = vunpack.c.l.b16 %v3164
    %v3689 = vunpack.c.h.b16 %v3164
    %v3690 = vunpack.c.l.b16 %v3165
    %v3691 = vunpack.c.h.b16 %v3165
    %v3692 = vunpack.c.l.b16 %v3166
    %v3693 = vunpack.c.h.b16 %v3166
    %v3694 = vunpack.c.l.b16 %v3167
    %v3695 = vunpack.c.h.b16 %v3167
    %v3696 = vunpack.c.l.b16 %v3168
    %v3697 = vunpack.c.h.b16 %v3168
    %v3698 = vunpack.c.l.b16 %v3169
    %v3699 = vunpack.c.h.b16 %v3169
    %v3700 = vunpack.c.l.b16 %v3170
    %v3701 = vunpack.c.h.b16 %v3170
    %v3702 = vunpack.c.l.b16 %v3171
    %v3703 = vunpack.c.h.b16 %v3171
    %v3704 = vunpack.c.l.b16 %v3172
    %v3705 = vunpack.c.h.b16 %v3172
    %v3706 = vunpack.c.l.b16 %v3173
    %v3707 = vunpack.c.h.b16 %v3173
    %v3708 = vunpack.c.l.b16 %v3174
    %v3709 = vunpack.c.h.b16 %v3174
    %v3710 = vunpack.c.l.b16 %v3175
    %v3711 = vunpack.c.h.b16 %v3175
    %v3712 = vunpack.c.l.b16 %v3176
    %v3713 = vunpack.c.h.b16 %v3176
    %v3714 = vunpack.c.l.b16 %v3177
    %v3715 = vunpack.c.h.b16 %v3177
    %v3716 = vunpack.c.l.b16 %v3178
    %v3717 = vunpack.c.h.b16 %v3178
    %v3718 = vunpack.c.l.b16 %v3179
    %v3719 = vunpack.c.h.b16 %v3179
    %v3720 = vunpack.c.l.b16 %v3180
    %v3721 = vunpack.c.h.b16 %v3180
    %v3722 = vunpack.c.l.b16 %v3181
    %v3723 = vunpack.c.h.b16 %v3181
    %v3724 = vunpack.c.l.b16 %v3182
    %v3725 = vunpack.c.h.b16 %v3182
    %v3726 = vunpack.c.l.b16 %v3183
    %v3727 = vunpack.c.h.b16 %v3183
    %v3728 = vunpack.c.l.b16 %v3184
    %v3729 = vunpack.c.h.b16 %v3184
    %v3730 = vunpack.c.l.b16 %v3185
    %v3731 = vunpack.c.h.b16 %v3185
    %v3732 = vunpack.c.l.b16 %v3186
    %v3733 = vunpack.c.h.b16 %v3186
    %v3734 = vunpack.c.l.b16 %v3187
    %v3735 = vunpack.c.h.b16 %v3187
    %v3736 = vunpack.c.l.b16 %v3188
    %v3737 = vunpack.c.h.b16 %v3188
    %v3738 = vunpack.c.l.b16 %v3189
    %v3739 = vunpack.c.h.b16 %v3189
    %v3740 = vunpack.c.l.b16 %v3190
    %v3741 = vunpack.c.h.b16 %v3190
    %v3742 = vunpack.c.l.b16 %v3191
    %v3743 = vunpack.c.h.b16 %v3191
    %v3744 = vunpack.c.l.b16 %v3192
    %v3745 = vunpack.c.h.b16 %v3192
    %v3746 = vunpack.c.l.b16 %v3193
    %v3747 = vunpack.c.h.b16 %v3193
    %v3748 = vunpack.c.l.b16 %v3194
    %v3749 = vunpack.c.h.b16 %v3194
    %v3750 = vunpack.c.l.b16 %v3195
    %v3751 = vunpack.c.h.b16 %v3195
    %v3752 = vunpack.c.l.b16 %v3196
    %v3753 = vunpack.c.h.b16 %v3196
    %v3754 = vunpack.c.l.b16 %v3197
    %v3755 = vunpack.c.h.b16 %v3197
    %v3756 = vunpack.c.l.b16 %v3198
    %v3757 = vunpack.c.h.b16 %v3198
    %v3758 = vunpack.c.l.b16 %v3199
    %v3759 = vunpack.c.h.b16 %v3199
    %v3760 = vunpack.c.l.b16 %v3200
    %v3761 = vunpack.c.h.b16 %v3200
    %v3762 = vunpack.c.l.b16 %v3201
    %v3763 = vunpack.c.h.b16 %v3201
    %v3764 = vunpack.c.l.b16 %v3202
    %v3765 = vunpack.c.h.b16 %v3202
    %v3766 = vunpack.c.l.b16 %v3203
    %v3767 = vunpack.c.h.b16 %v3203
    %v3768 = vunpack.c.l.b16 %v3204
    %v3769 = vunpack.c.h.b16 %v3204
    %v3770 = vunpack.c.l.b16 %v3205
    %v3771 = vunpack.c.h.b16 %v3205
    %v3772 = vunpack.c.l.b16 %v3206
    %v3773 = vunpack.c.h.b16 %v3206
    %v3774 = vunpack.c.l.b16 %v3207
    %v3775 = vunpack.c.h.b16 %v3207
    %v3776 = vunpack.c.l.b16 %v3208
    %v3777 = vunpack.c.h.b16 %v3208
    %v3778 = vunpack.c.l.b16 %v3209
    %v3779 = vunpack.c.h.b16 %v3209
    %v3780 = vunpack.c.l.b16 %v3210
    %v3781 = vunpack.c.h.b16 %v3210
    %v3782 = vunpack.c.l.b16 %v3211
    %v3783 = vunpack.c.h.b16 %v3211
    %v3784 = vunpack.c.l.b16 %v3212
    %v3785 = vunpack.c.h.b16 %v3212
    %v3786 = vunpack.c.l.b16 %v3213
    %v3787 = vunpack.c.h.b16 %v3213
    %v3788 = vunpack.c.l.b16 %v3214
    %v3789 = vunpack.c.h.b16 %v3214
    %v3790 = vunpack.c.l.b16 %v3215
    %v3791 = vunpack.c.h.b16 %v3215
    %v3792 = vunpack.c.l.b16 %v3216
    %v3793 = vunpack.c.h.b16 %v3216
    %v3794 = vunpack.c.l.b16 %v3217
    %v3795 = vunpack.c.h.b16 %v3217
    %v3796 = vunpack.c.l.b16 %v3218
    %v3797 = vunpack.c.h.b16 %v3218
    %v3798 = vunpack.c.l.b16 %v3219
    %v3799 = vunpack.c.h.b16 %v3219
    %v3800 = vunpack.c.l.b16 %v3220
    %v3801 = vunpack.c.h.b16 %v3220
    %v3802 = vunpack.c.l.b16 %v3221
    %v3803 = vunpack.c.h.b16 %v3221
    %v3804 = vunpack.c.l.b16 %v3222
    %v3805 = vunpack.c.h.b16 %v3222
    %v3806 = vunpack.c.l.b16 %v3223
    %v3807 = vunpack.c.h.b16 %v3223
    %v3808 = vunpack.c.l.b16 %v3224
    %v3809 = vunpack.c.h.b16 %v3224
    %v3810 = vunpack.c.l.b16 %v3225
    %v3811 = vunpack.c.h.b16 %v3225
    %v3812 = vunpack.c.l.b16 %v3226
    %v3813 = vunpack.c.h.b16 %v3226
    %v3814 = vunpack.c.l.b16 %v3227
    %v3815 = vunpack.c.h.b16 %v3227
    %v3816 = vunpack.c.l.b16 %v3228
    %v3817 = vunpack.c.h.b16 %v3228
    %v3818 = vunpack.c.l.b16 %v3229
    %v3819 = vunpack.c.h.b16 %v3229
    %v3820 = vunpack.c.l.b16 %v3230
    %v3821 = vunpack.c.h.b16 %v3230
    %v3822 = vunpack.c.l.b16 %v3231
    %v3823 = vunpack.c.h.b16 %v3231
    %v3824 = vunpack.c.l.b16 %v3232
    %v3825 = vunpack.c.h.b16 %v3232
    %v3826 = vunpack.c.l.b16 %v3233
    %v3827 = vunpack.c.h.b16 %v3233
    %v3828 = vunpack.c.l.b16 %v3234
    %v3829 = vunpack.c.h.b16 %v3234
    %v3830 = vunpack.c.l.b16 %v3235
    %v3831 = vunpack.c.h.b16 %v3235
    %v3832 = vunpack.c.l.b16 %v3236
    %v3833 = vunpack.c.h.b16 %v3236
    %v3834 = vunpack.c.l.b16 %v3237
    %v3835 = vunpack.c.h.b16 %v3237
    %v3836 = vunpack.c.l.b16 %v3238
    %v3837 = vunpack.c.h.b16 %v3238
    %v3838 = vunpack.c.l.b16 %v3239
    %v3839 = vunpack.c.h.b16 %v3239
    %v3840 = vunpack.c.l.b16 %v3240
    %v3841 = vunpack.c.h.b16 %v3240
    %v3842 = vunpack.c.l.b16 %v3241
    %v3843 = vunpack.c.h.b16 %v3241
    %v3844 = vunpack.c.l.b16 %v3242
    %v3845 = vunpack.c.h.b16 %v3242
    %v3846 = vunpack.c.l.b16 %v3243
    %v3847 = vunpack.c.h.b16 %v3243
    %v3848 = vunpack.c.l.b16 %v3244
    %v3849 = vunpack.c.h.b16 %v3244
    %v3850 = vunpack.c.l.b16 %v3245
    %v3851 = vunpack.c.h.b16 %v3245
    %v3852 = vunpack.c.l.b16 %v3246
    %v3853 = vunpack.c.h.b16 %v3246
    %v3854 = vunpack.c.l.b16 %v3247
    %v3855 = vunpack.c.h.b16 %v3247
    %v3856 = vunpack.c.l.b16 %v3248
    %v3857 = vunpack.c.h.b16 %v3248
    %v3858 = vunpack.c.l.b16 %v3249
    %v3859 = vunpack.c.h.b16 %v3249
    %v3860 = vunpack.c.l.b16 %v3250
    %v3861 = vunpack.c.h.b16 %v3250
    %v3862 = vunpack.c.l.b16 %v3251
    %v3863 = vunpack.c.h.b16 %v3251
    %v3864 = vunpack.c.l.b16 %v3252
    %v3865 = vunpack.c.h.b16 %v3252
    %v3866 = vunpack.c.l.b16 %v3253
    %v3867 = vunpack.c.h.b16 %v3253
    %v3868 = vunpack.c.l.b16 %v3254
    %v3869 = vunpack.c.h.b16 %v3254
    %v3870 = vunpack.c.l.b16 %v3255
    %v3871 = vunpack.c.h.b16 %v3255
    %v3872 = vunpack.c.l.b16 %v3256
    %v3873 = vunpack.c.h.b16 %v3256
    %v3874 = vunpack.c.l.b16 %v3257
    %v3875 = vunpack.c.h.b16 %v3257
    %v3876 = vunpack.c.l.b16 %v3258
    %v3877 = vunpack.c.h.b16 %v3258
    %v3878 = vunpack.c.l.b16 %v3259
    %v3879 = vunpack.c.h.b16 %v3259
    %v3880 = vunpack.c.l.b16 %v3260
    %v3881 = vunpack.c.h.b16 %v3260
    %v3882 = vunpack.c.l.b16 %v3261
    %v3883 = vunpack.c.h.b16 %v3261
    %v3884 = vunpack.c.l.b16 %v3262
    %v3885 = vunpack.c.h.b16 %v3262
    %v3886 = vunpack.c.l.b16 %v3263
    %v3887 = vunpack.c.h.b16 %v3263
    %v3888 = vunpack.c.l.b16 %v3264
    %v3889 = vunpack.c.h.b16 %v3264
    %v3890 = vunpack.c.l.b16 %v3265
    %v3891 = vunpack.c.h.b16 %v3265
    %v3892 = vunpack.c.l.b16 %v3266
    %v3893 = vunpack.c.h.b16 %v3266
    %v3894 = vunpack.c.l.b16 %v3267
    %v3895 = vunpack.c.h.b16 %v3267
    %v3896 = vunpack.c.l.b16 %v3268
    %v3897 = vunpack.c.h.b16 %v3268
    %v3898 = vunpack.c.l.b16 %v3269
    %v3899 = vunpack.c.h.b16 %v3269
    %v3900 = vunpack.c.l.b16 %v3270
    %v3901 = vunpack.c.h.b16 %v3270
    %v3902 = vunpack.c.l.b16 %v3271
    %v3903 = vunpack.c.h.b16 %v3271
    %v3904 = vunpack.c.l.b16 %v3272
    %v3905 = vunpack.c.h.b16 %v3272
    %v3906 = vunpack.c.l.b16 %v3273
    %v3907 = vunpack.c.h.b16 %v3273
    %v3908 = vunpack.c.l.b16 %v3274
    %v3909 = vunpack.c.h.b16 %v3274
    %v3910 = vunpack.c.l.b16 %v3275
    %v3911 = vunpack.c.h.b16 %v3275
    %v3912 = vunpack.c.l.b16 %v3276
    %v3913 = vunpack.c.h.b16 %v3276
    %v3914 = vunpack.c.l.b16 %v3277
    %v3915 = vunpack.c.h.b16 %v3277
    %v3916 = vunpack.c.l.b16 %v3278
    %v3917 = vunpack.c.h.b16 %v3278
    %v3918 = vunpack.c.l.b16 %v3279
    %v3919 = vunpack.c.h.b16 %v3279
    %v3920 = vunpack.c.l.b16 %v3280
    %v3921 = vunpack.c.h.b16 %v3280
    %v3922 = vunpack.c.l.b16 %v3281
    %v3923 = vunpack.c.h.b16 %v3281
    %v3924 = vunpack.c.l.b16 %v3282
    %v3925 = vunpack.c.h.b16 %v3282
    %v3926 = vunpack.c.l.b16 %v3283
    %v3927 = vunpack.c.h.b16 %v3283
    %v3928 = vunpack.c.l.b16 %v3284
    %v3929 = vunpack.c.h.b16 %v3284
    %v3930 = vunpack.c.l.b16 %v3285
    %v3931 = vunpack.c.h.b16 %v3285
    %v3932 = vpack.c.b16 %v3520, %v3516
    %v3933 = vpack.c.b16 %v3521, %v3517
    %v3934 = vpack.c.b16 %v3522, %v3518
    %v3935 = vpack.c.b16 %v3523, %v3519
    %v3936 = vpack.c.b16 %v3528, %v3524
    %v3937 = vpack.c.b16 %v3529, %v3525
    %v3938 = vpack.c.b16 %v3530, %v3526
    %v3939 = vpack.c.b16 %v3531, %v3527
    %v3940 = vpack.c.b16 %v3536, %v3532
    %v3941 = vpack.c.b16 %v3537, %v3533
    %v3942 = vpack.c.b16 %v3538, %v3534
    %v3943 = vpack.c.b16 %v3539, %v3535
    %v3944 = vpack.c.b16 %v3544, %v3540
    %v3945 = vpack.c.b16 %v3545, %v3541
    %v3946 = vpack.c.b16 %v3546, %v3542
    %v3947 = vpack.c.b16 %v3547, %v3543
    %v3948 = vpack.c.b16 %v3552, %v3548
    %v3949 = vpack.c.b16 %v3553, %v3549
    %v3950 = vpack.c.b16 %v3554, %v3550
    %v3951 = vpack.c.b16 %v3555, %v3551
    %v3952 = vpack.c.b16 %v3560, %v3556
    %v3953 = vpack.c.b16 %v3561, %v3557
    %v3954 = vpack.c.b16 %v3562, %v3558
    %v3955 = vpack.c.b16 %v3563, %v3559
    %v3956 = vpack.c.b16 %v3568, %v3564
    %v3957 = vpack.c.b16 %v3569, %v3565
    %v3958 = vpack.c.b16 %v3570, %v3566
    %v3959 = vpack.c.b16 %v3571, %v3567
    %v3960 = vpack.c.b16 %v3576, %v3572
    %v3961 = vpack.c.b16 %v3577, %v3573
    %v3962 = vpack.c.b16 %v3578, %v3574
    %v3963 = vpack.c.b16 %v3579, %v3575
    %v3964 = vpack.c.b16 %v3584, %v3580
    %v3965 = vpack.c.b16 %v3585, %v3581
    %v3966 = vpack.c.b16 %v3586, %v3582
    %v3967 = vpack.c.b16 %v3587, %v3583
    %v3968 = vpack.c.b16 %v3592, %v3588
    %v3969 = vpack.c.b16 %v3593, %v3589
    %v3970 = vpack.c.b16 %v3594, %v3590
    %v3971 = vpack.c.b16 %v3595, %v3591
    %v3972 = vpack.c.b16 %v3600, %v3596
    %v3973 = vpack.c.b16 %v3601, %v3597
    %v3974 = vpack.c.b16 %v3602, %v3598
    %v3975 = vpack.c.b16 %v3603, %v3599
    %v3976 = vpack.c.b16 %v3608, %v3604
    %v3977 = vpack.c.b16 %v3609, %v3605
    %v3978 = vpack.c.b16 %v3610, %v3606
    %v3979 = vpack.c.b16 %v3611, %v3607
    %v3980 = vpack.c.b16 %v3616, %v3612
    %v3981 = vpack.c.b16 %v3617, %v3613
    %v3982 = vpack.c.b16 %v3618, %v3614
    %v3983 = vpack.c.b16 %v3619, %v3615
    %v3984 = vpack.c.b16 %v3624, %v3620
    %v3985 = vpack.c.b16 %v3625, %v3621
    %v3986 = vpack.c.b16 %v3626, %v3622
    %v3987 = vpack.c.b16 %v3627, %v3623
    %v3988 = vpack.c.b16 %v3632, %v3628
    %v3989 = vpack.c.b16 %v3633, %v3629
    %v3990 = vpack.c.b16 %v3634, %v3630
    %v3991 = vpack.c.b16 %v3635, %v3631
    %v3992 = vpack.c.b16 %v3640, %v3636
    %v3993 = vpack.c.b16 %v3641, %v3637
    %v3994 = vpack.c.b16 %v3642, %v3638
    %v3995 = vpack.c.b16 %v3643, %v3639
    %v3996 = vpack.c.b16 %v3648, %v3644
    %v3997 = vpack.c.b16 %v3649, %v3645
    %v3998 = vpack.c.b16 %v3650, %v3646
    %v3999 = vpack.c.b16 %v3651, %v3647
    %v4000 = vpack.c.b16 %v3656, %v3652
    %v4001 = vpack.c.b16 %v3657, %v3653
    %v4002 = vpack.c.b16 %v3658, %v3654
    %v4003 = vpack.c.b16 %v3659, %v3655
    %v4004 = vpack.c.b16 %v3664, %v3660
    %v4005 = vpack.c.b16 %v3665, %v3661
    %v4006 = vpack.c.b16 %v3666, %v3662
    %v4007 = vpack.c.b16 %v3667, %v3663
    %v4008 = vpack.c.b16 %v3672, %v3668
    %v4009 = vpack.c.b16 %v3673, %v3669
    %v4010 = vpack.c.b16 %v3674, %v3670
    %v4011 = vpack.c.b16 %v3675, %v3671
    %v4012 = vpack.c.b16 %v3680, %v3676
    %v4013 = vpack.c.b16 %v3681, %v3677
    %v4014 = vpack.c.b16 %v3682, %v3678
    %v4015 = vpack.c.b16 %v3683, %v3679
    %v4016 = vpack.c.b16 %v3688, %v3684
    %v4017 = vpack.c.b16 %v3689, %v3685
    %v4018 = vpack.c.b16 %v3690, %v3686
    %v4019 = vpack.c.b16 %v3691, %v3687
    %v4020 = vpack.c.b16 %v3696, %v3692
    %v4021 = vpack.c.b16 %v3697, %v3693
    %v4022 = vpack.c.b16 %v3698, %v3694
    %v4023 = vpack.c.b16 %v3699, %v3695
    %v4024 = vpack.c.b16 %v3704, %v3700
    %v4025 = vpack.c.b16 %v3705, %v3701
    %v4026 = vpack.c.b16 %v3706, %v3702
    %v4027 = vpack.c.b16 %v3707, %v3703
    %v4028 = vpack.c.b16 %v3712, %v3708
    %v4029 = vpack.c.b16 %v3713, %v3709
    %v4030 = vpack.c.b16 %v3714, %v3710
    %v4031 = vpack.c.b16 %v3715, %v3711
    %v4032 = vpack.c.b16 %v3720, %v3716
    %v4033 = vpack.c.b16 %v3721, %v3717
    %v4034 = vpack.c.b16 %v3722, %v3718
    %v4035 = vpack.c.b16 %v3723, %v3719
    %v4036 = vpack.c.b16 %v3728, %v3724
    %v4037 = vpack.c.b16 %v3729, %v3725
    %v4038 = vpack.c.b16 %v3730, %v3726
    %v4039 = vpack.c.b16 %v3731, %v3727
    %v4040 = vpack.c.b16 %v3736, %v3732
    %v4041 = vpack.c.b16 %v3737, %v3733
    %v4042 = vpack.c.b16 %v3738, %v3734
    %v4043 = vpack.c.b16 %v3739, %v3735
    %v4044 = vpack.c.b16 %v3744, %v3740
    %v4045 = vpack.c.b16 %v3745, %v3741
    %v4046 = vpack.c.b16 %v3746, %v3742
    %v4047 = vpack.c.b16 %v3747, %v3743
    %v4048 = vpack.c.b16 %v3752, %v3748
    %v4049 = vpack.c.b16 %v3753, %v3749
    %v4050 = vpack.c.b16 %v3754, %v3750
    %v4051 = vpack.c.b16 %v3755, %v3751
    %v4052 = vpack.c.b16 %v3760, %v3756
    %v4053 = vpack.c.b16 %v3761, %v3757
    %v4054 = vpack.c.b16 %v3762, %v3758
    %v4055 = vpack.c.b16 %v3763, %v3759
    %v4056 = vpack.c.b16 %v3768, %v3764
    %v4057 = vpack.c.b16 %v3769, %v3765
    %v4058 = vpack.c.b16 %v3770, %v3766
    %v4059 = vpack.c.b16 %v3771, %v3767
    %v4060 = vpack.c.b16 %v3776, %v3772
    %v4061 = vpack.c.b16 %v3777, %v3773
    %v4062 = vpack.c.b16 %v3778, %v3774
    %v4063 = vpack.c.b16 %v3779, %v3775
    %v4064 = vpack.c.b16 %v3784, %v3780
    %v4065 = vpack.c.b16 %v3785, %v3781
    %v4066 = vpack.c.b16 %v3786, %v3782
    %v4067 = vpack.c.b16 %v3787, %v3783
    %v4068 = vpack.c.b16 %v3792, %v3788
    %v4069 = vpack.c.b16 %v3793, %v3789
    %v4070 = vpack.c.b16 %v3794, %v3790
    %v4071 = vpack.c.b16 %v3795, %v3791
    %v4072 = vpack.c.b16 %v3800, %v3796
    %v4073 = vpack.c.b16 %v3801, %v3797
    %v4074 = vpack.c.b16 %v3802, %v3798
    %v4075 = vpack.c.b16 %v3803, %v3799
    %v4076 = vpack.c.b16 %v3808, %v3804
    %v4077 = vpack.c.b16 %v3809, %v3805
    %v4078 = vpack.c.b16 %v3810, %v3806
    %v4079 = vpack.c.b16 %v3811, %v3807
    %v4080 = vpack.c.b16 %v3816, %v3812
    %v4081 = vpack.c.b16 %v3817, %v3813
    %v4082 = vpack.c.b16 %v3818, %v3814
    %v4083 = vpack.c.b16 %v3819, %v3815
    %v4084 = vpack.c.b16 %v3824, %v3820
    %v4085 = vpack.c.b16 %v3825, %v3821
    %v4086 = vpack.c.b16 %v3826, %v3822
    %v4087 = vpack.c.b16 %v3827, %v3823
    %v4088 = vpack.c.b16 %v3832, %v3828
    %v4089 = vpack.c.b16 %v3833, %v3829
    %v4090 = vpack.c.b16 %v3834, %v3830
    %v4091 = vpack.c.b16 %v3835, %v3831
    %v4092 = vpack.c.b16 %v3840, %v3836
    %v4093 = vpack.c.b16 %v3841, %v3837
    %v4094 = vpack.c.b16 %v3842, %v3838
    %v4095 = vpack.c.b16 %v3843, %v3839
    %v4096 = vpack.c.b16 %v3848, %v3844
    %v4097 = vpack.c.b16 %v3849, %v3845
    %v4098 = vpack.c.b16 %v3850, %v3846
    %v4099 = vpack.c.b16 %v3851, %v3847
    %v4100 = vpack.c.b16 %v3856, %v3852
    %v4101 = vpack.c.b16 %v3857, %v3853
    %v4102 = vpack.c.b16 %v3858, %v3854
    %v4103 = vpack.c.b16 %v3859, %v3855
    %v4104 = vpack.c.b16 %v3864, %v3860
    %v4105 = vpack.c.b16 %v3865, %v3861
    %v4106 = vpack.c.b16 %v3866, %v3862
    %v4107 = vpack.c.b16 %v3867, %v3863
    %v4108 = vpack.c.b16 %v3872, %v3868
    %v4109 = vpack.c.b16 %v3873, %v3869
    %v4110 = vpack.c.b16 %v3874, %v3870
    %v4111 = vpack.c.b16 %v3875, %v3871
    %v4112 = vpack.c.b16 %v3880, %v3876
    %v4113 = vpack.c.b16 %v3881, %v3877
    %v4114 = vpack.c.b16 %v3882, %v3878
    %v4115 = vpack.c.b16 %v3883, %v3879
    %v4116 = vpack.c.b16 %v3888, %v3884
    %v4117 = vpack.c.b16 %v3889, %v3885
    %v4118 = vpack.c.b16 %v3890, %v3886
    %v4119 = vpack.c.b16 %v3891, %v3887
    %v4120 = vpack.c.b16 %v3896, %v3892
    %v4121 = vpack.c.b16 %v3897, %v3893
    %v4122 = vpack.c.b16 %v3898, %v3894
    %v4123 = vpack.c.b16 %v3899, %v3895
    %v4124 = vpack.c.b16 %v3904, %v3900
    %v4125 = vpack.c.b16 %v3905, %v3901
    %v4126 = vpack.c.b16 %v3906, %v3902
    %v4127 = vpack.c.b16 %v3907, %v3903
    %v4128 = vpack.c.b16 %v3912, %v3908
    %v4129 = vpack.c.b16 %v3913, %v3909
    %v4130 = vpack.c.b16 %v3914, %v3910
    %v4131 = vpack.c.b16 %v3915, %v3911
    %v4132 = vpack.c.b16 %v3920, %v3916
    %v4133 = vpack.c.b16 %v3921, %v3917
    %v4134 = vpack.c.b16 %v3922, %v3918
    %v4135 = vpack.c.b16 %v3923, %v3919
    %v4136 = vpack.c.b16 %v3928, %v3924
    %v4137 = vpack.c.b16 %v3929, %v3925
    %v4138 = vpack.c.b16 %v3930, %v3926
    %v4139 = vpack.c.b16 %v3931, %v3927
    %v4349 = vsel %vm2394, %v3077, 0
    %4351 = vmatprep.subr.bf16.mxu0 %v3933
    %4352 = vmatpush1.bf16.msra.mxu0 %v3932
    %4353 = vmatprep.subr.bf16.mxu0 %v3937
    %4354 = vmatpush1.bf16.msra.mxu0 %v3936
    %4355 = vmatprep.subr.bf16.mxu0 %v3941
    %4356 = vmatpush1.bf16.msra.mxu0 %v3940
    %4357 = vmatprep.subr.bf16.mxu0 %v3945
    %4358 = vmatpush1.bf16.msra.mxu0 %v3944
    %4359 = vmatprep.subr.bf16.mxu0 %v3949
    %4360 = vmatpush1.bf16.msra.mxu0 %v3948
    %4361 = vmatprep.subr.bf16.mxu0 %v3953
    %4362 = vmatpush1.bf16.msra.mxu0 %v3952
    %4363 = vmatprep.subr.bf16.mxu0 %v3957
    %4364 = vmatpush1.bf16.msra.mxu0 %v3956
    %4365 = vmatprep.subr.bf16.mxu0 %v3961
    %4366 = vmatpush1.bf16.msra.mxu0 %v3960
    %4367 = vmatprep.subr.bf16.mxu0 %v3965
    %4368 = vmatpush1.bf16.msra.mxu0 %v3964
    %4369 = vmatprep.subr.bf16.mxu0 %v3969
    %4370 = vmatpush1.bf16.msra.mxu0 %v3968
    %4371 = vmatprep.subr.bf16.mxu0 %v3973
    %4372 = vmatpush1.bf16.msra.mxu0 %v3972
    %4373 = vmatprep.subr.bf16.mxu0 %v3977
    %4374 = vmatpush1.bf16.msra.mxu0 %v3976
    %4375 = vmatprep.subr.bf16.mxu0 %v3981
    %4376 = vmatpush1.bf16.msra.mxu0 %v3980
    %4377 = vmatprep.subr.bf16.mxu0 %v3985
    %4378 = vmatpush1.bf16.msra.mxu0 %v3984
    %4379 = vmatprep.subr.bf16.mxu0 %v3989
    %4380 = vmatpush1.bf16.msra.mxu0 %v3988
    %4381 = vmatprep.subr.bf16.mxu0 %v3993
    %4382 = vmatpush1.bf16.msra.mxu0 %v3992
    %4383 = vmatprep.mubr.bf16.mxu0 %v3072
    %4384 = vmatmul.mubr.bf16.gmra.mrb[0].mxu0 %v3071
    %v4385 = vpop.f32.mrb[0].mxu0
    %v4386 = vadd.f32 %v3291, %v4385
    %v4387 = vpop.f32.mrb[0].mxu0
    %v4388 = vadd.f32 %v3295, %v4387
    %v4389 = vpop.f32.mrb[0].mxu0
    %v4390 = vpop.f32.mrb[0].mxu0
    %4391 = vdwg.mxu0
    %4392 = vmatprep.subr.bf16.mxu0 %v3997
    %4393 = vmatpush1.bf16.msra.mxu0 %v3996
    %4394 = vmatprep.subr.bf16.mxu0 %v4001
    %4395 = vmatpush1.bf16.msra.mxu0 %v4000
    %4396 = vmatprep.subr.bf16.mxu0 %v4005
    %4397 = vmatpush1.bf16.msra.mxu0 %v4004
    %4398 = vmatprep.subr.bf16.mxu0 %v4009
    %4399 = vmatpush1.bf16.msra.mxu0 %v4008
    %4400 = vmatprep.subr.bf16.mxu0 %v4013
    %4401 = vmatpush1.bf16.msra.mxu0 %v4012
    %4402 = vmatprep.subr.bf16.mxu0 %v4017
    %4403 = vmatpush1.bf16.msra.mxu0 %v4016
    %4404 = vmatprep.subr.bf16.mxu0 %v4021
    %4405 = vmatpush1.bf16.msra.mxu0 %v4020
    %4406 = vmatprep.subr.bf16.mxu0 %v4025
    %4407 = vmatpush1.bf16.msra.mxu0 %v4024
    %4408 = vmatprep.subr.bf16.mxu0 %v4029
    %4409 = vmatpush1.bf16.msra.mxu0 %v4028
    %4410 = vmatprep.subr.bf16.mxu0 %v4033
    %4411 = vmatpush1.bf16.msra.mxu0 %v4032
    %4412 = vmatprep.subr.bf16.mxu0 %v4037
    %4413 = vmatpush1.bf16.msra.mxu0 %v4036
    %4414 = vmatprep.subr.bf16.mxu0 %v4041
    %4415 = vmatpush1.bf16.msra.mxu0 %v4040
    %4416 = vmatprep.subr.bf16.mxu0 %v4045
    %4417 = vmatpush1.bf16.msra.mxu0 %v4044
    %4418 = vmatprep.subr.bf16.mxu0 %v4049
    %4419 = vmatpush1.bf16.msra.mxu0 %v4048
    %4420 = vmatprep.subr.bf16.mxu0 %v4053
    %4421 = vmatpush1.bf16.msra.mxu0 %v4052
    %4422 = vmatprep.subr.bf16.mxu0 %v4057
    %4423 = vmatpush1.bf16.msra.mxu0 %v4056
    %4424 = vmatprep.mubr.bf16.mxu0 %v3074
    %4425 = vmatmul.mubr.bf16.gmra.mrb[0].mxu0 %v3073
    %v4426 = vpop.f32.mrb[0].mxu0
    %v4427 = vadd.f32 %v4386, %v4426
    %v4428 = vpop.f32.mrb[0].mxu0
    %v4429 = vadd.f32 %v4388, %v4428
    %v4430 = vpop.f32.mrb[0].mxu0
    %v4431 = vpop.f32.mrb[0].mxu0
    %4432 = vdwg.mxu0
    %4433 = vmatprep.subr.bf16.mxu0 %v4061
    %4434 = vmatpush1.bf16.msra.mxu0 %v4060
    %4435 = vmatprep.subr.bf16.mxu0 %v4065
    %4436 = vmatpush1.bf16.msra.mxu0 %v4064
    %4437 = vmatprep.subr.bf16.mxu0 %v4069
    %4438 = vmatpush1.bf16.msra.mxu0 %v4068
    %4439 = vmatprep.subr.bf16.mxu0 %v4073
    %4440 = vmatpush1.bf16.msra.mxu0 %v4072
    %4441 = vmatprep.subr.bf16.mxu0 %v4077
    %4442 = vmatpush1.bf16.msra.mxu0 %v4076
    %4443 = vmatprep.subr.bf16.mxu0 %v4081
    %4444 = vmatpush1.bf16.msra.mxu0 %v4080
    %4445 = vmatprep.subr.bf16.mxu0 %v4085
    %4446 = vmatpush1.bf16.msra.mxu0 %v4084
    %4447 = vmatprep.subr.bf16.mxu0 %v4089
    %4448 = vmatpush1.bf16.msra.mxu0 %v4088
    %4449 = vmatprep.subr.bf16.mxu0 %v4093
    %4450 = vmatpush1.bf16.msra.mxu0 %v4092
    %4451 = vmatprep.subr.bf16.mxu0 %v4097
    %4452 = vmatpush1.bf16.msra.mxu0 %v4096
    %4453 = vmatprep.subr.bf16.mxu0 %v4101
    %4454 = vmatpush1.bf16.msra.mxu0 %v4100
    %4455 = vmatprep.subr.bf16.mxu0 %v4105
    %4456 = vmatpush1.bf16.msra.mxu0 %v4104
    %4457 = vmatprep.subr.bf16.mxu0 %v4109
    %4458 = vmatpush1.bf16.msra.mxu0 %v4108
    %4459 = vmatprep.subr.bf16.mxu0 %v4113
    %4460 = vmatpush1.bf16.msra.mxu0 %v4112
    %4461 = vmatprep.subr.bf16.mxu0 %v4117
    %4462 = vmatpush1.bf16.msra.mxu0 %v4116
    %4463 = vmatprep.subr.bf16.mxu0 %v4121
    %4464 = vmatpush1.bf16.msra.mxu0 %v4120
    %4465 = vmatprep.mubr.bf16.mxu0 %v3076
    %4466 = vmatmul.mubr.bf16.gmra.mrb[0].mxu0 %v3075
    %v4467 = vpop.f32.mrb[0].mxu0
    %v4468 = vadd.f32 %v4427, %v4467
    %v4469 = vpop.f32.mrb[0].mxu0
    %v4470 = vadd.f32 %v4429, %v4469
    %v4471 = vpop.f32.mrb[0].mxu0
    %v4472 = vpop.f32.mrb[0].mxu0
    %4473 = vdwg.mxu0
    %4474 = vmatprep.subr.bf16.mxu0 %v4125
    %4475 = vmatpush1.bf16.msra.mxu0 %v4124
    %4476 = vmatprep.subr.bf16.mxu0 %v4129
    %4477 = vmatpush1.bf16.msra.mxu0 %v4128
    %4478 = vmatprep.subr.bf16.mxu0 %v4133
    %4479 = vmatpush1.bf16.msra.mxu0 %v4132
    %4480 = vmatprep.subr.bf16.mxu0 %v4137
    %4481 = vmatpush1.bf16.msra.mxu0 %v4136
    %4482 = vmatprep.subr.bf16.mxu0 0
    %4483 = vmatpush1.bf16.msra.mxu0 0
    %4484 = vmatprep.subr.bf16.mxu0 0
    %4485 = vmatpush1.bf16.msra.mxu0 0
    %4486 = vmatprep.subr.bf16.mxu0 0
    %4487 = vmatpush1.bf16.msra.mxu0 0
    %4488 = vmatprep.subr.bf16.mxu0 0
    %4489 = vmatpush1.bf16.msra.mxu0 0
    %4490 = vmatprep.subr.bf16.mxu0 0
    %4491 = vmatpush1.bf16.msra.mxu0 0
    %4492 = vmatprep.subr.bf16.mxu0 0
    %4493 = vmatpush1.bf16.msra.mxu0 0
    %4494 = vmatprep.subr.bf16.mxu0 0
    %4495 = vmatpush1.bf16.msra.mxu0 0
    %4496 = vmatprep.subr.bf16.mxu0 0
    %4497 = vmatpush1.bf16.msra.mxu0 0
    %4498 = vmatprep.subr.bf16.mxu0 0
    %4499 = vmatpush1.bf16.msra.mxu0 0
    %4500 = vmatprep.subr.bf16.mxu0 0
    %4501 = vmatpush1.bf16.msra.mxu0 0
    %4502 = vmatprep.subr.bf16.mxu0 0
    %4503 = vmatpush1.bf16.msra.mxu0 0
    %4504 = vmatprep.subr.bf16.mxu0 0
    %4505 = vmatpush1.bf16.msra.mxu0 0
    %4506 = vmatprep.mubr.bf16.mxu0 0
    %4507 = vmatmul.mubr.bf16.gmra.mrb[0].mxu0 %v4349
    %v4508 = vpop.f32.mrb[0].mxu0
    %v4509 = vadd.f32 %v4468, %v4508
    %v4510 = vpop.f32.mrb[0].mxu0
    %v4511 = vadd.f32 %v4470, %v4510
    %v4512 = vpop.f32.mrb[0].mxu0
    %v4513 = vpop.f32.mrb[0].mxu0
    %4514 = vdwg.mxu0
    %4515 = vmatprep.subr.bf16.mxu0 %v3935
    %4516 = vmatpush1.bf16.msra.mxu0 %v3934
    %4517 = vmatprep.subr.bf16.mxu0 %v3939
    %4518 = vmatpush1.bf16.msra.mxu0 %v3938
    %4519 = vmatprep.subr.bf16.mxu0 %v3943
    %4520 = vmatpush1.bf16.msra.mxu0 %v3942
    %4521 = vmatprep.subr.bf16.mxu0 %v3947
    %4522 = vmatpush1.bf16.msra.mxu0 %v3946
    %4523 = vmatprep.subr.bf16.mxu0 %v3951
    %4524 = vmatpush1.bf16.msra.mxu0 %v3950
    %4525 = vmatprep.subr.bf16.mxu0 %v3955
    %4526 = vmatpush1.bf16.msra.mxu0 %v3954
    %4527 = vmatprep.subr.bf16.mxu0 %v3959
    %4528 = vmatpush1.bf16.msra.mxu0 %v3958
    %4529 = vmatprep.subr.bf16.mxu0 %v3963
    %4530 = vmatpush1.bf16.msra.mxu0 %v3962
    %4531 = vmatprep.subr.bf16.mxu0 %v3967
    %4532 = vmatpush1.bf16.msra.mxu0 %v3966
    %4533 = vmatprep.subr.bf16.mxu0 %v3971
    %4534 = vmatpush1.bf16.msra.mxu0 %v3970
    %4535 = vmatprep.subr.bf16.mxu0 %v3975
    %4536 = vmatpush1.bf16.msra.mxu0 %v3974
    %4537 = vmatprep.subr.bf16.mxu0 %v3979
    %4538 = vmatpush1.bf16.msra.mxu0 %v3978
    %4539 = vmatprep.subr.bf16.mxu0 %v3983
    %4540 = vmatpush1.bf16.msra.mxu0 %v3982
    %4541 = vmatprep.subr.bf16.mxu0 %v3987
    %4542 = vmatpush1.bf16.msra.mxu0 %v3986
    %4543 = vmatprep.subr.bf16.mxu0 %v3991
    %4544 = vmatpush1.bf16.msra.mxu0 %v3990
    %4545 = vmatprep.subr.bf16.mxu0 %v3995
    %4546 = vmatpush1.bf16.msra.mxu0 %v3994
    %4547 = vmatprep.mubr.bf16.mxu0 %v3072
    %4548 = vmatmul.mubr.bf16.gmra.mrb[0].mxu0 %v3071
    %v4549 = vpop.f32.mrb[0].mxu0
    %v4550 = vadd.f32 %v3299, %v4549
    %v4551 = vpop.f32.mrb[0].mxu0
    %v4552 = vadd.f32 %v3303, %v4551
    %v4553 = vpop.f32.mrb[0].mxu0
    %v4554 = vpop.f32.mrb[0].mxu0
    %4555 = vdwg.mxu0
    %4556 = vmatprep.subr.bf16.mxu0 %v3999
    %4557 = vmatpush1.bf16.msra.mxu0 %v3998
    %4558 = vmatprep.subr.bf16.mxu0 %v4003
    %4559 = vmatpush1.bf16.msra.mxu0 %v4002
    %4560 = vmatprep.subr.bf16.mxu0 %v4007
    %4561 = vmatpush1.bf16.msra.mxu0 %v4006
    %4562 = vmatprep.subr.bf16.mxu0 %v4011
    %4563 = vmatpush1.bf16.msra.mxu0 %v4010
    %4564 = vmatprep.subr.bf16.mxu0 %v4015
    %4565 = vmatpush1.bf16.msra.mxu0 %v4014
    %4566 = vmatprep.subr.bf16.mxu0 %v4019
    %4567 = vmatpush1.bf16.msra.mxu0 %v4018
    %4568 = vmatprep.subr.bf16.mxu0 %v4023
    %4569 = vmatpush1.bf16.msra.mxu0 %v4022
    %4570 = vmatprep.subr.bf16.mxu0 %v4027
    %4571 = vmatpush1.bf16.msra.mxu0 %v4026
    %4572 = vmatprep.subr.bf16.mxu0 %v4031
    %4573 = vmatpush1.bf16.msra.mxu0 %v4030
    %4574 = vmatprep.subr.bf16.mxu0 %v4035
    %4575 = vmatpush1.bf16.msra.mxu0 %v4034
    %4576 = vmatprep.subr.bf16.mxu0 %v4039
    %4577 = vmatpush1.bf16.msra.mxu0 %v4038
    %4578 = vmatprep.subr.bf16.mxu0 %v4043
    %4579 = vmatpush1.bf16.msra.mxu0 %v4042
    %4580 = vmatprep.subr.bf16.mxu0 %v4047
    %4581 = vmatpush1.bf16.msra.mxu0 %v4046
    %4582 = vmatprep.subr.bf16.mxu0 %v4051
    %4583 = vmatpush1.bf16.msra.mxu0 %v4050
    %4584 = vmatprep.subr.bf16.mxu0 %v4055
    %4585 = vmatpush1.bf16.msra.mxu0 %v4054
    %4586 = vmatprep.subr.bf16.mxu0 %v4059
    %4587 = vmatpush1.bf16.msra.mxu0 %v4058
    %4588 = vmatprep.mubr.bf16.mxu0 %v3074
    %4589 = vmatmul.mubr.bf16.gmra.mrb[0].mxu0 %v3073
    %v4590 = vpop.f32.mrb[0].mxu0
    %v4591 = vadd.f32 %v4550, %v4590
    %v4592 = vpop.f32.mrb[0].mxu0
    %v4593 = vadd.f32 %v4552, %v4592
    %v4594 = vpop.f32.mrb[0].mxu0
    %v4595 = vpop.f32.mrb[0].mxu0
    %4596 = vdwg.mxu0
    %4597 = vmatprep.subr.bf16.mxu0 %v4063
    %4598 = vmatpush1.bf16.msra.mxu0 %v4062
    %4599 = vmatprep.subr.bf16.mxu0 %v4067
    %4600 = vmatpush1.bf16.msra.mxu0 %v4066
    %4601 = vmatprep.subr.bf16.mxu0 %v4071
    %4602 = vmatpush1.bf16.msra.mxu0 %v4070
    %4603 = vmatprep.subr.bf16.mxu0 %v4075
    %4604 = vmatpush1.bf16.msra.mxu0 %v4074
    %4605 = vmatprep.subr.bf16.mxu0 %v4079
    %4606 = vmatpush1.bf16.msra.mxu0 %v4078
    %4607 = vmatprep.subr.bf16.mxu0 %v4083
    %4608 = vmatpush1.bf16.msra.mxu0 %v4082
    %4609 = vmatprep.subr.bf16.mxu0 %v4087
    %4610 = vmatpush1.bf16.msra.mxu0 %v4086
    %4611 = vmatprep.subr.bf16.mxu0 %v4091
    %4612 = vmatpush1.bf16.msra.mxu0 %v4090
    %4613 = vmatprep.subr.bf16.mxu0 %v4095
    %4614 = vmatpush1.bf16.msra.mxu0 %v4094
    %4615 = vmatprep.subr.bf16.mxu0 %v4099
    %4616 = vmatpush1.bf16.msra.mxu0 %v4098
    %4617 = vmatprep.subr.bf16.mxu0 %v4103
    %4618 = vmatpush1.bf16.msra.mxu0 %v4102
    %4619 = vmatprep.subr.bf16.mxu0 %v4107
    %4620 = vmatpush1.bf16.msra.mxu0 %v4106
    %4621 = vmatprep.subr.bf16.mxu0 %v4111
    %4622 = vmatpush1.bf16.msra.mxu0 %v4110
    %4623 = vmatprep.subr.bf16.mxu0 %v4115
    %4624 = vmatpush1.bf16.msra.mxu0 %v4114
    %4625 = vmatprep.subr.bf16.mxu0 %v4119
    %4626 = vmatpush1.bf16.msra.mxu0 %v4118
    %4627 = vmatprep.subr.bf16.mxu0 %v4123
    %4628 = vmatpush1.bf16.msra.mxu0 %v4122
    %4629 = vmatprep.mubr.bf16.mxu0 %v3076
    %4630 = vmatmul.mubr.bf16.gmra.mrb[0].mxu0 %v3075
    %v4631 = vpop.f32.mrb[0].mxu0
    %v4632 = vadd.f32 %v4591, %v4631
    %v4633 = vpop.f32.mrb[0].mxu0
    %v4634 = vadd.f32 %v4593, %v4633
    %v4635 = vpop.f32.mrb[0].mxu0
    %v4636 = vpop.f32.mrb[0].mxu0
    %4637 = vdwg.mxu0
    %4638 = vmatprep.subr.bf16.mxu0 %v4127
    %4639 = vmatpush1.bf16.msra.mxu0 %v4126
    %4640 = vmatprep.subr.bf16.mxu0 %v4131
    %4641 = vmatpush1.bf16.msra.mxu0 %v4130
    %4642 = vmatprep.subr.bf16.mxu0 %v4135
    %4643 = vmatpush1.bf16.msra.mxu0 %v4134
    %4644 = vmatprep.subr.bf16.mxu0 %v4139
    %4645 = vmatpush1.bf16.msra.mxu0 %v4138
    %4646 = vmatprep.subr.bf16.mxu0 0
    %4647 = vmatpush1.bf16.msra.mxu0 0
    %4648 = vmatprep.subr.bf16.mxu0 0
    %4649 = vmatpush1.bf16.msra.mxu0 0
    %4650 = vmatprep.subr.bf16.mxu0 0
    %4651 = vmatpush1.bf16.msra.mxu0 0
    %4652 = vmatprep.subr.bf16.mxu0 0
    %4653 = vmatpush1.bf16.msra.mxu0 0
    %4654 = vmatprep.subr.bf16.mxu0 0
    %4655 = vmatpush1.bf16.msra.mxu0 0
    %4656 = vmatprep.subr.bf16.mxu0 0
    %4657 = vmatpush1.bf16.msra.mxu0 0
    %4658 = vmatprep.subr.bf16.mxu0 0
    %4659 = vmatpush1.bf16.msra.mxu0 0
    %4660 = vmatprep.subr.bf16.mxu0 0
    %4661 = vmatpush1.bf16.msra.mxu0 0
    %4662 = vmatprep.subr.bf16.mxu0 0
    %4663 = vmatpush1.bf16.msra.mxu0 0
    %4664 = vmatprep.subr.bf16.mxu0 0
    %4665 = vmatpush1.bf16.msra.mxu0 0
    %4666 = vmatprep.subr.bf16.mxu0 0
    %4667 = vmatpush1.bf16.msra.mxu0 0
    %4668 = vmatprep.subr.bf16.mxu0 0
    %4669 = vmatpush1.bf16.msra.mxu0 0
    %4670 = vmatprep.mubr.bf16.mxu0 0
    %4671 = vmatmul.mubr.bf16.gmra.mrb[0].mxu0 %v4349
    %v4672 = vpop.f32.mrb[0].mxu0
    %v4673 = vadd.f32 %v4632, %v4672
    %v4674 = vpop.f32.mrb[0].mxu0
    %v4675 = vadd.f32 %v4634, %v4674
    %v4676 = vpop.f32.mrb[0].mxu0
    %v4677 = vpop.f32.mrb[0].mxu0
    %4678 = vdwg.mxu0
    %vm4679 = vcmp.gt.f32.partialorder %v4509, 0.0
    %vm4680 = vcmp.gt.f32.partialorder %v4511, 0.0
    %vm4681 = vcmp.gt.f32.partialorder %v4673, 0.0
    %vm4682 = vcmp.gt.f32.partialorder %v4675, 0.0
    %v4683 = vmul.f32 %v4509, 0.01
    %v4684 = vmul.f32 %v4511, 0.01
    %v4685 = vmul.f32 %v4673, 0.01
    %v4686 = vmul.f32 %v4675, 0.01
    %v4687 = vsel %vm4679, %v4509, %v4683
    %v4688 = vsel %vm4680, %v4511, %v4684
    %v4689 = vsel %vm4681, %v4673, %v4685
    %v4690 = vsel %vm4682, %v4675, %v4686
    %v4691 = vpack.c.bf16 %v4687, %v4687
    %v4692 = vpack.c.bf16 %v4688, %v4688
    %v4693 = vpack.c.bf16 %v4689, %v4689
    %v4694 = vpack.c.bf16 %v4690, %v4690
    %v4695 = vld [vmem:[#allocation3] sm:$0xff]
    %v4696 = vld [vmem:[#allocation3 + $0x8] sm:$0xff]
    %v4697 = vld [vmem:[#allocation3 + $0x10] sm:$0xff]
    %v4698 = vld [vmem:[#allocation3 + $0x18] sm:$0xff]
    %v4699 = vld [vmem:[#allocation3 + $0x20] sm:$0xff]
    %v4700 = vld [vmem:[#allocation3 + $0x28] sm:$0xff]
    %v4701 = vld [vmem:[#allocation3 + $0x30] sm:$0xff]
    %v4702 = vld [vmem:[#allocation3 + $0x38] sm:$0xff]
    %v4703 = vld [vmem:[#allocation3 + $0x40] sm:$0xff]
    %v4704 = vld [vmem:[#allocation3 + $0x48] sm:$0xff]
    %v4705 = vld [vmem:[#allocation3 + $0x50] sm:$0xff]
    %v4706 = vld [vmem:[#allocation3 + $0x58] sm:$0xff]
    %v4707 = vld [vmem:[#allocation3 + $0x60] sm:$0xff]
    %v4708 = vld [vmem:[#allocation3 + $0x68] sm:$0xff]
    %v4709 = vld [vmem:[#allocation3 + $0x70] sm:$0xff]
    %v4710 = vld [vmem:[#allocation3 + $0x78] sm:$0xff]
    %v4711 = vld [vmem:[#allocation3 + $0x80] sm:$0xff]
    %v4712 = vld [vmem:[#allocation3 + $0x88] sm:$0xff]
    %v4713 = vld [vmem:[#allocation3 + $0x90] sm:$0xff]
    %v4714 = vld [vmem:[#allocation3 + $0x98] sm:$0xff]
    %v4715 = vld [vmem:[#allocation3 + $0xa0] sm:$0xff]
    %v4716 = vld [vmem:[#allocation3 + $0xa8] sm:$0xff]
    %v4717 = vld [vmem:[#allocation3 + $0xb0] sm:$0xff]
    %v4718 = vld [vmem:[#allocation3 + $0xb8] sm:$0xff]
    %v4719 = vld [vmem:[#allocation3 + $0xc0] sm:$0xff]
    %v4720 = vld [vmem:[#allocation3 + $0xc8] sm:$0xff]
    %v4721 = vld [vmem:[#allocation3 + $0xd0] sm:$0xff]
    %v4722 = vld [vmem:[#allocation3 + $0xd8] sm:$0xff]
    %v4723 = vld [vmem:[#allocation3 + $0xe0] sm:$0xff]
    %v4724 = vld [vmem:[#allocation3 + $0xe8] sm:$0xff]
    %v4725 = vld [vmem:[#allocation3 + $0xf0] sm:$0xff]
    %v4726 = vld [vmem:[#allocation3 + $0xf8] sm:$0xff]
    %v4727 = vld [vmem:[#allocation3 + $0x100] sm:$0xff]
    %v4728 = vld [vmem:[#allocation3 + $0x108] sm:$0xff]
    %v4729 = vld [vmem:[#allocation3 + $0x110] sm:$0xff]
    %v4730 = vld [vmem:[#allocation3 + $0x118] sm:$0xff]
    %v4731 = vld [vmem:[#allocation3 + $0x120] sm:$0xff]
    %v4732 = vld [vmem:[#allocation3 + $0x128] sm:$0xff]
    %v4733 = vld [vmem:[#allocation3 + $0x130] sm:$0xff]
    %v4734 = vld [vmem:[#allocation3 + $0x138] sm:$0xff]
    %v4735 = vld [vmem:[#allocation3 + $0x140] sm:$0xff]
    %v4736 = vld [vmem:[#allocation3 + $0x148] sm:$0xff]
    %v4737 = vld [vmem:[#allocation3 + $0x150] sm:$0xff]
    %v4738 = vld [vmem:[#allocation3 + $0x158] sm:$0xff]
    %v4739 = vld [vmem:[#allocation3 + $0x160] sm:$0xff]
    %v4740 = vld [vmem:[#allocation3 + $0x168] sm:$0xff]
    %v4741 = vld [vmem:[#allocation3 + $0x170] sm:$0xff]
    %v4742 = vld [vmem:[#allocation3 + $0x178] sm:$0xff]
    %v4743 = vld [vmem:[#allocation3 + $0x180] sm:$0xff]
    %v4744 = vld [vmem:[#allocation3 + $0x188] sm:$0xff]
    %v4745 = vld [vmem:[#allocation3 + $0x190] sm:$0xff]
    %v4746 = vld [vmem:[#allocation3 + $0x198] sm:$0xff]
    %v4747 = vld [vmem:[%s6] sm:$0x3]
    %v4749 = vlaneseq
    %v4750 = vshrl.u32 %v4749, 7
    %v4751 = vsub.s32 0, %v4750
    %v4752 = vrot.slane %v4747, %v4751
    %v4753 = vlaneseq
    %v4754 = vshrl.u32 %v4753, 7
    %v4755 = vsub.s32 1, %v4754
    %v4756 = vrot.slane %v4747, %v4755
    %v4811 = vunpack.c.l.b16 %v4695
    %v4812 = vunpack.c.h.b16 %v4695
    %v4813 = vunpack.c.l.b16 %v4696
    %v4814 = vunpack.c.h.b16 %v4696
    %v4815 = vunpack.c.l.b16 %v4697
    %v4816 = vunpack.c.h.b16 %v4697
    %v4817 = vunpack.c.l.b16 %v4698
    %v4818 = vunpack.c.h.b16 %v4698
    %v4819 = vunpack.c.l.b16 %v4699
    %v4820 = vunpack.c.h.b16 %v4699
    %v4821 = vunpack.c.l.b16 %v4700
    %v4822 = vunpack.c.h.b16 %v4700
    %v4823 = vunpack.c.l.b16 %v4701
    %v4824 = vunpack.c.h.b16 %v4701
    %v4825 = vunpack.c.l.b16 %v4702
    %v4826 = vunpack.c.h.b16 %v4702
    %v4827 = vunpack.c.l.b16 %v4703
    %v4828 = vunpack.c.h.b16 %v4703
    %v4829 = vunpack.c.l.b16 %v4704
    %v4830 = vunpack.c.h.b16 %v4704
    %v4831 = vunpack.c.l.b16 %v4705
    %v4832 = vunpack.c.h.b16 %v4705
    %v4833 = vunpack.c.l.b16 %v4706
    %v4834 = vunpack.c.h.b16 %v4706
    %v4835 = vunpack.c.l.b16 %v4707
    %v4836 = vunpack.c.h.b16 %v4707
    %v4837 = vunpack.c.l.b16 %v4708
    %v4838 = vunpack.c.h.b16 %v4708
    %v4839 = vunpack.c.l.b16 %v4709
    %v4840 = vunpack.c.h.b16 %v4709
    %v4841 = vunpack.c.l.b16 %v4710
    %v4842 = vunpack.c.h.b16 %v4710
    %v4843 = vunpack.c.l.b16 %v4711
    %v4844 = vunpack.c.h.b16 %v4711
    %v4845 = vunpack.c.l.b16 %v4712
    %v4846 = vunpack.c.h.b16 %v4712
    %v4847 = vunpack.c.l.b16 %v4713
    %v4848 = vunpack.c.h.b16 %v4713
    %v4849 = vunpack.c.l.b16 %v4714
    %v4850 = vunpack.c.h.b16 %v4714
    %v4851 = vunpack.c.l.b16 %v4715
    %v4852 = vunpack.c.h.b16 %v4715
    %v4853 = vunpack.c.l.b16 %v4716
    %v4854 = vunpack.c.h.b16 %v4716
    %v4855 = vunpack.c.l.b16 %v4717
    %v4856 = vunpack.c.h.b16 %v4717
    %v4857 = vunpack.c.l.b16 %v4718
    %v4858 = vunpack.c.h.b16 %v4718
    %v4859 = vunpack.c.l.b16 %v4719
    %v4860 = vunpack.c.h.b16 %v4719
    %v4861 = vunpack.c.l.b16 %v4720
    %v4862 = vunpack.c.h.b16 %v4720
    %v4863 = vunpack.c.l.b16 %v4721
    %v4864 = vunpack.c.h.b16 %v4721
    %v4865 = vunpack.c.l.b16 %v4722
    %v4866 = vunpack.c.h.b16 %v4722
    %v4867 = vunpack.c.l.b16 %v4723
    %v4868 = vunpack.c.h.b16 %v4723
    %v4869 = vunpack.c.l.b16 %v4724
    %v4870 = vunpack.c.h.b16 %v4724
    %v4871 = vunpack.c.l.b16 %v4725
    %v4872 = vunpack.c.h.b16 %v4725
    %v4873 = vunpack.c.l.b16 %v4726
    %v4874 = vunpack.c.h.b16 %v4726
    %v4875 = vunpack.c.l.b16 %v4727
    %v4876 = vunpack.c.h.b16 %v4727
    %v4877 = vunpack.c.l.b16 %v4728
    %v4878 = vunpack.c.h.b16 %v4728
    %v4879 = vunpack.c.l.b16 %v4729
    %v4880 = vunpack.c.h.b16 %v4729
    %v4881 = vunpack.c.l.b16 %v4730
    %v4882 = vunpack.c.h.b16 %v4730
    %v4883 = vunpack.c.l.b16 %v4731
    %v4884 = vunpack.c.h.b16 %v4731
    %v4885 = vunpack.c.l.b16 %v4732
    %v4886 = vunpack.c.h.b16 %v4732
    %v4887 = vunpack.c.l.b16 %v4733
    %v4888 = vunpack.c.h.b16 %v4733
    %v4889 = vunpack.c.l.b16 %v4734
    %v4890 = vunpack.c.h.b16 %v4734
    %v4891 = vunpack.c.l.b16 %v4735
    %v4892 = vunpack.c.h.b16 %v4735
    %v4893 = vunpack.c.l.b16 %v4736
    %v4894 = vunpack.c.h.b16 %v4736
    %v4895 = vunpack.c.l.b16 %v4737
    %v4896 = vunpack.c.h.b16 %v4737
    %v4897 = vunpack.c.l.b16 %v4738
    %v4898 = vunpack.c.h.b16 %v4738
    %v4899 = vunpack.c.l.b16 %v4739
    %v4900 = vunpack.c.h.b16 %v4739
    %v4901 = vunpack.c.l.b16 %v4740
    %v4902 = vunpack.c.h.b16 %v4740
    %v4903 = vunpack.c.l.b16 %v4741
    %v4904 = vunpack.c.h.b16 %v4741
    %v4905 = vunpack.c.l.b16 %v4742
    %v4906 = vunpack.c.h.b16 %v4742
    %v4907 = vunpack.c.l.b16 %v4743
    %v4908 = vunpack.c.h.b16 %v4743
    %v4909 = vunpack.c.l.b16 %v4744
    %v4910 = vunpack.c.h.b16 %v4744
    %v4911 = vunpack.c.l.b16 %v4745
    %v4912 = vunpack.c.h.b16 %v4745
    %v4913 = vunpack.c.l.b16 %v4746
    %v4914 = vunpack.c.h.b16 %v4746
    %v4915 = vpack.c.b16 %v4813, %v4811
    %v4916 = vpack.c.b16 %v4814, %v4812
    %v4917 = vpack.c.b16 %v4817, %v4815
    %v4918 = vpack.c.b16 %v4818, %v4816
    %v4919 = vpack.c.b16 %v4821, %v4819
    %v4920 = vpack.c.b16 %v4822, %v4820
    %v4921 = vpack.c.b16 %v4825, %v4823
    %v4922 = vpack.c.b16 %v4826, %v4824
    %v4923 = vpack.c.b16 %v4829, %v4827
    %v4924 = vpack.c.b16 %v4830, %v4828
    %v4925 = vpack.c.b16 %v4833, %v4831
    %v4926 = vpack.c.b16 %v4834, %v4832
    %v4927 = vpack.c.b16 %v4837, %v4835
    %v4928 = vpack.c.b16 %v4838, %v4836
    %v4929 = vpack.c.b16 %v4841, %v4839
    %v4930 = vpack.c.b16 %v4842, %v4840
    %v4931 = vpack.c.b16 %v4845, %v4843
    %v4932 = vpack.c.b16 %v4846, %v4844
    %v4933 = vpack.c.b16 %v4849, %v4847
    %v4934 = vpack.c.b16 %v4850, %v4848
    %v4935 = vpack.c.b16 %v4853, %v4851
    %v4936 = vpack.c.b16 %v4854, %v4852
    %v4937 = vpack.c.b16 %v4857, %v4855
    %v4938 = vpack.c.b16 %v4858, %v4856
    %v4939 = vpack.c.b16 %v4861, %v4859
    %v4940 = vpack.c.b16 %v4862, %v4860
    %v4941 = vpack.c.b16 %v4865, %v4863
    %v4942 = vpack.c.b16 %v4866, %v4864
    %v4943 = vpack.c.b16 %v4869, %v4867
    %v4944 = vpack.c.b16 %v4870, %v4868
    %v4945 = vpack.c.b16 %v4873, %v4871
    %v4946 = vpack.c.b16 %v4874, %v4872
    %v4947 = vpack.c.b16 %v4877, %v4875
    %v4948 = vpack.c.b16 %v4878, %v4876
    %v4949 = vpack.c.b16 %v4881, %v4879
    %v4950 = vpack.c.b16 %v4882, %v4880
    %v4951 = vpack.c.b16 %v4885, %v4883
    %v4952 = vpack.c.b16 %v4886, %v4884
    %v4953 = vpack.c.b16 %v4889, %v4887
    %v4954 = vpack.c.b16 %v4890, %v4888
    %v4955 = vpack.c.b16 %v4893, %v4891
    %v4956 = vpack.c.b16 %v4894, %v4892
    %v4957 = vpack.c.b16 %v4897, %v4895
    %v4958 = vpack.c.b16 %v4898, %v4896
    %v4959 = vpack.c.b16 %v4901, %v4899
    %v4960 = vpack.c.b16 %v4902, %v4900
    %v4961 = vpack.c.b16 %v4905, %v4903
    %v4962 = vpack.c.b16 %v4906, %v4904
    %v4963 = vpack.c.b16 %v4909, %v4907
    %v4964 = vpack.c.b16 %v4910, %v4908
    %v4965 = vpack.c.b16 %v4913, %v4911
    %v4966 = vpack.c.b16 %v4914, %v4912
    %vm5019 = vcmask 261120
    %v5021 = vsel %vm5019, %v4694, 0
    %5023 = vmatprep.subr.bf16.mxu0 %v4916
    %5024 = vmatpush1.bf16.msra.mxu0 %v4915
    %5025 = vmatprep.subr.bf16.mxu0 %v4918
    %5026 = vmatpush1.bf16.msra.mxu0 %v4917
    %5027 = vmatprep.subr.bf16.mxu0 %v4920
    %5028 = vmatpush1.bf16.msra.mxu0 %v4919
    %5029 = vmatprep.subr.bf16.mxu0 %v4922
    %5030 = vmatpush1.bf16.msra.mxu0 %v4921
    %5031 = vmatprep.subr.bf16.mxu0 %v4924
    %5032 = vmatpush1.bf16.msra.mxu0 %v4923
    %5033 = vmatprep.subr.bf16.mxu0 %v4926
    %5034 = vmatpush1.bf16.msra.mxu0 %v4925
    %5035 = vmatprep.subr.bf16.mxu0 %v4928
    %5036 = vmatpush1.bf16.msra.mxu0 %v4927
    %5037 = vmatprep.subr.bf16.mxu0 %v4930
    %5038 = vmatpush1.bf16.msra.mxu0 %v4929
    %5039 = vmatprep.subr.bf16.mxu0 %v4932
    %5040 = vmatpush1.bf16.msra.mxu0 %v4931
    %5041 = vmatprep.subr.bf16.mxu0 %v4934
    %5042 = vmatpush1.bf16.msra.mxu0 %v4933
    %5043 = vmatprep.subr.bf16.mxu0 %v4936
    %5044 = vmatpush1.bf16.msra.mxu0 %v4935
    %5045 = vmatprep.subr.bf16.mxu0 %v4938
    %5046 = vmatpush1.bf16.msra.mxu0 %v4937
    %5047 = vmatprep.subr.bf16.mxu0 %v4940
    %5048 = vmatpush1.bf16.msra.mxu0 %v4939
    %5049 = vmatprep.subr.bf16.mxu0 %v4942
    %5050 = vmatpush1.bf16.msra.mxu0 %v4941
    %5051 = vmatprep.subr.bf16.mxu0 %v4944
    %5052 = vmatpush1.bf16.msra.mxu0 %v4943
    %5053 = vmatprep.subr.bf16.mxu0 %v4946
    %5054 = vmatpush1.bf16.msra.mxu0 %v4945
    %5055 = vmatprep.mubr.bf16.mxu0 %v4692
    %5056 = vmatmul.mubr.bf16.gmra.mrb[0].mxu0 %v4691
    %v5057 = vpop.f32.mrb[0].mxu0
    %v5058 = vadd.f32 %v4752, %v5057
    %v5059 = vpop.f32.mrb[0].mxu0
    %v5060 = vadd.f32 %v4756, %v5059
    %v5061 = vpop.f32.mrb[0].mxu0
    %v5062 = vpop.f32.mrb[0].mxu0
    %5063 = vdwg.mxu0
    %5064 = vmatprep.subr.bf16.mxu0 %v4948
    %5065 = vmatpush1.bf16.msra.mxu0 %v4947
    %5066 = vmatprep.subr.bf16.mxu0 %v4950
    %5067 = vmatpush1.bf16.msra.mxu0 %v4949
    %5068 = vmatprep.subr.bf16.mxu0 %v4952
    %5069 = vmatpush1.bf16.msra.mxu0 %v4951
    %5070 = vmatprep.subr.bf16.mxu0 %v4954
    %5071 = vmatpush1.bf16.msra.mxu0 %v4953
    %5072 = vmatprep.subr.bf16.mxu0 %v4956
    %5073 = vmatpush1.bf16.msra.mxu0 %v4955
    %5074 = vmatprep.subr.bf16.mxu0 %v4958
    %5075 = vmatpush1.bf16.msra.mxu0 %v4957
    %5076 = vmatprep.subr.bf16.mxu0 %v4960
    %5077 = vmatpush1.bf16.msra.mxu0 %v4959
    %5078 = vmatprep.subr.bf16.mxu0 %v4962
    %5079 = vmatpush1.bf16.msra.mxu0 %v4961
    %5080 = vmatprep.subr.bf16.mxu0 %v4964
    %5081 = vmatpush1.bf16.msra.mxu0 %v4963
    %5082 = vmatprep.subr.bf16.mxu0 %v4966
    %5083 = vmatpush1.bf16.msra.mxu0 %v4965
    %5084 = vmatprep.subr.bf16.mxu0 0
    %5085 = vmatpush1.bf16.msra.mxu0 0
    %5086 = vmatprep.subr.bf16.mxu0 0
    %5087 = vmatpush1.bf16.msra.mxu0 0
    %5088 = vmatprep.subr.bf16.mxu0 0
    %5089 = vmatpush1.bf16.msra.mxu0 0
    %5090 = vmatprep.subr.bf16.mxu0 0
    %5091 = vmatpush1.bf16.msra.mxu0 0
    %5092 = vmatprep.subr.bf16.mxu0 0
    %5093 = vmatpush1.bf16.msra.mxu0 0
    %5094 = vmatprep.subr.bf16.mxu0 0
    %5095 = vmatpush1.bf16.msra.mxu0 0
    %5096 = vmatprep.mubr.bf16.mxu0 %v5021
    %5097 = vmatmul.mubr.bf16.gmra.mrb[0].mxu0 %v4693
    %v5098 = vpop.f32.mrb[0].mxu0
    %v5099 = vadd.f32 %v5058, %v5098
    %v5100 = vpop.f32.mrb[0].mxu0
    %v5101 = vadd.f32 %v5060, %v5100
    %v5102 = vpop.f32.mrb[0].mxu0
    %v5103 = vpop.f32.mrb[0].mxu0
    %5104 = vdwg.mxu0
    %vm5105 = vcmp.gt.f32.partialorder %v5099, 0.0
    %vm5106 = vcmp.gt.f32.partialorder %v5101, 0.0
    %v5107 = vmul.f32 %v5099, 0.01
    %v5108 = vmul.f32 %v5101, 0.01
    %v5109 = vsel %vm5105, %v5099, %v5107
    %v5110 = vsel %vm5106, %v5101, %v5108
    %v5111 = vpack.c.bf16 %v5109, %v5109
    %v5112 = vpack.c.bf16 %v5110, %v5110
    %v5113 = vld [vmem:[%s7] sm:$0xf]
    %v5114 = vld [vmem:[%s7 + $0x4] sm:$0xf]
    %v5115 = vld [vmem:[%s7 + $0x8] sm:$0xf]
    %v5116 = vld [vmem:[%s7 + $0xc] sm:$0xf]
    %v5117 = vld [vmem:[%s7 + $0x10] sm:$0xf]
    %v5118 = vld [vmem:[%s7 + $0x14] sm:$0xf]
    %v5119 = vld [vmem:[%s7 + $0x18] sm:$0xf]
    %v5120 = vld [vmem:[%s7 + $0x1c] sm:$0xf]
    %v5121 = vld [vmem:[%s7 + $0x20] sm:$0xf]
    %v5122 = vld [vmem:[%s7 + $0x24] sm:$0xf]
    %v5123 = vld [vmem:[%s7 + $0x28] sm:$0xf]
    %v5124 = vld [vmem:[%s7 + $0x2c] sm:$0xf]
    %v5125 = vld [vmem:[%s7 + $0x30] sm:$0xf]
    %v5126 = vld [vmem:[%s7 + $0x34] sm:$0xf]
    %v5127 = vld [vmem:[%s7 + $0x38] sm:$0xf]
    %v5128 = vld [vmem:[%s7 + $0x3c] sm:$0xf]
    %v5129 = vld [vmem:[%s7 + $0x40] sm:$0xf]
    %v5130 = vld [vmem:[%s7 + $0x44] sm:$0xf]
    %v5131 = vld [vmem:[%s7 + $0x48] sm:$0xf]
    %v5132 = vld [vmem:[%s7 + $0x4c] sm:$0xf]
    %v5133 = vld [vmem:[%s7 + $0x50] sm:$0xf]
    %v5134 = vld [vmem:[%s7 + $0x54] sm:$0xf]
    %v5135 = vld [vmem:[%s7 + $0x58] sm:$0xf]
    %v5136 = vld [vmem:[%s7 + $0x5c] sm:$0xf]
    %v5137 = vld [vmem:[%s7 + $0x60] sm:$0xf]
    %v5138 = vld [vmem:[%s7 + $0x64] sm:$0xf]
    %v5139 = vld [vmem:[%s8] sm:$0x1]
    %v5141 = vlaneseq
    %v5142 = vshrl.u32 %v5141, 7
    %v5143 = vsub.s32 0, %v5142
    %v5144 = vrot.slane %v5139, %v5143
    %v5172 = vunpack.c.l.b16 %v5113
    %v5173 = vunpack.c.l.b16 %v5114
    %v5174 = vunpack.c.l.b16 %v5115
    %v5175 = vunpack.c.l.b16 %v5116
    %v5176 = vunpack.c.l.b16 %v5117
    %v5177 = vunpack.c.l.b16 %v5118
    %v5178 = vunpack.c.l.b16 %v5119
    %v5179 = vunpack.c.l.b16 %v5120
    %v5180 = vunpack.c.l.b16 %v5121
    %v5181 = vunpack.c.l.b16 %v5122
    %v5182 = vunpack.c.l.b16 %v5123
    %v5183 = vunpack.c.l.b16 %v5124
    %v5184 = vunpack.c.l.b16 %v5125
    %v5185 = vunpack.c.l.b16 %v5126
    %v5186 = vunpack.c.l.b16 %v5127
    %v5187 = vunpack.c.l.b16 %v5128
    %v5188 = vunpack.c.l.b16 %v5129
    %v5189 = vunpack.c.l.b16 %v5130
    %v5190 = vunpack.c.l.b16 %v5131
    %v5191 = vunpack.c.l.b16 %v5132
    %v5192 = vunpack.c.l.b16 %v5133
    %v5193 = vunpack.c.l.b16 %v5134
    %v5194 = vunpack.c.l.b16 %v5135
    %v5195 = vunpack.c.l.b16 %v5136
    %v5196 = vunpack.c.l.b16 %v5137
    %v5197 = vunpack.c.l.b16 %v5138
    %v5198 = vpack.c.b16 %v5173, %v5172
    %v5199 = vpack.c.b16 %v5175, %v5174
    %v5200 = vpack.c.b16 %v5177, %v5176
    %v5201 = vpack.c.b16 %v5179, %v5178
    %v5202 = vpack.c.b16 %v5181, %v5180
    %v5203 = vpack.c.b16 %v5183, %v5182
    %v5204 = vpack.c.b16 %v5185, %v5184
    %v5205 = vpack.c.b16 %v5187, %v5186
    %v5206 = vpack.c.b16 %v5189, %v5188
    %v5207 = vpack.c.b16 %v5191, %v5190
    %v5208 = vpack.c.b16 %v5193, %v5192
    %v5209 = vpack.c.b16 %v5195, %v5194
    %v5210 = vpack.c.b16 %v5197, %v5196
    %vm5224 = vcmask 654336
    %v5226 = vsel %vm5224, %v5112, 0
    %5228 = vmatprep.subr.bf16.mxu0 0
    %5229 = vmatpush1.bf16.msra.mxu0 %v5198
    %5230 = vmatprep.subr.bf16.mxu0 0
    %5231 = vmatpush1.bf16.msra.mxu0 %v5199
    %5232 = vmatprep.subr.bf16.mxu0 0
    %5233 = vmatpush1.bf16.msra.mxu0 %v5200
    %5234 = vmatprep.subr.bf16.mxu0 0
    %5235 = vmatpush1.bf16.msra.mxu0 %v5201
    %5236 = vmatprep.subr.bf16.mxu0 0
    %5237 = vmatpush1.bf16.msra.mxu0 %v5202
    %5238 = vmatprep.subr.bf16.mxu0 0
    %5239 = vmatpush1.bf16.msra.mxu0 %v5203
    %5240 = vmatprep.subr.bf16.mxu0 0
    %5241 = vmatpush1.bf16.msra.mxu0 %v5204
    %5242 = vmatprep.subr.bf16.mxu0 0
    %5243 = vmatpush1.bf16.msra.mxu0 %v5205
    %5244 = vmatprep.subr.bf16.mxu0 0
    %5245 = vmatpush1.bf16.msra.mxu0 %v5206
    %5246 = vmatprep.subr.bf16.mxu0 0
    %5247 = vmatpush1.bf16.msra.mxu0 %v5207
    %5248 = vmatprep.subr.bf16.mxu0 0
    %5249 = vmatpush1.bf16.msra.mxu0 %v5208
    %5250 = vmatprep.subr.bf16.mxu0 0
    %5251 = vmatpush1.bf16.msra.mxu0 %v5209
    %5252 = vmatprep.subr.bf16.mxu0 0
    %5253 = vmatpush1.bf16.msra.mxu0 %v5210
    %5254 = vmatprep.subr.bf16.mxu0 0
    %5255 = vmatpush1.bf16.msra.mxu0 0
    %5256 = vmatprep.subr.bf16.mxu0 0
    %5257 = vmatpush1.bf16.msra.mxu0 0
    %5258 = vmatprep.subr.bf16.mxu0 0
    %5259 = vmatpush1.bf16.msra.mxu0 0
    %5260 = vmatprep.mubr.bf16.mxu0 %v5226
    %5261 = vmatmul.mubr.bf16.gmra.mrb[0].mxu0 %v5111
    %v5262 = vpop.f32.mrb[0].mxu0
    %v5263 = vadd.f32 %v5144, %v5262
    %v5264 = vpop.f32.mrb[0].mxu0
    %v5265 = vpop.f32.mrb[0].mxu0
    %v5266 = vpop.f32.mrb[0].mxu0
    %5267 = vdwg.mxu0
    %vm5268 = vcmp.gt.f32.partialorder %v5263, 0.0
    %v5269 = vmul.f32 %v5263, 0.01
    %v5270 = vsel %vm5268, %v5263, %v5269
    %v5271 = vpack.c.bf16 %v5270, %v5270
    %v5272 = vld [vmem:[%s9] sm:$0xf]
    %v5273 = vld [vmem:[%s9 + $0x4] sm:$0xf]
    %v5274 = vld [vmem:[%s9 + $0x8] sm:$0xf]
    %v5275 = vld [vmem:[%s9 + $0xc] sm:$0xf]
    %v5276 = vld [vmem:[%s9 + $0x10] sm:$0xf]
    %v5277 = vld [vmem:[%s9 + $0x14] sm:$0xf]
    %v5278 = vld [vmem:[%s9 + $0x18] sm:$0xf]
    %v5279 = vld [vmem:[%s9 + $0x1c] sm:$0xf]
    %v5280 = vld [vmem:[%s9 + $0x20] sm:$0xf]
    %v5281 = vld [vmem:[%s9 + $0x24] sm:$0xf]
    %v5282 = vld [vmem:[%s9 + $0x28] sm:$0xf]
    %v5283 = vld [vmem:[%s9 + $0x2c] sm:$0xf]
    %v5284 = vld [vmem:[%s9 + $0x30] sm:$0xf]
    %v5285 = vld [vmem:[#allocation2] sm:$0x1]
    %v5287 = vlaneseq
    %v5288 = vshrl.u32 %v5287, 7
    %v5289 = vsub.s32 0, %v5288
    %v5290 = vrot.slane %v5285, %v5289
    %v5305 = vunpack.c.l.b16 %v5272
    %v5306 = vunpack.c.l.b16 %v5273
    %v5307 = vunpack.c.l.b16 %v5274
    %v5308 = vunpack.c.l.b16 %v5275
    %v5309 = vunpack.c.l.b16 %v5276
    %v5310 = vunpack.c.l.b16 %v5277
    %v5311 = vunpack.c.l.b16 %v5278
    %v5312 = vunpack.c.l.b16 %v5279
    %v5313 = vunpack.c.l.b16 %v5280
    %v5314 = vunpack.c.l.b16 %v5281
    %v5315 = vunpack.c.l.b16 %v5282
    %v5316 = vunpack.c.l.b16 %v5283
    %v5317 = vunpack.c.l.b16 %v5284
    %v5318 = vpack.c.b16 %v5306, %v5305
    %v5319 = vpack.c.b16 %v5308, %v5307
    %v5320 = vpack.c.b16 %v5310, %v5309
    %v5321 = vpack.c.b16 %v5312, %v5311
    %v5322 = vpack.c.b16 %v5314, %v5313
    %v5323 = vpack.c.b16 %v5316, %v5315
    %v5324 = vpack.c.b16 %v5317, %v5317
    %vm5331 = vcmask 850944
    %v5333 = vsel %vm5331, %v5271, 0
    %vm5335 = vcmask 1043456
    %v5337 = vsel %vm5335, %v5324, 0
    %5339 = vmatprep.subr.bf16.mxu0 0
    %5340 = vmatpush1.bf16.msra.mxu0 %v5318
    %5341 = vmatprep.subr.bf16.mxu0 0
    %5342 = vmatpush1.bf16.msra.mxu0 %v5319
    %5343 = vmatprep.subr.bf16.mxu0 0
    %5344 = vmatpush1.bf16.msra.mxu0 %v5320
    %5345 = vmatprep.subr.bf16.mxu0 0
    %5346 = vmatpush1.bf16.msra.mxu0 %v5321
    %5347 = vmatprep.subr.bf16.mxu0 0
    %5348 = vmatpush1.bf16.msra.mxu0 %v5322
    %5349 = vmatprep.subr.bf16.mxu0 0
    %5350 = vmatpush1.bf16.msra.mxu0 %v5323
    %5351 = vmatprep.subr.bf16.mxu0 0
    %5352 = vmatpush1.bf16.msra.mxu0 %v5337
    %5353 = vmatprep.subr.bf16.mxu0 0
    %5354 = vmatpush1.bf16.msra.mxu0 0
    %5355 = vmatprep.subr.bf16.mxu0 0
    %5356 = vmatpush1.bf16.msra.mxu0 0
    %5357 = vmatprep.subr.bf16.mxu0 0
    %5358 = vmatpush1.bf16.msra.mxu0 0
    %5359 = vmatprep.subr.bf16.mxu0 0
    %5360 = vmatpush1.bf16.msra.mxu0 0
    %5361 = vmatprep.subr.bf16.mxu0 0
    %5362 = vmatpush1.bf16.msra.mxu0 0
    %5363 = vmatprep.subr.bf16.mxu0 0
    %5364 = vmatpush1.bf16.msra.mxu0 0
    %5365 = vmatprep.subr.bf16.mxu0 0
    %5366 = vmatpush1.bf16.msra.mxu0 0
    %5367 = vmatprep.subr.bf16.mxu0 0
    %5368 = vmatpush1.bf16.msra.mxu0 0
    %5369 = vmatprep.subr.bf16.mxu0 0
    %5370 = vmatpush1.bf16.msra.mxu0 0
    %5371 = vmatprep.mubr.bf16.mxu0 0
    %5372 = vmatmul.mubr.bf16.gmra.mrb[0].mxu0 %v5333
    %v5373 = vpop.f32.mrb[0].mxu0
    %v5374 = vadd.f32 %v5290, %v5373
    %v5375 = vpop.f32.mrb[0].mxu0
    %v5376 = vpop.f32.mrb[0].mxu0
    %v5377 = vpop.f32.mrb[0].mxu0
    %5378 = vdwg.mxu0
    %vm5379 = vcmask 7168
    %5380 = vst.msk [vmem:[%s11] sm:$0xff] %vm5379, %v5374
    // Predicated region
    $region50: #{tpu_custom_call.1} parent=1 // pred_check
      _
    $region51: #{tpu_custom_call.1} parent=1 // pred_check_branch
      %5382 = sbr.rel (0) target = $region53
    $region52: #{tpu_custom_call.1} parent=1 // pred_region
      _
    $region53: #{tpu_custom_call.1} parent=1 // pred_fallthru
      _
    // Predicated region
    $region54: #{tpu_custom_call.1} parent=1 // pred_check
      _
    $region55: #{tpu_custom_call.1} parent=1 // pred_check_branch
      %5384 = sbr.rel (0) target = $region57
    $region56: #{tpu_custom_call.1} parent=1 // pred_region
      _
    $region57: #{tpu_custom_call.1} parent=1 // pred_fallthru
      _
    %5385 = vsyncpa [#allocation4], 1

</llo_original>
